<compile_context>
chip_gen: v7x
topology: tpu7x:2x2x1
jax: 0.10.0
libtpu: 0.0.40
codegen_flags: <defaults>
</compile_context>

<pallas_src>
import jax
import jax.numpy as jnp
import numpy as np
from jax.experimental import pallas as pl
from jax.experimental.pallas import tpu as pltpu


_DATE_OFFSETS = (0, 52, 65, 97)   # year, month, day, weekday offsets in the date table
_DATE_ROWS = 105                  # 52 + 13 + 32 + 8


def _round_up(x, m):
    return ((x + m - 1) // m) * m


def _make_kernel(N, Q, Qp, Dp, eps):
    def kernel(text_ref, floor_ref, delta_ref, dcodes_ref, add_ref, keep_ref,
               w_ct_ref, qtab_ref, dtab_ref, gamma_ref, beta_ref, out_ref):
        # ---- content Linear.  Content bias + column Linear + classification
        # target are pre-folded into add_ref (row-tiled, (N, H)); keep_ref
        # zeroes the matmul part of the target column (the reference zeroes
        # text[:, -1] before the Linear, so only the bias survives there).
        content = jnp.dot(text_ref[...], w_ct_ref[...],
                          preferred_element_type=jnp.float32)
        content = content * keep_ref[...]

        # ---- quantile two-hot interpolation over the 128-padded Q segment.
        iota_q = jax.lax.broadcasted_iota(jnp.int32, (N, Qp), 1)
        floor = floor_ref[...]                        # (N, 1) int32
        valid = (floor > -99).astype(jnp.float32)
        fc = jnp.clip(floor, 0, Q - 1)
        nx = jnp.minimum(fc + 1, Q - 1)
        w_hi = delta_ref[...] * valid                 # (N, 1)
        w_lo = valid - w_hi
        hot_q = (jnp.where(iota_q == fc, w_lo, 0.0)
                 + jnp.where(iota_q == nx, w_hi, 0.0))
        num = jnp.dot(hot_q.astype(qtab_ref.dtype), qtab_ref[...],
                      preferred_element_type=jnp.float32)

        # ---- date multi-hot over the 128-padded 105-row segment.  The four
        # fields hit disjoint table segments, so OR the boolean masks and
        # convert to float once.
        iota_d = jax.lax.broadcasted_iota(jnp.int32, (N, Dp), 1)
        hit = iota_d == dcodes_ref[:, 0:1]
        for k in range(1, 4):
            hit = hit | (iota_d == dcodes_ref[:, k:k + 1])
        date_e = jnp.dot(hit.astype(dtab_ref.dtype), dtab_ref[...],
                         preferred_element_type=jnp.float32)

        # ---- sum + LayerNorm (f32 elementwise, biased variance, eps in rsqrt).
        x = content + add_ref[...] + num + date_e
        mean = jnp.mean(x, axis=-1, keepdims=True)
        var = jnp.mean(jnp.square(x - mean), axis=-1, keepdims=True)
        y = (x - mean) * jax.lax.rsqrt(var + eps)
        # TODO(synk): nn.Dropout is identity in eval mode; training-mode dropout not emitted.
        out_ref[...] = (y * gamma_ref[...] + beta_ref[...]).astype(out_ref.dtype)

    return kernel


def _pick_tile_rows(num_rows, max_tile_rows=256, min_steps=4):
    """Largest row tile that divides num_rows, satisfies the (8,128) sublane
    rule, stays <= max_tile_rows, and (when possible) leaves >= min_steps grid
    steps (>=2 per TensorCore on v7x, and room for DMA/compute overlap)."""
    cands = [t for t in range(1, min(num_rows, max_tile_rows) + 1)
             if num_rows % t == 0 and (t == num_rows or t % 8 == 0)]
    if not cands:
        return num_rows
    for steps in (min_steps, 2, 1):
        pool = [t for t in cands if num_rows // t >= steps]
        if pool:
            return max(pool)
    return max(cands)


def _default_vmem_limit_bytes():
    # Per-step footprint is small (a few MiB); cap at 48 MiB so the limit is
    # always safe under v7x's 64 MiB physical VMEM.
    try:
        cap = pltpu.get_tpu_info().vmem_capacity_bytes
        return int(min(cap // 2, 48 * 1024 * 1024))
    except Exception:
        return 48 * 1024 * 1024


def cell_embeddings_forward(inputs, params, *, eps=1e-12, tile_rows=None,
                            mm_dtype=jnp.float32, vmem_limit_bytes=None):
    R, C, E = inputs["text_embeddings"].shape
    H = params["w_content"].shape[0]
    Q = params["num_table"].shape[0]

    if tile_rows is None:
        tile_rows = _pick_tile_rows(R)
    assert R % tile_rows == 0, "rows must be divisible by tile_rows"
    assert tile_rows == R or tile_rows % 8 == 0, "tile_rows must be a multiple of 8"
    if vmem_limit_bytes is None:
        vmem_limit_bytes = _default_vmem_limit_bytes()

    N = tile_rows * C
    Qp = _round_up(Q, 128)
    Dp = _round_up(_DATE_ROWS, 128)
    f32 = jnp.float32

    # -------- grid-invariant / wrapper-side precompute ------------------------
    # Column Linear (grid-invariant), content bias, and the classification
    # target embedding are folded into ONE row-tiled additive input (R*C, H),
    # so the kernel never touches the (C, *) axis and does no extra compares.
    col_h = (inputs["column_embeddings"].astype(f32) @ params["w_col"].T.astype(f32)
             + params["b_col"].astype(f32))                               # (C, H)
    base = col_h + params["b_content"].astype(f32)                        # (C, H)
    t = inputs["target"].astype(jnp.int32)
    # Clip guards the latent OOB when t == Q-1 (t+1 would index row Q).
    t_idx = jnp.clip(jnp.where(t < 0, 0, t + 1), 0, Q - 1)
    tgt_h = params["classif"].astype(f32)[t_idx]                          # (R, H)
    addvec = jnp.broadcast_to(base[None], (R, C, H))
    addvec = addvec.at[:, C - 1, :].add(tgt_h).reshape(R * C, H)

    # Per-cell scalars with N already on the sublane axis (no in-kernel reshapes).
    floor = inputs["number_percentile_floor"].astype(jnp.int32).reshape(R * C, 1)
    delta = inputs["number_percentile_delta"].astype(f32).reshape(R * C, 1)
    offs = jnp.array(_DATE_OFFSETS, jnp.int32)
    dcodes = (inputs["date"].astype(jnp.int32) + offs).reshape(R * C, 4)

    # Grid-invariant keep mask: 0 at the target column, 1 elsewhere.
    keep = (jnp.tile(jnp.arange(C, dtype=jnp.int32), tile_rows) != C - 1)
    keep = keep.astype(f32).reshape(N, 1)

    # Segmented lookup tables, each padded to a multiple of 128 rows.
    qtable = jnp.zeros((Qp, H), f32).at[:Q].set(params["num_table"].astype(f32))
    dtable = jnp.zeros((Dp, H), f32)
    dtable = dtable.at[0:52].set(params["year"].astype(f32))
    dtable = dtable.at[52:65].set(params["month"].astype(f32))
    dtable = dtable.at[65:97].set(params["day"].astype(f32))
    dtable = dtable.at[97:105].set(params["weekday"].astype(f32))

    # Matmul operands (bf16 on v6e/v7x inference runs; f32 for exact checks).
    text = inputs["text_embeddings"].reshape(R * C, E).astype(mm_dtype)
    w_content_t = params["w_content"].T.astype(mm_dtype)
    qtable = qtable.astype(mm_dtype)
    dtable = dtable.astype(mm_dtype)

    kernel = _make_kernel(N, Q, Qp, Dp, eps)

    def inv(shape):
        # Grid-invariant blocks: constant index_map, DMA'd once.
        nd = len(shape)
        return pl.BlockSpec(shape, lambda i, _nd=nd: (0,) * _nd)

    in_specs = [
        pl.BlockSpec((N, E), lambda i: (i, 0)),     # text (flattened, lane-dense)
        pl.BlockSpec((N, 1), lambda i: (i, 0)),     # quantile floor
        pl.BlockSpec((N, 1), lambda i: (i, 0)),     # quantile delta
        pl.BlockSpec((N, 4), lambda i: (i, 0)),     # pre-offset date codes
        pl.BlockSpec((N, H), lambda i: (i, 0)),     # col Linear + bias + target
        inv((N, 1)),                                # keep mask
        inv((E, H)),                                # content W^T
        inv((Qp, H)), inv((Dp, H)),                 # quantile / date tables
        inv((1, H)), inv((1, H)),                   # layer_norm gamma, beta
    ]
    out_spec = pl.BlockSpec((N, H), lambda i: (i, 0))

    out_flat = pl.pallas_call(
        kernel,
        out_shape=jax.ShapeDtypeStruct((R * C, H), f32),
        grid_spec=pltpu.PrefetchScalarGridSpec(
            num_scalar_prefetch=0,
            grid=(R // tile_rows,),
            in_specs=in_specs,
            out_specs=out_spec,
        ),
        compiler_params=pltpu.CompilerParams(
            dimension_semantics=("parallel",),
            vmem_limit_bytes=vmem_limit_bytes,
        ),
    )(text, floor, delta, dcodes, addvec, keep,
      w_content_t, qtable, dtable,
      params["gamma"].astype(f32), params["beta"].astype(f32))
    return out_flat.reshape(R, C, H)


def reference_forward(inputs, params, eps=1e-12):
    """Pure-JAX reference mirroring the PyTorch forward (classification branch)."""
    Q = params["num_table"].shape[0]
    text = inputs["text_embeddings"].at[:, -1].set(0.0)
    content = text @ params["w_content"].T + params["b_content"][0]
    col = inputs["column_embeddings"] @ params["w_col"].T + params["b_col"][0]
    col = col[None]
    floor = inputs["number_percentile_floor"]
    delta = inputs["number_percentile_delta"][..., None]
    valid = (floor > -99)[..., None]
    fc = jnp.clip(floor, 0, Q - 1)
    nx = jnp.minimum(fc + 1, Q - 1)
    num = params["num_table"][fc] * (1.0 - delta) + params["num_table"][nx] * delta
    num = jnp.where(valid, num, 0.0)
    date = inputs["date"]
    de = (params["year"][date[..., 0]] + params["month"][date[..., 1]]
          + params["day"][date[..., 2]] + params["weekday"][date[..., 3]])
    t = inputs["target"]
    te = params["classif"][jnp.where(t < 0, 0, t + 1)]
    x = content + col + num + de
    x = x.at[:, -1].add(te)
    mean = x.mean(-1, keepdims=True)
    var = ((x - mean) ** 2).mean(-1, keepdims=True)
    xn = (x - mean) / jnp.sqrt(var + eps)
    return xn * params["gamma"][0] + params["beta"][0]


if __name__ == "__main__":
    # Small synthetic shapes consistent with the module.
    # R=256, C=4 -> tile_rows=64, grid=4 (>=2 steps per TC on v7x).
    R, C, E, H, Q = 256, 4, 64, 32, 16   # rows, cols, Tokenizer.embedding_dim, hidden, QUANTILE_DIMENSION
    EPS = 1e-12

    key = jax.random.PRNGKey(0)
    ks = jax.random.split(key, 24)

    fl = jax.random.randint(ks[2], (R, C), -3, Q)
    tg = jax.random.randint(ks[8], (R,), -2, Q - 1)

    inputs = {
        "text_embeddings": jax.random.normal(ks[0], (R, C, E), jnp.float32),
        "column_embeddings": jax.random.normal(ks[1], (C, E), jnp.float32),
        "number_percentile_floor": jnp.where(fl < 0, -100, fl).astype(jnp.int32),
        "number_percentile_delta": jax.random.uniform(ks[3], (R, C), jnp.float32),
        "date": jnp.stack([
            jax.random.randint(ks[4], (R, C), 0, 52),
            jax.random.randint(ks[5], (R, C), 0, 13),
            jax.random.randint(ks[6], (R, C), 0, 32),
            jax.random.randint(ks[7], (R, C), 0, 8),
        ], axis=-1).astype(jnp.int32),
        "target": jnp.where(tg < 0, -100, tg).astype(jnp.int32),
    }

    def w(k, shape, scale=0.02):
        return (scale * jax.random.normal(k, shape)).astype(jnp.float32)

    params = {
        "w_content": w(ks[9], (H, E)),  "b_content": w(ks[10], (1, H)),
        "w_col": w(ks[11], (H, E)),     "b_col": w(ks[12], (1, H)),
        "num_table": w(ks[13], (Q, H)),
        "year": w(ks[14], (52, H)), "month": w(ks[15], (13, H)),
        "day": w(ks[16], (32, H)),  "weekday": w(ks[17], (8, H)),
        "classif": w(ks[18], (Q, H)),
        "gamma": jnp.ones((1, H), jnp.float32),
        "beta": jnp.zeros((1, H), jnp.float32),
    }

    # mm_dtype=jnp.bfloat16 halves text HBM/VMEM traffic and uses the native
    # bf16 MXU path on v6e/v7x; the demo keeps f32 for the strict f32 check.
    out = cell_embeddings_forward(inputs, params, eps=EPS)
    out = jax.block_until_ready(out)

    ref = jax.block_until_ready(reference_forward(inputs, params, eps=EPS))
    np.testing.assert_allclose(np.asarray(out), np.asarray(ref), rtol=1e-4, atol=1e-4)

    print("KERNEL_OK")
</pallas_src>

<mosaic_0001>
module attributes {stable_mosaic.version = 11 : i64} {
  func.func @kernel(%arg0: i32, %arg1: memref<256x64xf32, #tpu.memory_space<vmem>>, %arg2: memref<256x1xi32, #tpu.memory_space<vmem>>, %arg3: memref<256x1xf32, #tpu.memory_space<vmem>>, %arg4: memref<256x4xi32, #tpu.memory_space<vmem>>, %arg5: memref<256x32xf32, #tpu.memory_space<vmem>>, %arg6: memref<256x1xf32, #tpu.memory_space<vmem>>, %arg7: memref<64x32xf32, #tpu.memory_space<vmem>>, %arg8: memref<128x32xf32, #tpu.memory_space<vmem>>, %arg9: memref<128x32xf32, #tpu.memory_space<vmem>>, %arg10: memref<1x32xf32, #tpu.memory_space<vmem>>, %arg11: memref<1x32xf32, #tpu.memory_space<vmem>>, %arg12: memref<256x32xf32, #tpu.memory_space<vmem>>) attributes {dimension_semantics = [#tpu.dimension_semantics<parallel>], iteration_bounds = array<i64: 4>, scalar_prefetch = 0 : i64, scratch_operands = 0 : i64, tpu.core_type = #tpu.core_type<tc>, window_params = [{transform_indices = @transform_0, window_bounds = array<i64: 256, 64>}, {transform_indices = @transform_1, window_bounds = array<i64: 256, 1>}, {transform_indices = @transform_2, window_bounds = array<i64: 256, 1>}, {transform_indices = @transform_3, window_bounds = array<i64: 256, 4>}, {transform_indices = @transform_4, window_bounds = array<i64: 256, 32>}, {pipeline_mode = #tpu.pipeline_mode<synchronous>, transform_indices = @transform_5, window_bounds = array<i64: 256, 1>}, {pipeline_mode = #tpu.pipeline_mode<synchronous>, transform_indices = @transform_6, window_bounds = array<i64: 64, 32>}, {pipeline_mode = #tpu.pipeline_mode<synchronous>, transform_indices = @transform_7, window_bounds = array<i64: 128, 32>}, {pipeline_mode = #tpu.pipeline_mode<synchronous>, transform_indices = @transform_8, window_bounds = array<i64: 128, 32>}, {pipeline_mode = #tpu.pipeline_mode<synchronous>, transform_indices = @transform_9, window_bounds = array<i64: 1, 32>}, {pipeline_mode = #tpu.pipeline_mode<synchronous>, transform_indices = @transform_10, window_bounds = array<i64: 1, 32>}, {transform_indices = @transform_11, window_bounds = array<i64: 256, 32>}]} {
    %c0 = arith.constant 0 : index
    %c0_0 = arith.constant 0 : index
    %0 = vector.load %arg1[%c0, %c0_0] : memref<256x64xf32, #tpu.memory_space<vmem>>, vector<256x64xf32>
    %c0_1 = arith.constant 0 : index
    %c0_2 = arith.constant 0 : index
    %1 = vector.load %arg7[%c0_1, %c0_2] : memref<64x32xf32, #tpu.memory_space<vmem>>, vector<64x32xf32>
    %cst = arith.constant dense<0.000000e+00> : vector<256x32xf32>
    %2 = tpu.matmul %0, %1, %cst {dimension_numbers = #tpu.dot_dimension_numbers<[1], [0], [0], [1], [0, 0, 1, 1], [], []>} : vector<256x64xf32>, vector<64x32xf32>, vector<256x32xf32> -> vector<256x32xf32>
    %c0_3 = arith.constant 0 : index
    %c0_4 = arith.constant 0 : index
    %3 = vector.load %arg6[%c0_3, %c0_4] : memref<256x1xf32, #tpu.memory_space<vmem>>, vector<256x1xf32>
    %4 = vector.broadcast %3 : vector<256x1xf32> to vector<256x32xf32>
    %5 = arith.mulf %2, %4 : vector<256x32xf32>
    %6 = tpu.iota {dimensions = array<i32: 1>} : vector<256x128xi32>
    %c0_5 = arith.constant 0 : index
    %c0_6 = arith.constant 0 : index
    %7 = vector.load %arg2[%c0_5, %c0_6] : memref<256x1xi32, #tpu.memory_space<vmem>>, vector<256x1xi32>
    %c-99_i32 = arith.constant -99 : i32
    %8 = vector.broadcast %c-99_i32 : i32 to vector<256x1xi32>
    %9 = arith.cmpi sgt, %7, %8 : vector<256x1xi32>
    %10 = arith.extui %9 : vector<256x1xi1> to vector<256x1xi32>
    %11 = arith.sitofp %10 : vector<256x1xi32> to vector<256x1xf32>
    %c0_i32 = arith.constant 0 : i32
    %c15_i32 = arith.constant 15 : i32
    %12 = vector.broadcast %c0_i32 : i32 to vector<256x1xi32>
    %13 = arith.maxsi %12, %7 : vector<256x1xi32>
    %14 = vector.broadcast %c15_i32 : i32 to vector<256x1xi32>
    %15 = arith.minsi %14, %13 : vector<256x1xi32>
    %c1_i32 = arith.constant 1 : i32
    %16 = vector.broadcast %c1_i32 : i32 to vector<256x1xi32>
    %17 = arith.addi %15, %16 : vector<256x1xi32>
    %c15_i32_7 = arith.constant 15 : i32
    %18 = vector.broadcast %c15_i32_7 : i32 to vector<256x1xi32>
    %19 = arith.minsi %17, %18 : vector<256x1xi32>
    %c0_8 = arith.constant 0 : index
    %c0_9 = arith.constant 0 : index
    %20 = vector.load %arg3[%c0_8, %c0_9] : memref<256x1xf32, #tpu.memory_space<vmem>>, vector<256x1xf32>
    %21 = arith.mulf %20, %11 : vector<256x1xf32>
    %22 = arith.subf %11, %21 : vector<256x1xf32>
    %23 = vector.broadcast %15 : vector<256x1xi32> to vector<256x128xi32>
    %24 = arith.cmpi eq, %6, %23 : vector<256x128xi32>
    %cst_10 = arith.constant 0.000000e+00 : f32
    %25 = vector.shape_cast %22 : vector<256x1xf32> to vector<256x1xf32>
    %26 = vector.broadcast %25 : vector<256x1xf32> to vector<256x128xf32>
    %27 = vector.broadcast %cst_10 : f32 to vector<256x128xf32>
    %28 = arith.select %24, %26, %27 : vector<256x128xi1>, vector<256x128xf32>
    %29 = vector.broadcast %19 : vector<256x1xi32> to vector<256x128xi32>
    %30 = arith.cmpi eq, %6, %29 : vector<256x128xi32>
    %cst_11 = arith.constant 0.000000e+00 : f32
    %31 = vector.shape_cast %21 : vector<256x1xf32> to vector<256x1xf32>
    %32 = vector.broadcast %31 : vector<256x1xf32> to vector<256x128xf32>
    %33 = vector.broadcast %cst_11 : f32 to vector<256x128xf32>
    %34 = arith.select %30, %32, %33 : vector<256x128xi1>, vector<256x128xf32>
    %35 = arith.addf %28, %34 : vector<256x128xf32>
    %c0_12 = arith.constant 0 : index
    %c0_13 = arith.constant 0 : index
    %36 = vector.load %arg8[%c0_12, %c0_13] : memref<128x32xf32, #tpu.memory_space<vmem>>, vector<128x32xf32>
    %cst_14 = arith.constant dense<0.000000e+00> : vector<256x32xf32>
    %37 = tpu.matmul %35, %36, %cst_14 {dimension_numbers = #tpu.dot_dimension_numbers<[1], [0], [0], [1], [0, 0, 1, 1], [], []>} : vector<256x128xf32>, vector<128x32xf32>, vector<256x32xf32> -> vector<256x32xf32>
    %38 = tpu.iota {dimensions = array<i32: 1>} : vector<256x128xi32>
    %c0_15 = arith.constant 0 : index
    %c0_16 = arith.constant 0 : index
    %39 = vector.load %arg4[%c0_15, %c0_16] : memref<256x4xi32, #tpu.memory_space<vmem>>, vector<256x1xi32>
    %40 = vector.broadcast %39 : vector<256x1xi32> to vector<256x128xi32>
    %41 = arith.cmpi eq, %38, %40 : vector<256x128xi32>
    %c0_17 = arith.constant 0 : index
    %c1 = arith.constant 1 : index
    %42 = vector.load %arg4[%c0_17, %c1] : memref<256x4xi32, #tpu.memory_space<vmem>>, vector<256x1xi32>
    %43 = vector.broadcast %42 : vector<256x1xi32> to vector<256x128xi32>
    %44 = arith.cmpi eq, %38, %43 : vector<256x128xi32>
    %45 = arith.ori %41, %44 : vector<256x128xi1>
    %c0_18 = arith.constant 0 : index
    %c2 = arith.constant 2 : index
    %46 = vector.load %arg4[%c0_18, %c2] : memref<256x4xi32, #tpu.memory_space<vmem>>, vector<256x1xi32>
    %47 = vector.broadcast %46 : vector<256x1xi32> to vector<256x128xi32>
    %48 = arith.cmpi eq, %38, %47 : vector<256x128xi32>
    %49 = arith.ori %45, %48 : vector<256x128xi1>
    %c0_19 = arith.constant 0 : index
    %c3 = arith.constant 3 : index
    %50 = vector.load %arg4[%c0_19, %c3] : memref<256x4xi32, #tpu.memory_space<vmem>>, vector<256x1xi32>
    %51 = vector.broadcast %50 : vector<256x1xi32> to vector<256x128xi32>
    %52 = arith.cmpi eq, %38, %51 : vector<256x128xi32>
    %53 = arith.ori %49, %52 : vector<256x128xi1>
    %54 = arith.extui %53 : vector<256x128xi1> to vector<256x128xi32>
    %55 = arith.sitofp %54 : vector<256x128xi32> to vector<256x128xf32>
    %c0_20 = arith.constant 0 : index
    %c0_21 = arith.constant 0 : index
    %56 = vector.load %arg9[%c0_20, %c0_21] : memref<128x32xf32, #tpu.memory_space<vmem>>, vector<128x32xf32>
    %cst_22 = arith.constant dense<0.000000e+00> : vector<256x32xf32>
    %57 = tpu.matmul %55, %56, %cst_22 {dimension_numbers = #tpu.dot_dimension_numbers<[1], [0], [0], [1], [0, 0, 1, 1], [], []>} : vector<256x128xf32>, vector<128x32xf32>, vector<256x32xf32> -> vector<256x32xf32>
    %c0_23 = arith.constant 0 : index
    %c0_24 = arith.constant 0 : index
    %58 = vector.load %arg5[%c0_23, %c0_24] : memref<256x32xf32, #tpu.memory_space<vmem>>, vector<256x32xf32>
    %59 = arith.addf %5, %58 : vector<256x32xf32>
    %60 = arith.addf %59, %37 : vector<256x32xf32>
    %61 = arith.addf %60, %57 : vector<256x32xf32>
    %cst_25 = arith.constant dense<0.000000e+00> : vector<256xf32>
    %62 = vector.multi_reduction <add>, %61, %cst_25 [1] : vector<256x32xf32> to vector<256xf32>
    %63 = vector.shape_cast %62 : vector<256xf32> to vector<256x1xf32>
    %cst_26 = arith.constant 3.200000e+01 : f32
    %64 = vector.broadcast %cst_26 : f32 to vector<256x1xf32>
    %65 = arith.divf %63, %64 : vector<256x1xf32>
    %66 = vector.broadcast %65 : vector<256x1xf32> to vector<256x32xf32>
    %67 = arith.subf %61, %66 : vector<256x32xf32>
    %68 = arith.mulf %67, %67 : vector<256x32xf32>
    %cst_27 = arith.constant dense<0.000000e+00> : vector<256xf32>
    %69 = vector.multi_reduction <add>, %68, %cst_27 [1] : vector<256x32xf32> to vector<256xf32>
    %70 = vector.shape_cast %69 : vector<256xf32> to vector<256x1xf32>
    %cst_28 = arith.constant 3.200000e+01 : f32
    %71 = vector.broadcast %cst_28 : f32 to vector<256x1xf32>
    %72 = arith.divf %70, %71 : vector<256x1xf32>
    %73 = vector.broadcast %65 : vector<256x1xf32> to vector<256x32xf32>
    %74 = arith.subf %61, %73 : vector<256x32xf32>
    %cst_29 = arith.constant 9.99999996E-13 : f32
    %75 = vector.broadcast %cst_29 : f32 to vector<256x1xf32>
    %76 = arith.addf %72, %75 : vector<256x1xf32>
    %77 = math.rsqrt %76 : vector<256x1xf32>
    %78 = vector.broadcast %77 : vector<256x1xf32> to vector<256x32xf32>
    %79 = arith.mulf %74, %78 : vector<256x32xf32>
    %c0_30 = arith.constant 0 : index
    %c0_31 = arith.constant 0 : index
    %80 = vector.load %arg10[%c0_30, %c0_31] : memref<1x32xf32, #tpu.memory_space<vmem>>, vector<1x32xf32>
    %81 = vector.broadcast %80 : vector<1x32xf32> to vector<256x32xf32>
    %82 = arith.mulf %79, %81 : vector<256x32xf32>
    %c0_32 = arith.constant 0 : index
    %c0_33 = arith.constant 0 : index
    %83 = vector.load %arg11[%c0_32, %c0_33] : memref<1x32xf32, #tpu.memory_space<vmem>>, vector<1x32xf32>
    %84 = vector.broadcast %83 : vector<1x32xf32> to vector<256x32xf32>
    %85 = arith.addf %82, %84 : vector<256x32xf32>
    %c0_34 = arith.constant 0 : index
    %c0_35 = arith.constant 0 : index
    %86 = vector.load %arg12[%c0_34, %c0_35] : memref<256x32xf32, #tpu.memory_space<vmem>>, vector<256x32xf32>
    tpu.vector_store %arg12[%c0_34, %c0_35], %85 {strides = array<i32>} : memref<256x32xf32, #tpu.memory_space<vmem>>, vector<256x32xf32>,
    return
  }
  func.func @transform_0(%arg0: i32) -> (i32, i32) {
    %c0_i32 = arith.constant 0 : i32
    %c0_i32_0 = arith.constant 0 : i32
    return %arg0, %c0_i32 : i32, i32
  }
  func.func @transform_1(%arg0: i32) -> (i32, i32) {
    %c0_i32 = arith.constant 0 : i32
    %c0_i32_0 = arith.constant 0 : i32
    return %arg0, %c0_i32 : i32, i32
  }
  func.func @transform_2(%arg0: i32) -> (i32, i32) {
    %c0_i32 = arith.constant 0 : i32
    %c0_i32_0 = arith.constant 0 : i32
    return %arg0, %c0_i32 : i32, i32
  }
  func.func @transform_3(%arg0: i32) -> (i32, i32) {
    %c0_i32 = arith.constant 0 : i32
    %c0_i32_0 = arith.constant 0 : i32
    return %arg0, %c0_i32 : i32, i32
  }
  func.func @transform_4(%arg0: i32) -> (i32, i32) {
    %c0_i32 = arith.constant 0 : i32
    %c0_i32_0 = arith.constant 0 : i32
    return %arg0, %c0_i32 : i32, i32
  }
  func.func @transform_5(%arg0: i32) -> (i32, i32) {
    %c0_i32 = arith.constant 0 : i32
    %c0_i32_0 = arith.constant 0 : i32
    %c0_i32_1 = arith.constant 0 : i32
    return %c0_i32, %c0_i32_0 : i32, i32
  }
  func.func @transform_6(%arg0: i32) -> (i32, i32) {
    %c0_i32 = arith.constant 0 : i32
    %c0_i32_0 = arith.constant 0 : i32
    %c0_i32_1 = arith.constant 0 : i32
    return %c0_i32, %c0_i32_0 : i32, i32
  }
  func.func @transform_7(%arg0: i32) -> (i32, i32) {
    %c0_i32 = arith.constant 0 : i32
    %c0_i32_0 = arith.constant 0 : i32
    %c0_i32_1 = arith.constant 0 : i32
    return %c0_i32, %c0_i32_0 : i32, i32
  }
  func.func @transform_8(%arg0: i32) -> (i32, i32) {
    %c0_i32 = arith.constant 0 : i32
    %c0_i32_0 = arith.constant 0 : i32
    %c0_i32_1 = arith.constant 0 : i32
    return %c0_i32, %c0_i32_0 : i32, i32
  }
  func.func @transform_9(%arg0: i32) -> (i32, i32) {
    %c0_i32 = arith.constant 0 : i32
    %c0_i32_0 = arith.constant 0 : i32
    %c0_i32_1 = arith.constant 0 : i32
    return %c0_i32, %c0_i32_0 : i32, i32
  }
  func.func @transform_10(%arg0: i32) -> (i32, i32) {
    %c0_i32 = arith.constant 0 : i32
    %c0_i32_0 = arith.constant 0 : i32
    %c0_i32_1 = arith.constant 0 : i32
    return %c0_i32, %c0_i32_0 : i32, i32
  }
  func.func @transform_11(%arg0: i32) -> (i32, i32) {
    %c0_i32 = arith.constant 0 : i32
    %c0_i32_0 = arith.constant 0 : i32
    return %arg0, %c0_i32 : i32, i32
  }
}

</mosaic_0001>

<llo_original>
// kernel: tpu_custom_call.1
$region0: #{tpu_custom_call.1}
  #allocation0 [shape = 'u32[]', space=smem, size = 0x4, offset = 0x4, fixed_abs, tag = 'smem constant byte address 0x4 - core index']
  #allocation1 [shape = 'u32[144,128]{1,0:T(1,128)}', space=vmem, size = 0x12000, scoped, tag = 'internal scratch']
  %s0 = inlined_call_operand.vmem [shape: f32[1024,64], index: 0, kind: input, shape index: {}]
  %s1 = inlined_call_operand.vmem [shape: s32[1024,1], index: 1, kind: input, shape index: {}]
  %s2 = inlined_call_operand.vmem [shape: f32[1024,1], index: 2, kind: input, shape index: {}]
  %s3 = inlined_call_operand.vmem [shape: s32[1024,4], index: 3, kind: input, shape index: {}]
  %s4 = inlined_call_operand.vmem [shape: f32[1024,32], index: 4, kind: input, shape index: {}]
  %s5 = inlined_call_operand.vmem [shape: f32[256,1], index: 5, kind: input, shape index: {}]
  %s6 = inlined_call_operand.vmem [shape: f32[64,32], index: 6, kind: input, shape index: {}]
  %s7 = inlined_call_operand.vmem [shape: f32[128,32], index: 7, kind: input, shape index: {}]
  %s8 = inlined_call_operand.vmem [shape: f32[128,32], index: 8, kind: input, shape index: {}]
  %s9 = inlined_call_operand.vmem [shape: f32[1,32], index: 9, kind: input, shape index: {}]
  %s10 = inlined_call_operand.vmem [shape: f32[1,32], index: 10, kind: input, shape index: {}]
  %s11 = inlined_call_operand.vmem [shape: f32[1024,32], index: 11, kind: output, shape index: {}]
  %s12 = sld [smem:[#allocation0]]
  $region77: #{tpu_custom_call.1} parent=0
    _
  %s14 = ssub.s32 1, %s12
  %s15 = scalar_select 0, %s14, %s12
  loop: start=0, step=1, limit=6
  $region2: #{tpu_custom_call.1} parent=0 // loop_pre_header
    _
  $region3: #{tpu_custom_call.1} parent=0 // loop_header
    %s17 = sphi 0, %s21
    %p18 = scmp.ge.s32.totalorder %s17, 6
    %s27 = sphi 0, %s29
    %s30 = sphi 0, %s27
    %s31 = sphi 0, %s30
    %s47 = sphi 0, %s31
    %s53 = sphi 0, %s55
    %s56 = sphi 0, %s53
    %s57 = sphi 0, %s56
    %s73 = sphi 0, %s57
    %s79 = sphi 0, %s81
    %s82 = sphi 0, %s79
    %s83 = sphi 0, %s82
    %s99 = sphi 0, %s83
    %s105 = sphi 0, %s107
    %s108 = sphi 0, %s105
    %s109 = sphi 0, %s108
    %s125 = sphi 0, %s109
    %s131 = sphi 0, %s133
    %s134 = sphi 0, %s131
    %s135 = sphi 0, %s134
    %s151 = sphi 0, %s135
    %s155 = sphi 0, %s155
    %s157 = sphi 0, %s155
    %s158 = sphi 0, %s157
    %s172 = sphi 0, %s158
    %s176 = sphi 0, %s176
    %s178 = sphi 0, %s176
    %s179 = sphi 0, %s178
    %s193 = sphi 0, %s179
    %s197 = sphi 0, %s197
    %s199 = sphi 0, %s197
    %s200 = sphi 0, %s199
    %s214 = sphi 0, %s200
    %s218 = sphi 0, %s218
    %s220 = sphi 0, %s218
    %s221 = sphi 0, %s220
    %s235 = sphi 0, %s221
    %s239 = sphi 0, %s239
    %s241 = sphi 0, %s239
    %s242 = sphi 0, %s241
    %s256 = sphi 0, %s242
    %s260 = sphi 0, %s260
    %s262 = sphi 0, %s260
    %s263 = sphi 0, %s262
    %s277 = sphi 0, %s263
    %s283 = sphi 0, %s285
    %s286 = sphi 0, %s283
    %s287 = sphi 0, %s286
    %s303 = sphi 0, %s287
  $region4: #{tpu_custom_call.1} parent=0 // loop_header_branch
    %20 = sbr.rel (%p18) target = $region8
  $region5: #{tpu_custom_call.1} parent=0 // loop_body
    %s22 = ssub.s32 %s17, 1
    %s23 = ssub.s32 %s17, 2
    %s24 = sadd.s32 %s17, 1
    %s25 = ssub.s32 %s17, %s24
    %p26 = scmp.eq.s32.totalorder %s25, 0
    %s28 = sadd.s32 %s27, 1
    %s29 = scalar_select %p26, %s27, %s28
    %p32 = pneg %p26
    %p33 = scmp.eq.s32.totalorder %s17, 3
    %p34 = por %p32, %p33
    %p35 = scmp.ne.s32.totalorder %s27, %s30
    %p36 = scmp.eq.s32.totalorder %s17, 0
    %p37 = por %p35, %p36
    %p38 = scmp.ne.s32.totalorder %s27, %s30
    %p39 = scmp.eq.s32.totalorder %s22, 3
    %p40 = por %p38, %p39
    %p41 = scmp.ne.s32.totalorder %s30, %s31
    %p42 = scmp.eq.s32.totalorder %s22, 0
    %p43 = por %p41, %p42
    %p44 = scmp.ne.s32.totalorder %s30, %s31
    %p45 = scmp.eq.s32.totalorder %s23, 3
    %p46 = por %p44, %p45
    %p48 = scmp.ne.s32.totalorder %s31, %s47
    %p49 = scmp.eq.s32.totalorder %s23, 0
    %p50 = por %p48, %p49
    %s51 = ssub.s32 %s17, %s24
    %p52 = scmp.eq.s32.totalorder %s51, 0
    %s54 = sadd.s32 %s53, 1
    %s55 = scalar_select %p52, %s53, %s54
    %p58 = pneg %p52
    %p59 = scmp.eq.s32.totalorder %s17, 3
    %p60 = por %p58, %p59
    %p61 = scmp.ne.s32.totalorder %s53, %s56
    %p62 = scmp.eq.s32.totalorder %s17, 0
    %p63 = por %p61, %p62
    %p64 = scmp.ne.s32.totalorder %s53, %s56
    %p65 = scmp.eq.s32.totalorder %s22, 3
    %p66 = por %p64, %p65
    %p67 = scmp.ne.s32.totalorder %s56, %s57
    %p68 = scmp.eq.s32.totalorder %s22, 0
    %p69 = por %p67, %p68
    %p70 = scmp.ne.s32.totalorder %s56, %s57
    %p71 = scmp.eq.s32.totalorder %s23, 3
    %p72 = por %p70, %p71
    %p74 = scmp.ne.s32.totalorder %s57, %s73
    %p75 = scmp.eq.s32.totalorder %s23, 0
    %p76 = por %p74, %p75
    %s77 = ssub.s32 %s17, %s24
    %p78 = scmp.eq.s32.totalorder %s77, 0
    %s80 = sadd.s32 %s79, 1
    %s81 = scalar_select %p78, %s79, %s80
    %p84 = pneg %p78
    %p85 = scmp.eq.s32.totalorder %s17, 3
    %p86 = por %p84, %p85
    %p87 = scmp.ne.s32.totalorder %s79, %s82
    %p88 = scmp.eq.s32.totalorder %s17, 0
    %p89 = por %p87, %p88
    %p90 = scmp.ne.s32.totalorder %s79, %s82
    %p91 = scmp.eq.s32.totalorder %s22, 3
    %p92 = por %p90, %p91
    %p93 = scmp.ne.s32.totalorder %s82, %s83
    %p94 = scmp.eq.s32.totalorder %s22, 0
    %p95 = por %p93, %p94
    %p96 = scmp.ne.s32.totalorder %s82, %s83
    %p97 = scmp.eq.s32.totalorder %s23, 3
    %p98 = por %p96, %p97
    %p100 = scmp.ne.s32.totalorder %s83, %s99
    %p101 = scmp.eq.s32.totalorder %s23, 0
    %p102 = por %p100, %p101
    %s103 = ssub.s32 %s17, %s24
    %p104 = scmp.eq.s32.totalorder %s103, 0
    %s106 = sadd.s32 %s105, 1
    %s107 = scalar_select %p104, %s105, %s106
    %p110 = pneg %p104
    %p111 = scmp.eq.s32.totalorder %s17, 3
    %p112 = por %p110, %p111
    %p113 = scmp.ne.s32.totalorder %s105, %s108
    %p114 = scmp.eq.s32.totalorder %s17, 0
    %p115 = por %p113, %p114
    %p116 = scmp.ne.s32.totalorder %s105, %s108
    %p117 = scmp.eq.s32.totalorder %s22, 3
    %p118 = por %p116, %p117
    %p119 = scmp.ne.s32.totalorder %s108, %s109
    %p120 = scmp.eq.s32.totalorder %s22, 0
    %p121 = por %p119, %p120
    %p122 = scmp.ne.s32.totalorder %s108, %s109
    %p123 = scmp.eq.s32.totalorder %s23, 3
    %p124 = por %p122, %p123
    %p126 = scmp.ne.s32.totalorder %s109, %s125
    %p127 = scmp.eq.s32.totalorder %s23, 0
    %p128 = por %p126, %p127
    %s129 = ssub.s32 %s17, %s24
    %p130 = scmp.eq.s32.totalorder %s129, 0
    %s132 = sadd.s32 %s131, 1
    %s133 = scalar_select %p130, %s131, %s132
    %p136 = pneg %p130
    %p137 = scmp.eq.s32.totalorder %s17, 3
    %p138 = por %p136, %p137
    %p139 = scmp.ne.s32.totalorder %s131, %s134
    %p140 = scmp.eq.s32.totalorder %s17, 0
    %p141 = por %p139, %p140
    %p142 = scmp.ne.s32.totalorder %s131, %s134
    %p143 = scmp.eq.s32.totalorder %s22, 3
    %p144 = por %p142, %p143
    %p145 = scmp.ne.s32.totalorder %s134, %s135
    %p146 = scmp.eq.s32.totalorder %s22, 0
    %p147 = por %p145, %p146
    %p148 = scmp.ne.s32.totalorder %s134, %s135
    %p149 = scmp.eq.s32.totalorder %s23, 3
    %p150 = por %p148, %p149
    %p152 = scmp.ne.s32.totalorder %s135, %s151
    %p153 = scmp.eq.s32.totalorder %s23, 0
    %p154 = por %p152, %p153
    %s156 = sadd.s32 %s155, 1
    %p159 = scmp.eq.s32.totalorder %s17, 3
    %p160 = scmp.ne.s32.totalorder %s155, %s157
    %p161 = scmp.eq.s32.totalorder %s17, 0
    %p162 = por %p160, %p161
    %p163 = scmp.ne.s32.totalorder %s155, %s157
    %p164 = scmp.eq.s32.totalorder %s22, 3
    %p165 = por %p163, %p164
    %p166 = scmp.ne.s32.totalorder %s157, %s158
    %p167 = scmp.eq.s32.totalorder %s22, 0
    %p168 = por %p166, %p167
    %p169 = scmp.ne.s32.totalorder %s157, %s158
    %p170 = scmp.eq.s32.totalorder %s23, 3
    %p171 = por %p169, %p170
    %p173 = scmp.ne.s32.totalorder %s158, %s172
    %p174 = scmp.eq.s32.totalorder %s23, 0
    %p175 = por %p173, %p174
    %s177 = sadd.s32 %s176, 1
    %p180 = scmp.eq.s32.totalorder %s17, 3
    %p181 = scmp.ne.s32.totalorder %s176, %s178
    %p182 = scmp.eq.s32.totalorder %s17, 0
    %p183 = por %p181, %p182
    %p184 = scmp.ne.s32.totalorder %s176, %s178
    %p185 = scmp.eq.s32.totalorder %s22, 3
    %p186 = por %p184, %p185
    %p187 = scmp.ne.s32.totalorder %s178, %s179
    %p188 = scmp.eq.s32.totalorder %s22, 0
    %p189 = por %p187, %p188
    %p190 = scmp.ne.s32.totalorder %s178, %s179
    %p191 = scmp.eq.s32.totalorder %s23, 3
    %p192 = por %p190, %p191
    %p194 = scmp.ne.s32.totalorder %s179, %s193
    %p195 = scmp.eq.s32.totalorder %s23, 0
    %p196 = por %p194, %p195
    %s198 = sadd.s32 %s197, 1
    %p201 = scmp.eq.s32.totalorder %s17, 3
    %p202 = scmp.ne.s32.totalorder %s197, %s199
    %p203 = scmp.eq.s32.totalorder %s17, 0
    %p204 = por %p202, %p203
    %p205 = scmp.ne.s32.totalorder %s197, %s199
    %p206 = scmp.eq.s32.totalorder %s22, 3
    %p207 = por %p205, %p206
    %p208 = scmp.ne.s32.totalorder %s199, %s200
    %p209 = scmp.eq.s32.totalorder %s22, 0
    %p210 = por %p208, %p209
    %p211 = scmp.ne.s32.totalorder %s199, %s200
    %p212 = scmp.eq.s32.totalorder %s23, 3
    %p213 = por %p211, %p212
    %p215 = scmp.ne.s32.totalorder %s200, %s214
    %p216 = scmp.eq.s32.totalorder %s23, 0
    %p217 = por %p215, %p216
    %s219 = sadd.s32 %s218, 1
    %p222 = scmp.eq.s32.totalorder %s17, 3
    %p223 = scmp.ne.s32.totalorder %s218, %s220
    %p224 = scmp.eq.s32.totalorder %s17, 0
    %p225 = por %p223, %p224
    %p226 = scmp.ne.s32.totalorder %s218, %s220
    %p227 = scmp.eq.s32.totalorder %s22, 3
    %p228 = por %p226, %p227
    %p229 = scmp.ne.s32.totalorder %s220, %s221
    %p230 = scmp.eq.s32.totalorder %s22, 0
    %p231 = por %p229, %p230
    %p232 = scmp.ne.s32.totalorder %s220, %s221
    %p233 = scmp.eq.s32.totalorder %s23, 3
    %p234 = por %p232, %p233
    %p236 = scmp.ne.s32.totalorder %s221, %s235
    %p237 = scmp.eq.s32.totalorder %s23, 0
    %p238 = por %p236, %p237
    %s240 = sadd.s32 %s239, 1
    %p243 = scmp.eq.s32.totalorder %s17, 3
    %p244 = scmp.ne.s32.totalorder %s239, %s241
    %p245 = scmp.eq.s32.totalorder %s17, 0
    %p246 = por %p244, %p245
    %p247 = scmp.ne.s32.totalorder %s239, %s241
    %p248 = scmp.eq.s32.totalorder %s22, 3
    %p249 = por %p247, %p248
    %p250 = scmp.ne.s32.totalorder %s241, %s242
    %p251 = scmp.eq.s32.totalorder %s22, 0
    %p252 = por %p250, %p251
    %p253 = scmp.ne.s32.totalorder %s241, %s242
    %p254 = scmp.eq.s32.totalorder %s23, 3
    %p255 = por %p253, %p254
    %p257 = scmp.ne.s32.totalorder %s242, %s256
    %p258 = scmp.eq.s32.totalorder %s23, 0
    %p259 = por %p257, %p258
    %s261 = sadd.s32 %s260, 1
    %p264 = scmp.eq.s32.totalorder %s17, 3
    %p265 = scmp.ne.s32.totalorder %s260, %s262
    %p266 = scmp.eq.s32.totalorder %s17, 0
    %p267 = por %p265, %p266
    %p268 = scmp.ne.s32.totalorder %s260, %s262
    %p269 = scmp.eq.s32.totalorder %s22, 3
    %p270 = por %p268, %p269
    %p271 = scmp.ne.s32.totalorder %s262, %s263
    %p272 = scmp.eq.s32.totalorder %s22, 0
    %p273 = por %p271, %p272
    %p274 = scmp.ne.s32.totalorder %s262, %s263
    %p275 = scmp.eq.s32.totalorder %s23, 3
    %p276 = por %p274, %p275
    %p278 = scmp.ne.s32.totalorder %s263, %s277
    %p279 = scmp.eq.s32.totalorder %s23, 0
    %p280 = por %p278, %p279
    %s281 = ssub.s32 %s17, %s24
    %p282 = scmp.eq.s32.totalorder %s281, 0
    %s284 = sadd.s32 %s283, 1
    %s285 = scalar_select %p282, %s283, %s284
    %p288 = pneg %p282
    %p289 = scmp.eq.s32.totalorder %s17, 3
    %p290 = por %p288, %p289
    %p291 = scmp.ne.s32.totalorder %s283, %s286
    %p292 = scmp.eq.s32.totalorder %s17, 0
    %p293 = por %p291, %p292
    %p294 = scmp.ne.s32.totalorder %s283, %s286
    %p295 = scmp.eq.s32.totalorder %s22, 3
    %p296 = por %p294, %p295
    %p297 = scmp.ne.s32.totalorder %s286, %s287
    %p298 = scmp.eq.s32.totalorder %s22, 0
    %p299 = por %p297, %p298
    %p300 = scmp.ne.s32.totalorder %s286, %s287
    %p301 = scmp.eq.s32.totalorder %s23, 3
    %p302 = por %p300, %p301
    %p304 = scmp.ne.s32.totalorder %s287, %s303
    %p305 = scmp.eq.s32.totalorder %s23, 0
    %p306 = por %p304, %p305
    %p307 = scmp.le.s32.totalorder 1, %s17
    %p308 = scmp.lt.s32.totalorder %s17, 5
    %p309 = pnand %p307, %p308
    %p310 = pneg %p309
    // Predicated region
    $region9: #{tpu_custom_call.1} parent=5 // pred_check
      _
    $region10: #{tpu_custom_call.1} parent=5 // pred_check_branch
      %312 = sbr.rel (%p309) target = $region12
    $region11: #{tpu_custom_call.1} parent=5 // pred_region
      %s313 = ssub.s32 %s17, 1
      // Predicated region
      $region13: #{tpu_custom_call.1} parent=11 // pred_check
        %p314 = pneg %p168
      $region14: #{tpu_custom_call.1} parent=11 // pred_check_branch
        %316 = sbr.rel (%p314) target = $region16
      $region15: #{tpu_custom_call.1} parent=11 // pred_region
        _
      $region16: #{tpu_custom_call.1} parent=11 // pred_fallthru
        _
      // Predicated region
      $region17: #{tpu_custom_call.1} parent=11 // pred_check
        %p317 = pneg %p189
      $region18: #{tpu_custom_call.1} parent=11 // pred_check_branch
        %319 = sbr.rel (%p317) target = $region20
      $region19: #{tpu_custom_call.1} parent=11 // pred_region
        _
      $region20: #{tpu_custom_call.1} parent=11 // pred_fallthru
        _
      // Predicated region
      $region21: #{tpu_custom_call.1} parent=11 // pred_check
        %p320 = pneg %p210
      $region22: #{tpu_custom_call.1} parent=11 // pred_check_branch
        %322 = sbr.rel (%p320) target = $region24
      $region23: #{tpu_custom_call.1} parent=11 // pred_region
        _
      $region24: #{tpu_custom_call.1} parent=11 // pred_fallthru
        _
      // Predicated region
      $region25: #{tpu_custom_call.1} parent=11 // pred_check
        %p323 = pneg %p231
      $region26: #{tpu_custom_call.1} parent=11 // pred_check_branch
        %325 = sbr.rel (%p323) target = $region28
      $region27: #{tpu_custom_call.1} parent=11 // pred_region
        _
      $region28: #{tpu_custom_call.1} parent=11 // pred_fallthru
        _
      // Predicated region
      $region29: #{tpu_custom_call.1} parent=11 // pred_check
        %p326 = pneg %p252
      $region30: #{tpu_custom_call.1} parent=11 // pred_check_branch
        %328 = sbr.rel (%p326) target = $region32
      $region31: #{tpu_custom_call.1} parent=11 // pred_region
        _
      $region32: #{tpu_custom_call.1} parent=11 // pred_fallthru
        _
      // Predicated region
      $region33: #{tpu_custom_call.1} parent=11 // pred_check
        %p329 = pneg %p273
      $region34: #{tpu_custom_call.1} parent=11 // pred_check_branch
        %331 = sbr.rel (%p329) target = $region36
      $region35: #{tpu_custom_call.1} parent=11 // pred_region
        _
      $region36: #{tpu_custom_call.1} parent=11 // pred_fallthru
        _
    $region12: #{tpu_custom_call.1} parent=5 // pred_fallthru
      _
    %p332 = scmp.lt.s32.totalorder %s17, 4
    // Predicated region
    $region37: #{tpu_custom_call.1} parent=5 // pred_check
      %p333 = pneg %p332
    $region38: #{tpu_custom_call.1} parent=5 // pred_check_branch
      %335 = sbr.rel (%p333) target = $region40
    $region39: #{tpu_custom_call.1} parent=5 // pred_region
      // Predicated region
      $region41: #{tpu_custom_call.1} parent=39 // pred_check
        %p336 = pneg %p37
      $region42: #{tpu_custom_call.1} parent=39 // pred_check_branch
        %338 = sbr.rel (%p336) target = $region44
      $region43: #{tpu_custom_call.1} parent=39 // pred_region
        %s339 = smul.u32 32, %s17
        %p340 = scmp.lt.s32.totalorder %s339, 127
        %s341 = scalar_select %p340, %s339, 127
        %s342 = smul.addr %s341, 8
        %s343 = scalar_lea.vmem %s0, %s342
        %s344 = smul.u32 32, %s17
      $region44: #{tpu_custom_call.1} parent=39 // pred_fallthru
        _
      // Predicated region
      $region45: #{tpu_custom_call.1} parent=39 // pred_check
        %p345 = pneg %p63
      $region46: #{tpu_custom_call.1} parent=39 // pred_check_branch
        %347 = sbr.rel (%p345) target = $region48
      $region47: #{tpu_custom_call.1} parent=39 // pred_region
        %s348 = smul.u32 32, %s17
        %p349 = scmp.lt.s32.totalorder %s348, 127
        %s350 = scalar_select %p349, %s348, 127
        %s351 = smul.addr %s350, 8
        %s352 = scalar_lea.vmem %s1, %s351
        %s353 = smul.u32 32, %s17
      $region48: #{tpu_custom_call.1} parent=39 // pred_fallthru
        _
      // Predicated region
      $region49: #{tpu_custom_call.1} parent=39 // pred_check
        %p354 = pneg %p89
      $region50: #{tpu_custom_call.1} parent=39 // pred_check_branch
        %356 = sbr.rel (%p354) target = $region52
      $region51: #{tpu_custom_call.1} parent=39 // pred_region
        %s357 = smul.u32 32, %s17
        %p358 = scmp.lt.s32.totalorder %s357, 127
        %s359 = scalar_select %p358, %s357, 127
        %s360 = smul.addr %s359, 8
        %s361 = scalar_lea.vmem %s2, %s360
        %s362 = smul.u32 32, %s17
      $region52: #{tpu_custom_call.1} parent=39 // pred_fallthru
        _
      // Predicated region
      $region53: #{tpu_custom_call.1} parent=39 // pred_check
        %p363 = pneg %p115
      $region54: #{tpu_custom_call.1} parent=39 // pred_check_branch
        %365 = sbr.rel (%p363) target = $region56
      $region55: #{tpu_custom_call.1} parent=39 // pred_region
        %s366 = smul.u32 32, %s17
        %p367 = scmp.lt.s32.totalorder %s366, 127
        %s368 = scalar_select %p367, %s366, 127
        %s369 = smul.addr %s368, 8
        %s370 = scalar_lea.vmem %s3, %s369
        %s371 = smul.u32 32, %s17
      $region56: #{tpu_custom_call.1} parent=39 // pred_fallthru
        _
      // Predicated region
      $region57: #{tpu_custom_call.1} parent=39 // pred_check
        %p372 = pneg %p141
      $region58: #{tpu_custom_call.1} parent=39 // pred_check_branch
        %374 = sbr.rel (%p372) target = $region60
      $region59: #{tpu_custom_call.1} parent=39 // pred_region
        %s375 = smul.u32 32, %s17
        %p376 = scmp.lt.s32.totalorder %s375, 127
        %s377 = scalar_select %p376, %s375, 127
        %s378 = smul.addr %s377, 8
        %s379 = scalar_lea.vmem %s4, %s378
        %s380 = smul.u32 32, %s17
      $region60: #{tpu_custom_call.1} parent=39 // pred_fallthru
        _
    $region40: #{tpu_custom_call.1} parent=5 // pred_fallthru
      _
    %p381 = scmp.le.s32.totalorder 1, %s17
    %p382 = scmp.lt.s32.totalorder %s17, 5
    %p383 = pnand %p381, %p382
    %p384 = pneg %p383
    // Predicated region
    $region61: #{tpu_custom_call.1} parent=5 // pred_check
      _
    $region62: #{tpu_custom_call.1} parent=5 // pred_check_branch
      %386 = sbr.rel (%p383) target = $region64
    $region63: #{tpu_custom_call.1} parent=5 // pred_region
      %s387 = ssub.s32 %s17, 1
      %s388 = smul.u32 32, %s22
      %p389 = scmp.lt.s32.totalorder %s388, 127
      %s390 = scalar_select %p389, %s388, 127
      %s391 = smul.addr %s390, 8
      %s392 = scalar_lea.vmem %s0, %s391
      %p393 = pneg %p43
      %p394 = pneg %p40
      %s395 = smul.u32 32, %s22
      %p396 = scmp.lt.s32.totalorder %s395, 127
      %s397 = scalar_select %p396, %s395, 127
      %s398 = smul.addr %s397, 8
      %s399 = scalar_lea.vmem %s1, %s398
      %p400 = pneg %p69
      %p401 = pneg %p66
      %s402 = smul.u32 32, %s22
      %p403 = scmp.lt.s32.totalorder %s402, 127
      %s404 = scalar_select %p403, %s402, 127
      %s405 = smul.addr %s404, 8
      %s406 = scalar_lea.vmem %s2, %s405
      %p407 = pneg %p95
      %p408 = pneg %p92
      %s409 = smul.u32 32, %s22
      %p410 = scmp.lt.s32.totalorder %s409, 127
      %s411 = scalar_select %p410, %s409, 127
      %s412 = smul.addr %s411, 8
      %s413 = scalar_lea.vmem %s3, %s412
      %p414 = pneg %p121
      %p415 = pneg %p118
      %s416 = smul.u32 32, %s22
      %p417 = scmp.lt.s32.totalorder %s416, 127
      %s418 = scalar_select %p417, %s416, 127
      %s419 = smul.addr %s418, 8
      %s420 = scalar_lea.vmem %s4, %s419
      %p421 = pneg %p147
      %p422 = pneg %p144
      %p423 = pneg %p168
      %p424 = pneg %p165
      %p425 = pneg %p189
      %p426 = pneg %p186
      %p427 = pneg %p210
      %p428 = pneg %p207
      %p429 = pneg %p231
      %p430 = pneg %p228
      %p431 = pneg %p252
      %p432 = pneg %p249
      %p433 = pneg %p273
      %p434 = pneg %p270
      %p435 = pneg %p299
      %p436 = pneg %p296
      %s437 = smul.u32 32, %s22
      %p438 = scmp.lt.s32.totalorder %s437, 127
      %s439 = scalar_select %p438, %s437, 127
      %s440 = smul.addr %s439, 8
      %s441 = scalar_lea.vmem %s11, %s440
      %s442 = smul.u32 32, %s22
      %p443 = scmp.lt.s32.totalorder %s442, 127
      %s444 = scalar_select %p443, %s442, 127
      %s445 = smul.addr %s444, 8
      %s446 = scalar_lea.vmem %s0, %s445
      %s447 = smul.u32 32, %s22
      %s448 = smul.u32 32, %s22
      %p449 = scmp.lt.s32.totalorder %s448, 127
      %s450 = scalar_select %p449, %s448, 127
      %s451 = smul.addr %s450, 8
      %s452 = scalar_lea.vmem %s1, %s451
      %s453 = smul.u32 32, %s22
      %s454 = smul.u32 32, %s22
      %p455 = scmp.lt.s32.totalorder %s454, 127
      %s456 = scalar_select %p455, %s454, 127
      %s457 = smul.addr %s456, 8
      %s458 = scalar_lea.vmem %s2, %s457
      %s459 = smul.u32 32, %s22
      %s460 = smul.u32 32, %s22
      %p461 = scmp.lt.s32.totalorder %s460, 127
      %s462 = scalar_select %p461, %s460, 127
      %s463 = smul.addr %s462, 8
      %s464 = scalar_lea.vmem %s3, %s463
      %s465 = smul.u32 32, %s22
      %s466 = smul.u32 32, %s22
      %p467 = scmp.lt.s32.totalorder %s466, 127
      %s468 = scalar_select %p467, %s466, 127
      %s469 = smul.addr %s468, 8
      %s470 = scalar_lea.vmem %s4, %s469
      %s471 = smul.u32 32, %s22
      %s472 = smul.u32 32, %s22
      %p473 = scmp.lt.s32.totalorder %s472, 127
      %s474 = scalar_select %p473, %s472, 127
      %s475 = smul.addr %s474, 8
      %s476 = scalar_lea.vmem %s11, %s475
      %s477 = smul.u32 32, %s22
      %v478 = vld [vmem:[%s446] sm:$0xff]
      %v479 = vld [vmem:[%s446 + $0x8] sm:$0xff]
      %v480 = vld [vmem:[%s446 + $0x10] sm:$0xff]
      %v481 = vld [vmem:[%s446 + $0x18] sm:$0xff]
      %v482 = vld [vmem:[%s446 + $0x20] sm:$0xff]
      %v483 = vld [vmem:[%s446 + $0x28] sm:$0xff]
      %v484 = vld [vmem:[%s446 + $0x30] sm:$0xff]
      %v485 = vld [vmem:[%s446 + $0x38] sm:$0xff]
      %v486 = vld [vmem:[%s446 + $0x40] sm:$0xff]
      %v487 = vld [vmem:[%s446 + $0x48] sm:$0xff]
      %v488 = vld [vmem:[%s446 + $0x50] sm:$0xff]
      %v489 = vld [vmem:[%s446 + $0x58] sm:$0xff]
      %v490 = vld [vmem:[%s446 + $0x60] sm:$0xff]
      %v491 = vld [vmem:[%s446 + $0x68] sm:$0xff]
      %v492 = vld [vmem:[%s446 + $0x70] sm:$0xff]
      %v493 = vld [vmem:[%s446 + $0x78] sm:$0xff]
      %v494 = vld [vmem:[%s446 + $0x80] sm:$0xff]
      %v495 = vld [vmem:[%s446 + $0x88] sm:$0xff]
      %v496 = vld [vmem:[%s446 + $0x90] sm:$0xff]
      %v497 = vld [vmem:[%s446 + $0x98] sm:$0xff]
      %v498 = vld [vmem:[%s446 + $0xa0] sm:$0xff]
      %v499 = vld [vmem:[%s446 + $0xa8] sm:$0xff]
      %v500 = vld [vmem:[%s446 + $0xb0] sm:$0xff]
      %v501 = vld [vmem:[%s446 + $0xb8] sm:$0xff]
      %v502 = vld [vmem:[%s446 + $0xc0] sm:$0xff]
      %v503 = vld [vmem:[%s446 + $0xc8] sm:$0xff]
      %v504 = vld [vmem:[%s446 + $0xd0] sm:$0xff]
      %v505 = vld [vmem:[%s446 + $0xd8] sm:$0xff]
      %v506 = vld [vmem:[%s446 + $0xe0] sm:$0xff]
      %v507 = vld [vmem:[%s446 + $0xe8] sm:$0xff]
      %v508 = vld [vmem:[%s446 + $0xf0] sm:$0xff]
      %v509 = vld [vmem:[%s446 + $0xf8] sm:$0xff]
      %v510 = vld [vmem:[%s6] sm:$0xff]
      %v511 = vld [vmem:[%s6 + $0x8] sm:$0xff]
      %v512 = vld [vmem:[%s6 + $0x10] sm:$0xff]
      %v513 = vld [vmem:[%s6 + $0x18] sm:$0xff]
      %v514 = vld [vmem:[%s6 + $0x20] sm:$0xff]
      %v515 = vld [vmem:[%s6 + $0x28] sm:$0xff]
      %v516 = vld [vmem:[%s6 + $0x30] sm:$0xff]
      %v517 = vld [vmem:[%s6 + $0x38] sm:$0xff]
      %vm518 = vcmask 523264
      %v520 = vsel %vm518, %v478, 0
      %v523 = vsel %vm518, %v479, 0
      %v526 = vsel %vm518, %v480, 0
      %v529 = vsel %vm518, %v481, 0
      %v532 = vsel %vm518, %v482, 0
      %v535 = vsel %vm518, %v483, 0
      %v538 = vsel %vm518, %v484, 0
      %v541 = vsel %vm518, %v485, 0
      %v544 = vsel %vm518, %v486, 0
      %v547 = vsel %vm518, %v487, 0
      %v550 = vsel %vm518, %v488, 0
      %v553 = vsel %vm518, %v489, 0
      %v556 = vsel %vm518, %v490, 0
      %v559 = vsel %vm518, %v491, 0
      %v562 = vsel %vm518, %v492, 0
      %v565 = vsel %vm518, %v493, 0
      %v568 = vsel %vm518, %v494, 0
      %v571 = vsel %vm518, %v495, 0
      %v574 = vsel %vm518, %v496, 0
      %v577 = vsel %vm518, %v497, 0
      %v580 = vsel %vm518, %v498, 0
      %v583 = vsel %vm518, %v499, 0
      %v586 = vsel %vm518, %v500, 0
      %v589 = vsel %vm518, %v501, 0
      %v592 = vsel %vm518, %v502, 0
      %v595 = vsel %vm518, %v503, 0
      %v598 = vsel %vm518, %v504, 0
      %v601 = vsel %vm518, %v505, 0
      %v604 = vsel %vm518, %v506, 0
      %v607 = vsel %vm518, %v507, 0
      %v610 = vsel %vm518, %v508, 0
      %v613 = vsel %vm518, %v509, 0
      %615 = vmatprep.subr.mxu0 0.0
      %616 = vmatpush1.msra.mxu0 %v510
      %617 = vmatprep.subr.mxu0 0.0
      %618 = vmatpush1.msra.mxu0 %v511
      %619 = vmatprep.subr.mxu0 0.0
      %620 = vmatpush1.msra.mxu0 %v512
      %621 = vmatprep.subr.mxu0 0.0
      %622 = vmatpush1.msra.mxu0 %v513
      %623 = vmatprep.subr.mxu0 0.0
      %624 = vmatpush1.msra.mxu0 %v514
      %625 = vmatprep.subr.mxu0 0.0
      %626 = vmatpush1.msra.mxu0 %v515
      %627 = vmatprep.subr.mxu0 0.0
      %628 = vmatpush1.msra.mxu0 %v516
      %629 = vmatprep.subr.mxu0 0.0
      %630 = vmatpush1.msra.mxu0 %v517
      %631 = vmatprep.subr.mxu0 0.0
      %632 = vmatpush1.msra.mxu0 0.0
      %633 = vmatprep.subr.mxu0 0.0
      %634 = vmatpush1.msra.mxu0 0.0
      %635 = vmatprep.subr.mxu0 0.0
      %636 = vmatpush1.msra.mxu0 0.0
      %637 = vmatprep.subr.mxu0 0.0
      %638 = vmatpush1.msra.mxu0 0.0
      %639 = vmatprep.subr.mxu0 0.0
      %640 = vmatpush1.msra.mxu0 0.0
      %641 = vmatprep.subr.mxu0 0.0
      %642 = vmatpush1.msra.mxu0 0.0
      %643 = vmatprep.subr.mxu0 0.0
      %644 = vmatpush1.msra.mxu0 0.0
      %645 = vmatprep.subr.mxu0 0.0
      %646 = vmatpush1.msra.mxu0 0.0
      %647 = vmatprep.subr.mxu0 0.0
      %648 = vmatpush1.msra.mxu0 0.0
      %649 = vmatprep.subr.mxu0 0.0
      %650 = vmatpush1.msra.mxu0 0.0
      %651 = vmatprep.subr.mxu0 0.0
      %652 = vmatpush1.msra.mxu0 0.0
      %653 = vmatprep.subr.mxu0 0.0
      %654 = vmatpush1.msra.mxu0 0.0
      %655 = vmatprep.subr.mxu0 0.0
      %656 = vmatpush1.msra.mxu0 0.0
      %657 = vmatprep.subr.mxu0 0.0
      %658 = vmatpush1.msra.mxu0 0.0
      %659 = vmatprep.subr.mxu0 0.0
      %660 = vmatpush1.msra.mxu0 0.0
      %661 = vmatprep.subr.mxu0 0.0
      %662 = vmatpush1.msra.mxu0 0.0
      %663 = vmatprep.subr.mxu0 0.0
      %664 = vmatpush1.msra.mxu0 0.0
      %665 = vmatprep.subr.mxu0 0.0
      %666 = vmatpush1.msra.mxu0 0.0
      %667 = vmatprep.subr.mxu0 0.0
      %668 = vmatpush1.msra.mxu0 0.0
      %669 = vmatprep.subr.mxu0 0.0
      %670 = vmatpush1.msra.mxu0 0.0
      %671 = vmatprep.subr.mxu0 0.0
      %672 = vmatpush1.msra.mxu0 0.0
      %673 = vmatprep.subr.mxu0 0.0
      %674 = vmatpush1.msra.mxu0 0.0
      %675 = vmatprep.subr.mxu0 0.0
      %676 = vmatpush1.msra.mxu0 0.0
      %677 = vmatprep.subr.mxu0 0.0
      %678 = vmatpush1.msra.mxu0 0.0
      %679 = vmatprep.mubr.f32.mxu0 0.0
      %680 = vmatmul.mubr.f32.gmra.mrb[0].mxu0 %v520
      %v681 = vpop.f32.mrb[0].mxu0
      %v682 = vadd.f32 0.0, %v681
      %v683 = vpop.f32.mrb[0].mxu0
      %684 = vmatprep.mubr.f32.mxu0 0.0
      %685 = vmatmul.mubr.f32.gmra.mrb[0].mxu0 %v523
      %v686 = vpop.f32.mrb[0].mxu0
      %v687 = vadd.f32 0.0, %v686
      %v688 = vpop.f32.mrb[0].mxu0
      %689 = vmatprep.mubr.f32.mxu0 0.0
      %690 = vmatmul.mubr.f32.gmra.mrb[0].mxu0 %v526
      %v691 = vpop.f32.mrb[0].mxu0
      %v692 = vadd.f32 0.0, %v691
      %v693 = vpop.f32.mrb[0].mxu0
      %694 = vmatprep.mubr.f32.mxu0 0.0
      %695 = vmatmul.mubr.f32.gmra.mrb[0].mxu0 %v529
      %v696 = vpop.f32.mrb[0].mxu0
      %v697 = vadd.f32 0.0, %v696
      %v698 = vpop.f32.mrb[0].mxu0
      %699 = vmatprep.mubr.f32.mxu0 0.0
      %700 = vmatmul.mubr.f32.gmra.mrb[0].mxu0 %v532
      %v701 = vpop.f32.mrb[0].mxu0
      %v702 = vadd.f32 0.0, %v701
      %v703 = vpop.f32.mrb[0].mxu0
      %704 = vmatprep.mubr.f32.mxu0 0.0
      %705 = vmatmul.mubr.f32.gmra.mrb[0].mxu0 %v535
      %v706 = vpop.f32.mrb[0].mxu0
      %v707 = vadd.f32 0.0, %v706
      %v708 = vpop.f32.mrb[0].mxu0
      %709 = vmatprep.mubr.f32.mxu0 0.0
      %710 = vmatmul.mubr.f32.gmra.mrb[0].mxu0 %v538
      %v711 = vpop.f32.mrb[0].mxu0
      %v712 = vadd.f32 0.0, %v711
      %v713 = vpop.f32.mrb[0].mxu0
      %714 = vmatprep.mubr.f32.mxu0 0.0
      %715 = vmatmul.mubr.f32.gmra.mrb[0].mxu0 %v541
      %v716 = vpop.f32.mrb[0].mxu0
      %v717 = vadd.f32 0.0, %v716
      %v718 = vpop.f32.mrb[0].mxu0
      %719 = vmatprep.mubr.f32.mxu0 0.0
      %720 = vmatmul.mubr.f32.gmra.mrb[0].mxu0 %v544
      %v721 = vpop.f32.mrb[0].mxu0
      %v722 = vadd.f32 0.0, %v721
      %v723 = vpop.f32.mrb[0].mxu0
      %724 = vmatprep.mubr.f32.mxu0 0.0
      %725 = vmatmul.mubr.f32.gmra.mrb[0].mxu0 %v547
      %v726 = vpop.f32.mrb[0].mxu0
      %v727 = vadd.f32 0.0, %v726
      %v728 = vpop.f32.mrb[0].mxu0
      %729 = vmatprep.mubr.f32.mxu0 0.0
      %730 = vmatmul.mubr.f32.gmra.mrb[0].mxu0 %v550
      %v731 = vpop.f32.mrb[0].mxu0
      %v732 = vadd.f32 0.0, %v731
      %v733 = vpop.f32.mrb[0].mxu0
      %734 = vmatprep.mubr.f32.mxu0 0.0
      %735 = vmatmul.mubr.f32.gmra.mrb[0].mxu0 %v553
      %v736 = vpop.f32.mrb[0].mxu0
      %v737 = vadd.f32 0.0, %v736
      %v738 = vpop.f32.mrb[0].mxu0
      %739 = vmatprep.mubr.f32.mxu0 0.0
      %740 = vmatmul.mubr.f32.gmra.mrb[0].mxu0 %v556
      %v741 = vpop.f32.mrb[0].mxu0
      %v742 = vadd.f32 0.0, %v741
      %v743 = vpop.f32.mrb[0].mxu0
      %744 = vmatprep.mubr.f32.mxu0 0.0
      %745 = vmatmul.mubr.f32.gmra.mrb[0].mxu0 %v559
      %v746 = vpop.f32.mrb[0].mxu0
      %v747 = vadd.f32 0.0, %v746
      %v748 = vpop.f32.mrb[0].mxu0
      %749 = vmatprep.mubr.f32.mxu0 0.0
      %750 = vmatmul.mubr.f32.gmra.mrb[0].mxu0 %v562
      %v751 = vpop.f32.mrb[0].mxu0
      %v752 = vadd.f32 0.0, %v751
      %v753 = vpop.f32.mrb[0].mxu0
      %754 = vmatprep.mubr.f32.mxu0 0.0
      %755 = vmatmul.mubr.f32.gmra.mrb[0].mxu0 %v565
      %v756 = vpop.f32.mrb[0].mxu0
      %v757 = vadd.f32 0.0, %v756
      %v758 = vpop.f32.mrb[0].mxu0
      %759 = vmatprep.mubr.f32.mxu0 0.0
      %760 = vmatmul.mubr.f32.gmra.mrb[0].mxu0 %v568
      %v761 = vpop.f32.mrb[0].mxu0
      %v762 = vadd.f32 0.0, %v761
      %v763 = vpop.f32.mrb[0].mxu0
      %764 = vmatprep.mubr.f32.mxu0 0.0
      %765 = vmatmul.mubr.f32.gmra.mrb[0].mxu0 %v571
      %v766 = vpop.f32.mrb[0].mxu0
      %v767 = vadd.f32 0.0, %v766
      %v768 = vpop.f32.mrb[0].mxu0
      %769 = vmatprep.mubr.f32.mxu0 0.0
      %770 = vmatmul.mubr.f32.gmra.mrb[0].mxu0 %v574
      %v771 = vpop.f32.mrb[0].mxu0
      %v772 = vadd.f32 0.0, %v771
      %v773 = vpop.f32.mrb[0].mxu0
      %774 = vmatprep.mubr.f32.mxu0 0.0
      %775 = vmatmul.mubr.f32.gmra.mrb[0].mxu0 %v577
      %v776 = vpop.f32.mrb[0].mxu0
      %v777 = vadd.f32 0.0, %v776
      %v778 = vpop.f32.mrb[0].mxu0
      %779 = vmatprep.mubr.f32.mxu0 0.0
      %780 = vmatmul.mubr.f32.gmra.mrb[0].mxu0 %v580
      %v781 = vpop.f32.mrb[0].mxu0
      %v782 = vadd.f32 0.0, %v781
      %v783 = vpop.f32.mrb[0].mxu0
      %784 = vmatprep.mubr.f32.mxu0 0.0
      %785 = vmatmul.mubr.f32.gmra.mrb[0].mxu0 %v583
      %v786 = vpop.f32.mrb[0].mxu0
      %v787 = vadd.f32 0.0, %v786
      %v788 = vpop.f32.mrb[0].mxu0
      %789 = vmatprep.mubr.f32.mxu0 0.0
      %790 = vmatmul.mubr.f32.gmra.mrb[0].mxu0 %v586
      %v791 = vpop.f32.mrb[0].mxu0
      %v792 = vadd.f32 0.0, %v791
      %v793 = vpop.f32.mrb[0].mxu0
      %794 = vmatprep.mubr.f32.mxu0 0.0
      %795 = vmatmul.mubr.f32.gmra.mrb[0].mxu0 %v589
      %v796 = vpop.f32.mrb[0].mxu0
      %v797 = vadd.f32 0.0, %v796
      %v798 = vpop.f32.mrb[0].mxu0
      %799 = vmatprep.mubr.f32.mxu0 0.0
      %800 = vmatmul.mubr.f32.gmra.mrb[0].mxu0 %v592
      %v801 = vpop.f32.mrb[0].mxu0
      %v802 = vadd.f32 0.0, %v801
      %v803 = vpop.f32.mrb[0].mxu0
      %804 = vmatprep.mubr.f32.mxu0 0.0
      %805 = vmatmul.mubr.f32.gmra.mrb[0].mxu0 %v595
      %v806 = vpop.f32.mrb[0].mxu0
      %v807 = vadd.f32 0.0, %v806
      %v808 = vpop.f32.mrb[0].mxu0
      %809 = vmatprep.mubr.f32.mxu0 0.0
      %810 = vmatmul.mubr.f32.gmra.mrb[0].mxu0 %v598
      %v811 = vpop.f32.mrb[0].mxu0
      %v812 = vadd.f32 0.0, %v811
      %v813 = vpop.f32.mrb[0].mxu0
      %814 = vmatprep.mubr.f32.mxu0 0.0
      %815 = vmatmul.mubr.f32.gmra.mrb[0].mxu0 %v601
      %v816 = vpop.f32.mrb[0].mxu0
      %v817 = vadd.f32 0.0, %v816
      %v818 = vpop.f32.mrb[0].mxu0
      %819 = vmatprep.mubr.f32.mxu0 0.0
      %820 = vmatmul.mubr.f32.gmra.mrb[0].mxu0 %v604
      %v821 = vpop.f32.mrb[0].mxu0
      %v822 = vadd.f32 0.0, %v821
      %v823 = vpop.f32.mrb[0].mxu0
      %824 = vmatprep.mubr.f32.mxu0 0.0
      %825 = vmatmul.mubr.f32.gmra.mrb[0].mxu0 %v607
      %v826 = vpop.f32.mrb[0].mxu0
      %v827 = vadd.f32 0.0, %v826
      %v828 = vpop.f32.mrb[0].mxu0
      %829 = vmatprep.mubr.f32.mxu0 0.0
      %830 = vmatmul.mubr.f32.gmra.mrb[0].mxu0 %v610
      %v831 = vpop.f32.mrb[0].mxu0
      %v832 = vadd.f32 0.0, %v831
      %v833 = vpop.f32.mrb[0].mxu0
      %834 = vmatprep.mubr.f32.mxu0 0.0
      %835 = vmatmul.mubr.f32.gmra.mrb[0].mxu0 %v613
      %v836 = vpop.f32.mrb[0].mxu0
      %v837 = vadd.f32 0.0, %v836
      %v838 = vpop.f32.mrb[0].mxu0
      %839 = vdwg.mxu0
      %v840 = vld [vmem:[%s5] sm:$0xff]
      %v841 = vld [vmem:[%s5 + $0x8] sm:$0xff]
      %v842 = vld [vmem:[%s5 + $0x10] sm:$0xff]
      %v843 = vld [vmem:[%s5 + $0x18] sm:$0xff]
      %v844 = vld [vmem:[%s5 + $0x20] sm:$0xff]
      %v845 = vld [vmem:[%s5 + $0x28] sm:$0xff]
      %v846 = vld [vmem:[%s5 + $0x30] sm:$0xff]
      %v847 = vld [vmem:[%s5 + $0x38] sm:$0xff]
      %v848 = vld [vmem:[%s5 + $0x40] sm:$0xff]
      %v849 = vld [vmem:[%s5 + $0x48] sm:$0xff]
      %v850 = vld [vmem:[%s5 + $0x50] sm:$0xff]
      %v851 = vld [vmem:[%s5 + $0x58] sm:$0xff]
      %v852 = vld [vmem:[%s5 + $0x60] sm:$0xff]
      %v853 = vld [vmem:[%s5 + $0x68] sm:$0xff]
      %v854 = vld [vmem:[%s5 + $0x70] sm:$0xff]
      %v855 = vld [vmem:[%s5 + $0x78] sm:$0xff]
      %v856 = vld [vmem:[%s5 + $0x80] sm:$0xff]
      %v857 = vld [vmem:[%s5 + $0x88] sm:$0xff]
      %v858 = vld [vmem:[%s5 + $0x90] sm:$0xff]
      %v859 = vld [vmem:[%s5 + $0x98] sm:$0xff]
      %v860 = vld [vmem:[%s5 + $0xa0] sm:$0xff]
      %v861 = vld [vmem:[%s5 + $0xa8] sm:$0xff]
      %v862 = vld [vmem:[%s5 + $0xb0] sm:$0xff]
      %v863 = vld [vmem:[%s5 + $0xb8] sm:$0xff]
      %v864 = vld [vmem:[%s5 + $0xc0] sm:$0xff]
      %v865 = vld [vmem:[%s5 + $0xc8] sm:$0xff]
      %v866 = vld [vmem:[%s5 + $0xd0] sm:$0xff]
      %v867 = vld [vmem:[%s5 + $0xd8] sm:$0xff]
      %v868 = vld [vmem:[%s5 + $0xe0] sm:$0xff]
      %v869 = vld [vmem:[%s5 + $0xe8] sm:$0xff]
      %v870 = vld [vmem:[%s5 + $0xf0] sm:$0xff]
      %v871 = vld [vmem:[%s5 + $0xf8] sm:$0xff]
      %873 = vset.pattern.permute.xlu0 0
      %874 = vperm.xlu0 %873, %v840
      %v875 = vpop.permute.xlu0 %874
      %878 = vset.pattern.permute.xlu0 0
      %879 = vperm.xlu0 %878, %v841
      %v880 = vpop.permute.xlu0 %879
      %883 = vset.pattern.permute.xlu0 0
      %884 = vperm.xlu0 %883, %v842
      %v885 = vpop.permute.xlu0 %884
      %888 = vset.pattern.permute.xlu0 0
      %889 = vperm.xlu0 %888, %v843
      %v890 = vpop.permute.xlu0 %889
      %893 = vset.pattern.permute.xlu0 0
      %894 = vperm.xlu0 %893, %v844
      %v895 = vpop.permute.xlu0 %894
      %898 = vset.pattern.permute.xlu0 0
      %899 = vperm.xlu0 %898, %v845
      %v900 = vpop.permute.xlu0 %899
      %903 = vset.pattern.permute.xlu0 0
      %904 = vperm.xlu0 %903, %v846
      %v905 = vpop.permute.xlu0 %904
      %908 = vset.pattern.permute.xlu0 0
      %909 = vperm.xlu0 %908, %v847
      %v910 = vpop.permute.xlu0 %909
      %913 = vset.pattern.permute.xlu0 0
      %914 = vperm.xlu0 %913, %v848
      %v915 = vpop.permute.xlu0 %914
      %918 = vset.pattern.permute.xlu0 0
      %919 = vperm.xlu0 %918, %v849
      %v920 = vpop.permute.xlu0 %919
      %923 = vset.pattern.permute.xlu0 0
      %924 = vperm.xlu0 %923, %v850
      %v925 = vpop.permute.xlu0 %924
      %928 = vset.pattern.permute.xlu0 0
      %929 = vperm.xlu0 %928, %v851
      %v930 = vpop.permute.xlu0 %929
      %933 = vset.pattern.permute.xlu0 0
      %934 = vperm.xlu0 %933, %v852
      %v935 = vpop.permute.xlu0 %934
      %938 = vset.pattern.permute.xlu0 0
      %939 = vperm.xlu0 %938, %v853
      %v940 = vpop.permute.xlu0 %939
      %943 = vset.pattern.permute.xlu0 0
      %944 = vperm.xlu0 %943, %v854
      %v945 = vpop.permute.xlu0 %944
      %948 = vset.pattern.permute.xlu0 0
      %949 = vperm.xlu0 %948, %v855
      %v950 = vpop.permute.xlu0 %949
      %953 = vset.pattern.permute.xlu0 0
      %954 = vperm.xlu0 %953, %v856
      %v955 = vpop.permute.xlu0 %954
      %958 = vset.pattern.permute.xlu0 0
      %959 = vperm.xlu0 %958, %v857
      %v960 = vpop.permute.xlu0 %959
      %963 = vset.pattern.permute.xlu0 0
      %964 = vperm.xlu0 %963, %v858
      %v965 = vpop.permute.xlu0 %964
      %968 = vset.pattern.permute.xlu0 0
      %969 = vperm.xlu0 %968, %v859
      %v970 = vpop.permute.xlu0 %969
      %973 = vset.pattern.permute.xlu0 0
      %974 = vperm.xlu0 %973, %v860
      %v975 = vpop.permute.xlu0 %974
      %978 = vset.pattern.permute.xlu0 0
      %979 = vperm.xlu0 %978, %v861
      %v980 = vpop.permute.xlu0 %979
      %983 = vset.pattern.permute.xlu0 0
      %984 = vperm.xlu0 %983, %v862
      %v985 = vpop.permute.xlu0 %984
      %988 = vset.pattern.permute.xlu0 0
      %989 = vperm.xlu0 %988, %v863
      %v990 = vpop.permute.xlu0 %989
      %993 = vset.pattern.permute.xlu0 0
      %994 = vperm.xlu0 %993, %v864
      %v995 = vpop.permute.xlu0 %994
      %998 = vset.pattern.permute.xlu0 0
      %999 = vperm.xlu0 %998, %v865
      %v1000 = vpop.permute.xlu0 %999
      %1003 = vset.pattern.permute.xlu0 0
      %1004 = vperm.xlu0 %1003, %v866
      %v1005 = vpop.permute.xlu0 %1004
      %1008 = vset.pattern.permute.xlu0 0
      %1009 = vperm.xlu0 %1008, %v867
      %v1010 = vpop.permute.xlu0 %1009
      %1013 = vset.pattern.permute.xlu0 0
      %1014 = vperm.xlu0 %1013, %v868
      %v1015 = vpop.permute.xlu0 %1014
      %1018 = vset.pattern.permute.xlu0 0
      %1019 = vperm.xlu0 %1018, %v869
      %v1020 = vpop.permute.xlu0 %1019
      %1023 = vset.pattern.permute.xlu0 0
      %1024 = vperm.xlu0 %1023, %v870
      %v1025 = vpop.permute.xlu0 %1024
      %1028 = vset.pattern.permute.xlu0 0
      %1029 = vperm.xlu0 %1028, %v871
      %v1030 = vpop.permute.xlu0 %1029
      %v1032 = vmul.f32 %v682, %v875
      %v1033 = vmul.f32 %v687, %v880
      %v1034 = vmul.f32 %v692, %v885
      %v1035 = vmul.f32 %v697, %v890
      %v1036 = vmul.f32 %v702, %v895
      %v1037 = vmul.f32 %v707, %v900
      %v1038 = vmul.f32 %v712, %v905
      %v1039 = vmul.f32 %v717, %v910
      %v1040 = vmul.f32 %v722, %v915
      %v1041 = vmul.f32 %v727, %v920
      %v1042 = vmul.f32 %v732, %v925
      %v1043 = vmul.f32 %v737, %v930
      %v1044 = vmul.f32 %v742, %v935
      %v1045 = vmul.f32 %v747, %v940
      %v1046 = vmul.f32 %v752, %v945
      %v1047 = vmul.f32 %v757, %v950
      %v1048 = vmul.f32 %v762, %v955
      %v1049 = vmul.f32 %v767, %v960
      %v1050 = vmul.f32 %v772, %v965
      %v1051 = vmul.f32 %v777, %v970
      %v1052 = vmul.f32 %v782, %v975
      %v1053 = vmul.f32 %v787, %v980
      %v1054 = vmul.f32 %v792, %v985
      %v1055 = vmul.f32 %v797, %v990
      %v1056 = vmul.f32 %v802, %v995
      %v1057 = vmul.f32 %v807, %v1000
      %v1058 = vmul.f32 %v812, %v1005
      %v1059 = vmul.f32 %v817, %v1010
      %v1060 = vmul.f32 %v822, %v1015
      %v1061 = vmul.f32 %v827, %v1020
      %v1062 = vmul.f32 %v832, %v1025
      %v1063 = vmul.f32 %v837, %v1030
      %v1064 = vlaneseq
      %v1065 = vand.u32 %v1064, 127
      %v1066 = vld [vmem:[%s452] sm:$0xff]
      %v1067 = vld [vmem:[%s452 + $0x8] sm:$0xff]
      %v1068 = vld [vmem:[%s452 + $0x10] sm:$0xff]
      %v1069 = vld [vmem:[%s452 + $0x18] sm:$0xff]
      %v1070 = vld [vmem:[%s452 + $0x20] sm:$0xff]
      %v1071 = vld [vmem:[%s452 + $0x28] sm:$0xff]
      %v1072 = vld [vmem:[%s452 + $0x30] sm:$0xff]
      %v1073 = vld [vmem:[%s452 + $0x38] sm:$0xff]
      %v1074 = vld [vmem:[%s452 + $0x40] sm:$0xff]
      %v1075 = vld [vmem:[%s452 + $0x48] sm:$0xff]
      %v1076 = vld [vmem:[%s452 + $0x50] sm:$0xff]
      %v1077 = vld [vmem:[%s452 + $0x58] sm:$0xff]
      %v1078 = vld [vmem:[%s452 + $0x60] sm:$0xff]
      %v1079 = vld [vmem:[%s452 + $0x68] sm:$0xff]
      %v1080 = vld [vmem:[%s452 + $0x70] sm:$0xff]
      %v1081 = vld [vmem:[%s452 + $0x78] sm:$0xff]
      %v1082 = vld [vmem:[%s452 + $0x80] sm:$0xff]
      %v1083 = vld [vmem:[%s452 + $0x88] sm:$0xff]
      %v1084 = vld [vmem:[%s452 + $0x90] sm:$0xff]
      %v1085 = vld [vmem:[%s452 + $0x98] sm:$0xff]
      %v1086 = vld [vmem:[%s452 + $0xa0] sm:$0xff]
      %v1087 = vld [vmem:[%s452 + $0xa8] sm:$0xff]
      %v1088 = vld [vmem:[%s452 + $0xb0] sm:$0xff]
      %v1089 = vld [vmem:[%s452 + $0xb8] sm:$0xff]
      %v1090 = vld [vmem:[%s452 + $0xc0] sm:$0xff]
      %v1091 = vld [vmem:[%s452 + $0xc8] sm:$0xff]
      %v1092 = vld [vmem:[%s452 + $0xd0] sm:$0xff]
      %v1093 = vld [vmem:[%s452 + $0xd8] sm:$0xff]
      %v1094 = vld [vmem:[%s452 + $0xe0] sm:$0xff]
      %v1095 = vld [vmem:[%s452 + $0xe8] sm:$0xff]
      %v1096 = vld [vmem:[%s452 + $0xf0] sm:$0xff]
      %v1097 = vld [vmem:[%s452 + $0xf8] sm:$0xff]
      %vm1098 = vcmp.gt.s32.totalorder %v1066, 4294967197
      %vm1099 = vcmp.gt.s32.totalorder %v1067, 4294967197
      %vm1100 = vcmp.gt.s32.totalorder %v1068, 4294967197
      %vm1101 = vcmp.gt.s32.totalorder %v1069, 4294967197
      %vm1102 = vcmp.gt.s32.totalorder %v1070, 4294967197
      %vm1103 = vcmp.gt.s32.totalorder %v1071, 4294967197
      %vm1104 = vcmp.gt.s32.totalorder %v1072, 4294967197
      %vm1105 = vcmp.gt.s32.totalorder %v1073, 4294967197
      %vm1106 = vcmp.gt.s32.totalorder %v1074, 4294967197
      %vm1107 = vcmp.gt.s32.totalorder %v1075, 4294967197
      %vm1108 = vcmp.gt.s32.totalorder %v1076, 4294967197
      %vm1109 = vcmp.gt.s32.totalorder %v1077, 4294967197
      %vm1110 = vcmp.gt.s32.totalorder %v1078, 4294967197
      %vm1111 = vcmp.gt.s32.totalorder %v1079, 4294967197
      %vm1112 = vcmp.gt.s32.totalorder %v1080, 4294967197
      %vm1113 = vcmp.gt.s32.totalorder %v1081, 4294967197
      %vm1114 = vcmp.gt.s32.totalorder %v1082, 4294967197
      %vm1115 = vcmp.gt.s32.totalorder %v1083, 4294967197
      %vm1116 = vcmp.gt.s32.totalorder %v1084, 4294967197
      %vm1117 = vcmp.gt.s32.totalorder %v1085, 4294967197
      %vm1118 = vcmp.gt.s32.totalorder %v1086, 4294967197
      %vm1119 = vcmp.gt.s32.totalorder %v1087, 4294967197
      %vm1120 = vcmp.gt.s32.totalorder %v1088, 4294967197
      %vm1121 = vcmp.gt.s32.totalorder %v1089, 4294967197
      %vm1122 = vcmp.gt.s32.totalorder %v1090, 4294967197
      %vm1123 = vcmp.gt.s32.totalorder %v1091, 4294967197
      %vm1124 = vcmp.gt.s32.totalorder %v1092, 4294967197
      %vm1125 = vcmp.gt.s32.totalorder %v1093, 4294967197
      %vm1126 = vcmp.gt.s32.totalorder %v1094, 4294967197
      %vm1127 = vcmp.gt.s32.totalorder %v1095, 4294967197
      %vm1128 = vcmp.gt.s32.totalorder %v1096, 4294967197
      %vm1129 = vcmp.gt.s32.totalorder %v1097, 4294967197
      %v1130 = vsel %vm1098, 1, 0
      %v1131 = vsel %vm1099, 1, 0
      %v1132 = vsel %vm1100, 1, 0
      %v1133 = vsel %vm1101, 1, 0
      %v1134 = vsel %vm1102, 1, 0
      %v1135 = vsel %vm1103, 1, 0
      %v1136 = vsel %vm1104, 1, 0
      %v1137 = vsel %vm1105, 1, 0
      %v1138 = vsel %vm1106, 1, 0
      %v1139 = vsel %vm1107, 1, 0
      %v1140 = vsel %vm1108, 1, 0
      %v1141 = vsel %vm1109, 1, 0
      %v1142 = vsel %vm1110, 1, 0
      %v1143 = vsel %vm1111, 1, 0
      %v1144 = vsel %vm1112, 1, 0
      %v1145 = vsel %vm1113, 1, 0
      %v1146 = vsel %vm1114, 1, 0
      %v1147 = vsel %vm1115, 1, 0
      %v1148 = vsel %vm1116, 1, 0
      %v1149 = vsel %vm1117, 1, 0
      %v1150 = vsel %vm1118, 1, 0
      %v1151 = vsel %vm1119, 1, 0
      %v1152 = vsel %vm1120, 1, 0
      %v1153 = vsel %vm1121, 1, 0
      %v1154 = vsel %vm1122, 1, 0
      %v1155 = vsel %vm1123, 1, 0
      %v1156 = vsel %vm1124, 1, 0
      %v1157 = vsel %vm1125, 1, 0
      %v1158 = vsel %vm1126, 1, 0
      %v1159 = vsel %vm1127, 1, 0
      %v1160 = vsel %vm1128, 1, 0
      %v1161 = vsel %vm1129, 1, 0
      %v1162 = vcvt.s32.f32 %v1130
      %v1163 = vcvt.s32.f32 %v1131
      %v1164 = vcvt.s32.f32 %v1132
      %v1165 = vcvt.s32.f32 %v1133
      %v1166 = vcvt.s32.f32 %v1134
      %v1167 = vcvt.s32.f32 %v1135
      %v1168 = vcvt.s32.f32 %v1136
      %v1169 = vcvt.s32.f32 %v1137
      %v1170 = vcvt.s32.f32 %v1138
      %v1171 = vcvt.s32.f32 %v1139
      %v1172 = vcvt.s32.f32 %v1140
      %v1173 = vcvt.s32.f32 %v1141
      %v1174 = vcvt.s32.f32 %v1142
      %v1175 = vcvt.s32.f32 %v1143
      %v1176 = vcvt.s32.f32 %v1144
      %v1177 = vcvt.s32.f32 %v1145
      %v1178 = vcvt.s32.f32 %v1146
      %v1179 = vcvt.s32.f32 %v1147
      %v1180 = vcvt.s32.f32 %v1148
      %v1181 = vcvt.s32.f32 %v1149
      %v1182 = vcvt.s32.f32 %v1150
      %v1183 = vcvt.s32.f32 %v1151
      %v1184 = vcvt.s32.f32 %v1152
      %v1185 = vcvt.s32.f32 %v1153
      %v1186 = vcvt.s32.f32 %v1154
      %v1187 = vcvt.s32.f32 %v1155
      %v1188 = vcvt.s32.f32 %v1156
      %v1189 = vcvt.s32.f32 %v1157
      %v1190 = vcvt.s32.f32 %v1158
      %v1191 = vcvt.s32.f32 %v1159
      %v1192 = vcvt.s32.f32 %v1160
      %v1193 = vcvt.s32.f32 %v1161
      %vm1194 = vcmp.gt.s32.totalorder %v1066, 0
      %v1195 = vsel %vm1194, %v1066, 0
      %vm1196 = vcmp.gt.s32.totalorder %v1067, 0
      %v1197 = vsel %vm1196, %v1067, 0
      %vm1198 = vcmp.gt.s32.totalorder %v1068, 0
      %v1199 = vsel %vm1198, %v1068, 0
      %vm1200 = vcmp.gt.s32.totalorder %v1069, 0
      %v1201 = vsel %vm1200, %v1069, 0
      %vm1202 = vcmp.gt.s32.totalorder %v1070, 0
      %v1203 = vsel %vm1202, %v1070, 0
      %vm1204 = vcmp.gt.s32.totalorder %v1071, 0
      %v1205 = vsel %vm1204, %v1071, 0
      %vm1206 = vcmp.gt.s32.totalorder %v1072, 0
      %v1207 = vsel %vm1206, %v1072, 0
      %vm1208 = vcmp.gt.s32.totalorder %v1073, 0
      %v1209 = vsel %vm1208, %v1073, 0
      %vm1210 = vcmp.gt.s32.totalorder %v1074, 0
      %v1211 = vsel %vm1210, %v1074, 0
      %vm1212 = vcmp.gt.s32.totalorder %v1075, 0
      %v1213 = vsel %vm1212, %v1075, 0
      %vm1214 = vcmp.gt.s32.totalorder %v1076, 0
      %v1215 = vsel %vm1214, %v1076, 0
      %vm1216 = vcmp.gt.s32.totalorder %v1077, 0
      %v1217 = vsel %vm1216, %v1077, 0
      %vm1218 = vcmp.gt.s32.totalorder %v1078, 0
      %v1219 = vsel %vm1218, %v1078, 0
      %vm1220 = vcmp.gt.s32.totalorder %v1079, 0
      %v1221 = vsel %vm1220, %v1079, 0
      %vm1222 = vcmp.gt.s32.totalorder %v1080, 0
      %v1223 = vsel %vm1222, %v1080, 0
      %vm1224 = vcmp.gt.s32.totalorder %v1081, 0
      %v1225 = vsel %vm1224, %v1081, 0
      %vm1226 = vcmp.gt.s32.totalorder %v1082, 0
      %v1227 = vsel %vm1226, %v1082, 0
      %vm1228 = vcmp.gt.s32.totalorder %v1083, 0
      %v1229 = vsel %vm1228, %v1083, 0
      %vm1230 = vcmp.gt.s32.totalorder %v1084, 0
      %v1231 = vsel %vm1230, %v1084, 0
      %vm1232 = vcmp.gt.s32.totalorder %v1085, 0
      %v1233 = vsel %vm1232, %v1085, 0
      %vm1234 = vcmp.gt.s32.totalorder %v1086, 0
      %v1235 = vsel %vm1234, %v1086, 0
      %vm1236 = vcmp.gt.s32.totalorder %v1087, 0
      %v1237 = vsel %vm1236, %v1087, 0
      %vm1238 = vcmp.gt.s32.totalorder %v1088, 0
      %v1239 = vsel %vm1238, %v1088, 0
      %vm1240 = vcmp.gt.s32.totalorder %v1089, 0
      %v1241 = vsel %vm1240, %v1089, 0
      %vm1242 = vcmp.gt.s32.totalorder %v1090, 0
      %v1243 = vsel %vm1242, %v1090, 0
      %vm1244 = vcmp.gt.s32.totalorder %v1091, 0
      %v1245 = vsel %vm1244, %v1091, 0
      %vm1246 = vcmp.gt.s32.totalorder %v1092, 0
      %v1247 = vsel %vm1246, %v1092, 0
      %vm1248 = vcmp.gt.s32.totalorder %v1093, 0
      %v1249 = vsel %vm1248, %v1093, 0
      %vm1250 = vcmp.gt.s32.totalorder %v1094, 0
      %v1251 = vsel %vm1250, %v1094, 0
      %vm1252 = vcmp.gt.s32.totalorder %v1095, 0
      %v1253 = vsel %vm1252, %v1095, 0
      %vm1254 = vcmp.gt.s32.totalorder %v1096, 0
      %v1255 = vsel %vm1254, %v1096, 0
      %vm1256 = vcmp.gt.s32.totalorder %v1097, 0
      %v1257 = vsel %vm1256, %v1097, 0
      %vm1258 = vcmp.lt.s32.totalorder %v1195, 15
      %v1259 = vsel %vm1258, %v1195, 15
      %vm1260 = vcmp.lt.s32.totalorder %v1197, 15
      %v1261 = vsel %vm1260, %v1197, 15
      %vm1262 = vcmp.lt.s32.totalorder %v1199, 15
      %v1263 = vsel %vm1262, %v1199, 15
      %vm1264 = vcmp.lt.s32.totalorder %v1201, 15
      %v1265 = vsel %vm1264, %v1201, 15
      %vm1266 = vcmp.lt.s32.totalorder %v1203, 15
      %v1267 = vsel %vm1266, %v1203, 15
      %vm1268 = vcmp.lt.s32.totalorder %v1205, 15
      %v1269 = vsel %vm1268, %v1205, 15
      %vm1270 = vcmp.lt.s32.totalorder %v1207, 15
      %v1271 = vsel %vm1270, %v1207, 15
      %vm1272 = vcmp.lt.s32.totalorder %v1209, 15
      %v1273 = vsel %vm1272, %v1209, 15
      %vm1274 = vcmp.lt.s32.totalorder %v1211, 15
      %v1275 = vsel %vm1274, %v1211, 15
      %vm1276 = vcmp.lt.s32.totalorder %v1213, 15
      %v1277 = vsel %vm1276, %v1213, 15
      %vm1278 = vcmp.lt.s32.totalorder %v1215, 15
      %v1279 = vsel %vm1278, %v1215, 15
      %vm1280 = vcmp.lt.s32.totalorder %v1217, 15
      %v1281 = vsel %vm1280, %v1217, 15
      %vm1282 = vcmp.lt.s32.totalorder %v1219, 15
      %v1283 = vsel %vm1282, %v1219, 15
      %vm1284 = vcmp.lt.s32.totalorder %v1221, 15
      %v1285 = vsel %vm1284, %v1221, 15
      %vm1286 = vcmp.lt.s32.totalorder %v1223, 15
      %v1287 = vsel %vm1286, %v1223, 15
      %vm1288 = vcmp.lt.s32.totalorder %v1225, 15
      %v1289 = vsel %vm1288, %v1225, 15
      %vm1290 = vcmp.lt.s32.totalorder %v1227, 15
      %v1291 = vsel %vm1290, %v1227, 15
      %vm1292 = vcmp.lt.s32.totalorder %v1229, 15
      %v1293 = vsel %vm1292, %v1229, 15
      %vm1294 = vcmp.lt.s32.totalorder %v1231, 15
      %v1295 = vsel %vm1294, %v1231, 15
      %vm1296 = vcmp.lt.s32.totalorder %v1233, 15
      %v1297 = vsel %vm1296, %v1233, 15
      %vm1298 = vcmp.lt.s32.totalorder %v1235, 15
      %v1299 = vsel %vm1298, %v1235, 15
      %vm1300 = vcmp.lt.s32.totalorder %v1237, 15
      %v1301 = vsel %vm1300, %v1237, 15
      %vm1302 = vcmp.lt.s32.totalorder %v1239, 15
      %v1303 = vsel %vm1302, %v1239, 15
      %vm1304 = vcmp.lt.s32.totalorder %v1241, 15
      %v1305 = vsel %vm1304, %v1241, 15
      %vm1306 = vcmp.lt.s32.totalorder %v1243, 15
      %v1307 = vsel %vm1306, %v1243, 15
      %vm1308 = vcmp.lt.s32.totalorder %v1245, 15
      %v1309 = vsel %vm1308, %v1245, 15
      %vm1310 = vcmp.lt.s32.totalorder %v1247, 15
      %v1311 = vsel %vm1310, %v1247, 15
      %vm1312 = vcmp.lt.s32.totalorder %v1249, 15
      %v1313 = vsel %vm1312, %v1249, 15
      %vm1314 = vcmp.lt.s32.totalorder %v1251, 15
      %v1315 = vsel %vm1314, %v1251, 15
      %vm1316 = vcmp.lt.s32.totalorder %v1253, 15
      %v1317 = vsel %vm1316, %v1253, 15
      %vm1318 = vcmp.lt.s32.totalorder %v1255, 15
      %v1319 = vsel %vm1318, %v1255, 15
      %vm1320 = vcmp.lt.s32.totalorder %v1257, 15
      %v1321 = vsel %vm1320, %v1257, 15
      %v1322 = vadd.s32 %v1259, 1
      %v1323 = vadd.s32 %v1261, 1
      %v1324 = vadd.s32 %v1263, 1
      %v1325 = vadd.s32 %v1265, 1
      %v1326 = vadd.s32 %v1267, 1
      %v1327 = vadd.s32 %v1269, 1
      %v1328 = vadd.s32 %v1271, 1
      %v1329 = vadd.s32 %v1273, 1
      %v1330 = vadd.s32 %v1275, 1
      %v1331 = vadd.s32 %v1277, 1
      %v1332 = vadd.s32 %v1279, 1
      %v1333 = vadd.s32 %v1281, 1
      %v1334 = vadd.s32 %v1283, 1
      %v1335 = vadd.s32 %v1285, 1
      %v1336 = vadd.s32 %v1287, 1
      %v1337 = vadd.s32 %v1289, 1
      %v1338 = vadd.s32 %v1291, 1
      %v1339 = vadd.s32 %v1293, 1
      %v1340 = vadd.s32 %v1295, 1
      %v1341 = vadd.s32 %v1297, 1
      %v1342 = vadd.s32 %v1299, 1
      %v1343 = vadd.s32 %v1301, 1
      %v1344 = vadd.s32 %v1303, 1
      %v1345 = vadd.s32 %v1305, 1
      %v1346 = vadd.s32 %v1307, 1
      %v1347 = vadd.s32 %v1309, 1
      %v1348 = vadd.s32 %v1311, 1
      %v1349 = vadd.s32 %v1313, 1
      %v1350 = vadd.s32 %v1315, 1
      %v1351 = vadd.s32 %v1317, 1
      %v1352 = vadd.s32 %v1319, 1
      %v1353 = vadd.s32 %v1321, 1
      %vm1354 = vcmp.lt.s32.totalorder %v1322, 15
      %v1355 = vsel %vm1354, %v1322, 15
      %vm1356 = vcmp.lt.s32.totalorder %v1323, 15
      %v1357 = vsel %vm1356, %v1323, 15
      %vm1358 = vcmp.lt.s32.totalorder %v1324, 15
      %v1359 = vsel %vm1358, %v1324, 15
      %vm1360 = vcmp.lt.s32.totalorder %v1325, 15
      %v1361 = vsel %vm1360, %v1325, 15
      %vm1362 = vcmp.lt.s32.totalorder %v1326, 15
      %v1363 = vsel %vm1362, %v1326, 15
      %vm1364 = vcmp.lt.s32.totalorder %v1327, 15
      %v1365 = vsel %vm1364, %v1327, 15
      %vm1366 = vcmp.lt.s32.totalorder %v1328, 15
      %v1367 = vsel %vm1366, %v1328, 15
      %vm1368 = vcmp.lt.s32.totalorder %v1329, 15
      %v1369 = vsel %vm1368, %v1329, 15
      %vm1370 = vcmp.lt.s32.totalorder %v1330, 15
      %v1371 = vsel %vm1370, %v1330, 15
      %vm1372 = vcmp.lt.s32.totalorder %v1331, 15
      %v1373 = vsel %vm1372, %v1331, 15
      %vm1374 = vcmp.lt.s32.totalorder %v1332, 15
      %v1375 = vsel %vm1374, %v1332, 15
      %vm1376 = vcmp.lt.s32.totalorder %v1333, 15
      %v1377 = vsel %vm1376, %v1333, 15
      %vm1378 = vcmp.lt.s32.totalorder %v1334, 15
      %v1379 = vsel %vm1378, %v1334, 15
      %vm1380 = vcmp.lt.s32.totalorder %v1335, 15
      %v1381 = vsel %vm1380, %v1335, 15
      %vm1382 = vcmp.lt.s32.totalorder %v1336, 15
      %v1383 = vsel %vm1382, %v1336, 15
      %vm1384 = vcmp.lt.s32.totalorder %v1337, 15
      %v1385 = vsel %vm1384, %v1337, 15
      %vm1386 = vcmp.lt.s32.totalorder %v1338, 15
      %v1387 = vsel %vm1386, %v1338, 15
      %vm1388 = vcmp.lt.s32.totalorder %v1339, 15
      %v1389 = vsel %vm1388, %v1339, 15
      %vm1390 = vcmp.lt.s32.totalorder %v1340, 15
      %v1391 = vsel %vm1390, %v1340, 15
      %vm1392 = vcmp.lt.s32.totalorder %v1341, 15
      %v1393 = vsel %vm1392, %v1341, 15
      %vm1394 = vcmp.lt.s32.totalorder %v1342, 15
      %v1395 = vsel %vm1394, %v1342, 15
      %vm1396 = vcmp.lt.s32.totalorder %v1343, 15
      %v1397 = vsel %vm1396, %v1343, 15
      %vm1398 = vcmp.lt.s32.totalorder %v1344, 15
      %v1399 = vsel %vm1398, %v1344, 15
      %vm1400 = vcmp.lt.s32.totalorder %v1345, 15
      %v1401 = vsel %vm1400, %v1345, 15
      %vm1402 = vcmp.lt.s32.totalorder %v1346, 15
      %v1403 = vsel %vm1402, %v1346, 15
      %vm1404 = vcmp.lt.s32.totalorder %v1347, 15
      %v1405 = vsel %vm1404, %v1347, 15
      %vm1406 = vcmp.lt.s32.totalorder %v1348, 15
      %v1407 = vsel %vm1406, %v1348, 15
      %vm1408 = vcmp.lt.s32.totalorder %v1349, 15
      %v1409 = vsel %vm1408, %v1349, 15
      %vm1410 = vcmp.lt.s32.totalorder %v1350, 15
      %v1411 = vsel %vm1410, %v1350, 15
      %vm1412 = vcmp.lt.s32.totalorder %v1351, 15
      %v1413 = vsel %vm1412, %v1351, 15
      %vm1414 = vcmp.lt.s32.totalorder %v1352, 15
      %v1415 = vsel %vm1414, %v1352, 15
      %vm1416 = vcmp.lt.s32.totalorder %v1353, 15
      %v1417 = vsel %vm1416, %v1353, 15
      %v1418 = vld [vmem:[%s458] sm:$0xff]
      %v1419 = vld [vmem:[%s458 + $0x8] sm:$0xff]
      %v1420 = vld [vmem:[%s458 + $0x10] sm:$0xff]
      %v1421 = vld [vmem:[%s458 + $0x18] sm:$0xff]
      %v1422 = vld [vmem:[%s458 + $0x20] sm:$0xff]
      %v1423 = vld [vmem:[%s458 + $0x28] sm:$0xff]
      %v1424 = vld [vmem:[%s458 + $0x30] sm:$0xff]
      %v1425 = vld [vmem:[%s458 + $0x38] sm:$0xff]
      %v1426 = vld [vmem:[%s458 + $0x40] sm:$0xff]
      %v1427 = vld [vmem:[%s458 + $0x48] sm:$0xff]
      %v1428 = vld [vmem:[%s458 + $0x50] sm:$0xff]
      %v1429 = vld [vmem:[%s458 + $0x58] sm:$0xff]
      %v1430 = vld [vmem:[%s458 + $0x60] sm:$0xff]
      %v1431 = vld [vmem:[%s458 + $0x68] sm:$0xff]
      %v1432 = vld [vmem:[%s458 + $0x70] sm:$0xff]
      %v1433 = vld [vmem:[%s458 + $0x78] sm:$0xff]
      %v1434 = vld [vmem:[%s458 + $0x80] sm:$0xff]
      %v1435 = vld [vmem:[%s458 + $0x88] sm:$0xff]
      %v1436 = vld [vmem:[%s458 + $0x90] sm:$0xff]
      %v1437 = vld [vmem:[%s458 + $0x98] sm:$0xff]
      %v1438 = vld [vmem:[%s458 + $0xa0] sm:$0xff]
      %v1439 = vld [vmem:[%s458 + $0xa8] sm:$0xff]
      %v1440 = vld [vmem:[%s458 + $0xb0] sm:$0xff]
      %v1441 = vld [vmem:[%s458 + $0xb8] sm:$0xff]
      %v1442 = vld [vmem:[%s458 + $0xc0] sm:$0xff]
      %v1443 = vld [vmem:[%s458 + $0xc8] sm:$0xff]
      %v1444 = vld [vmem:[%s458 + $0xd0] sm:$0xff]
      %v1445 = vld [vmem:[%s458 + $0xd8] sm:$0xff]
      %v1446 = vld [vmem:[%s458 + $0xe0] sm:$0xff]
      %v1447 = vld [vmem:[%s458 + $0xe8] sm:$0xff]
      %v1448 = vld [vmem:[%s458 + $0xf0] sm:$0xff]
      %v1449 = vld [vmem:[%s458 + $0xf8] sm:$0xff]
      %v1450 = vmul.f32 %v1418, %v1162
      %v1451 = vmul.f32 %v1419, %v1163
      %v1452 = vmul.f32 %v1420, %v1164
      %v1453 = vmul.f32 %v1421, %v1165
      %v1454 = vmul.f32 %v1422, %v1166
      %v1455 = vmul.f32 %v1423, %v1167
      %v1456 = vmul.f32 %v1424, %v1168
      %v1457 = vmul.f32 %v1425, %v1169
      %v1458 = vmul.f32 %v1426, %v1170
      %v1459 = vmul.f32 %v1427, %v1171
      %v1460 = vmul.f32 %v1428, %v1172
      %v1461 = vmul.f32 %v1429, %v1173
      %v1462 = vmul.f32 %v1430, %v1174
      %v1463 = vmul.f32 %v1431, %v1175
      %v1464 = vmul.f32 %v1432, %v1176
      %v1465 = vmul.f32 %v1433, %v1177
      %v1466 = vmul.f32 %v1434, %v1178
      %v1467 = vmul.f32 %v1435, %v1179
      %v1468 = vmul.f32 %v1436, %v1180
      %v1469 = vmul.f32 %v1437, %v1181
      %v1470 = vmul.f32 %v1438, %v1182
      %v1471 = vmul.f32 %v1439, %v1183
      %v1472 = vmul.f32 %v1440, %v1184
      %v1473 = vmul.f32 %v1441, %v1185
      %v1474 = vmul.f32 %v1442, %v1186
      %v1475 = vmul.f32 %v1443, %v1187
      %v1476 = vmul.f32 %v1444, %v1188
      %v1477 = vmul.f32 %v1445, %v1189
      %v1478 = vmul.f32 %v1446, %v1190
      %v1479 = vmul.f32 %v1447, %v1191
      %v1480 = vmul.f32 %v1448, %v1192
      %v1481 = vmul.f32 %v1449, %v1193
      %v1482 = vsub.f32 %v1162, %v1450
      %v1483 = vsub.f32 %v1163, %v1451
      %v1484 = vsub.f32 %v1164, %v1452
      %v1485 = vsub.f32 %v1165, %v1453
      %v1486 = vsub.f32 %v1166, %v1454
      %v1487 = vsub.f32 %v1167, %v1455
      %v1488 = vsub.f32 %v1168, %v1456
      %v1489 = vsub.f32 %v1169, %v1457
      %v1490 = vsub.f32 %v1170, %v1458
      %v1491 = vsub.f32 %v1171, %v1459
      %v1492 = vsub.f32 %v1172, %v1460
      %v1493 = vsub.f32 %v1173, %v1461
      %v1494 = vsub.f32 %v1174, %v1462
      %v1495 = vsub.f32 %v1175, %v1463
      %v1496 = vsub.f32 %v1176, %v1464
      %v1497 = vsub.f32 %v1177, %v1465
      %v1498 = vsub.f32 %v1178, %v1466
      %v1499 = vsub.f32 %v1179, %v1467
      %v1500 = vsub.f32 %v1180, %v1468
      %v1501 = vsub.f32 %v1181, %v1469
      %v1502 = vsub.f32 %v1182, %v1470
      %v1503 = vsub.f32 %v1183, %v1471
      %v1504 = vsub.f32 %v1184, %v1472
      %v1505 = vsub.f32 %v1185, %v1473
      %v1506 = vsub.f32 %v1186, %v1474
      %v1507 = vsub.f32 %v1187, %v1475
      %v1508 = vsub.f32 %v1188, %v1476
      %v1509 = vsub.f32 %v1189, %v1477
      %v1510 = vsub.f32 %v1190, %v1478
      %v1511 = vsub.f32 %v1191, %v1479
      %v1512 = vsub.f32 %v1192, %v1480
      %v1513 = vsub.f32 %v1193, %v1481
      %1514 = vset.pattern.permute.xlu0 0
      %1515 = vperm.xlu0 %1514, %v1259
      %v1516 = vpop.permute.xlu0 %1515
      %1517 = vset.pattern.permute.xlu0 0
      %1518 = vperm.xlu0 %1517, %v1261
      %v1519 = vpop.permute.xlu0 %1518
      %1520 = vset.pattern.permute.xlu0 0
      %1521 = vperm.xlu0 %1520, %v1263
      %v1522 = vpop.permute.xlu0 %1521
      %1523 = vset.pattern.permute.xlu0 0
      %1524 = vperm.xlu0 %1523, %v1265
      %v1525 = vpop.permute.xlu0 %1524
      %1526 = vset.pattern.permute.xlu0 0
      %1527 = vperm.xlu0 %1526, %v1267
      %v1528 = vpop.permute.xlu0 %1527
      %1529 = vset.pattern.permute.xlu0 0
      %1530 = vperm.xlu0 %1529, %v1269
      %v1531 = vpop.permute.xlu0 %1530
      %1532 = vset.pattern.permute.xlu0 0
      %1533 = vperm.xlu0 %1532, %v1271
      %v1534 = vpop.permute.xlu0 %1533
      %1535 = vset.pattern.permute.xlu0 0
      %1536 = vperm.xlu0 %1535, %v1273
      %v1537 = vpop.permute.xlu0 %1536
      %1538 = vset.pattern.permute.xlu0 0
      %1539 = vperm.xlu0 %1538, %v1275
      %v1540 = vpop.permute.xlu0 %1539
      %1541 = vset.pattern.permute.xlu0 0
      %1542 = vperm.xlu0 %1541, %v1277
      %v1543 = vpop.permute.xlu0 %1542
      %1544 = vset.pattern.permute.xlu0 0
      %1545 = vperm.xlu0 %1544, %v1279
      %v1546 = vpop.permute.xlu0 %1545
      %1547 = vset.pattern.permute.xlu0 0
      %1548 = vperm.xlu0 %1547, %v1281
      %v1549 = vpop.permute.xlu0 %1548
      %1550 = vset.pattern.permute.xlu0 0
      %1551 = vperm.xlu0 %1550, %v1283
      %v1552 = vpop.permute.xlu0 %1551
      %1553 = vset.pattern.permute.xlu0 0
      %1554 = vperm.xlu0 %1553, %v1285
      %v1555 = vpop.permute.xlu0 %1554
      %1556 = vset.pattern.permute.xlu0 0
      %1557 = vperm.xlu0 %1556, %v1287
      %v1558 = vpop.permute.xlu0 %1557
      %1559 = vset.pattern.permute.xlu0 0
      %1560 = vperm.xlu0 %1559, %v1289
      %v1561 = vpop.permute.xlu0 %1560
      %1562 = vset.pattern.permute.xlu0 0
      %1563 = vperm.xlu0 %1562, %v1291
      %v1564 = vpop.permute.xlu0 %1563
      %1565 = vset.pattern.permute.xlu0 0
      %1566 = vperm.xlu0 %1565, %v1293
      %v1567 = vpop.permute.xlu0 %1566
      %1568 = vset.pattern.permute.xlu0 0
      %1569 = vperm.xlu0 %1568, %v1295
      %v1570 = vpop.permute.xlu0 %1569
      %1571 = vset.pattern.permute.xlu0 0
      %1572 = vperm.xlu0 %1571, %v1297
      %v1573 = vpop.permute.xlu0 %1572
      %1574 = vset.pattern.permute.xlu0 0
      %1575 = vperm.xlu0 %1574, %v1299
      %v1576 = vpop.permute.xlu0 %1575
      %1577 = vset.pattern.permute.xlu0 0
      %1578 = vperm.xlu0 %1577, %v1301
      %v1579 = vpop.permute.xlu0 %1578
      %1580 = vset.pattern.permute.xlu0 0
      %1581 = vperm.xlu0 %1580, %v1303
      %v1582 = vpop.permute.xlu0 %1581
      %1583 = vset.pattern.permute.xlu0 0
      %1584 = vperm.xlu0 %1583, %v1305
      %v1585 = vpop.permute.xlu0 %1584
      %1586 = vset.pattern.permute.xlu0 0
      %1587 = vperm.xlu0 %1586, %v1307
      %v1588 = vpop.permute.xlu0 %1587
      %1589 = vset.pattern.permute.xlu0 0
      %1590 = vperm.xlu0 %1589, %v1309
      %v1591 = vpop.permute.xlu0 %1590
      %1592 = vset.pattern.permute.xlu0 0
      %1593 = vperm.xlu0 %1592, %v1311
      %v1594 = vpop.permute.xlu0 %1593
      %1595 = vset.pattern.permute.xlu0 0
      %1596 = vperm.xlu0 %1595, %v1313
      %v1597 = vpop.permute.xlu0 %1596
      %1598 = vset.pattern.permute.xlu0 0
      %1599 = vperm.xlu0 %1598, %v1315
      %v1600 = vpop.permute.xlu0 %1599
      %1601 = vset.pattern.permute.xlu0 0
      %1602 = vperm.xlu0 %1601, %v1317
      %v1603 = vpop.permute.xlu0 %1602
      %1604 = vset.pattern.permute.xlu0 0
      %1605 = vperm.xlu0 %1604, %v1319
      %v1606 = vpop.permute.xlu0 %1605
      %1607 = vset.pattern.permute.xlu0 0
      %1608 = vperm.xlu0 %1607, %v1321
      %v1609 = vpop.permute.xlu0 %1608
      %vm1610 = vcmp.eq.s32.totalorder %v1065, %v1516
      %vm1611 = vcmp.eq.s32.totalorder %v1065, %v1519
      %vm1612 = vcmp.eq.s32.totalorder %v1065, %v1522
      %vm1613 = vcmp.eq.s32.totalorder %v1065, %v1525
      %vm1614 = vcmp.eq.s32.totalorder %v1065, %v1528
      %vm1615 = vcmp.eq.s32.totalorder %v1065, %v1531
      %vm1616 = vcmp.eq.s32.totalorder %v1065, %v1534
      %vm1617 = vcmp.eq.s32.totalorder %v1065, %v1537
      %vm1618 = vcmp.eq.s32.totalorder %v1065, %v1540
      %vm1619 = vcmp.eq.s32.totalorder %v1065, %v1543
      %vm1620 = vcmp.eq.s32.totalorder %v1065, %v1546
      %vm1621 = vcmp.eq.s32.totalorder %v1065, %v1549
      %vm1622 = vcmp.eq.s32.totalorder %v1065, %v1552
      %vm1623 = vcmp.eq.s32.totalorder %v1065, %v1555
      %vm1624 = vcmp.eq.s32.totalorder %v1065, %v1558
      %vm1625 = vcmp.eq.s32.totalorder %v1065, %v1561
      %vm1626 = vcmp.eq.s32.totalorder %v1065, %v1564
      %vm1627 = vcmp.eq.s32.totalorder %v1065, %v1567
      %vm1628 = vcmp.eq.s32.totalorder %v1065, %v1570
      %vm1629 = vcmp.eq.s32.totalorder %v1065, %v1573
      %vm1630 = vcmp.eq.s32.totalorder %v1065, %v1576
      %vm1631 = vcmp.eq.s32.totalorder %v1065, %v1579
      %vm1632 = vcmp.eq.s32.totalorder %v1065, %v1582
      %vm1633 = vcmp.eq.s32.totalorder %v1065, %v1585
      %vm1634 = vcmp.eq.s32.totalorder %v1065, %v1588
      %vm1635 = vcmp.eq.s32.totalorder %v1065, %v1591
      %vm1636 = vcmp.eq.s32.totalorder %v1065, %v1594
      %vm1637 = vcmp.eq.s32.totalorder %v1065, %v1597
      %vm1638 = vcmp.eq.s32.totalorder %v1065, %v1600
      %vm1639 = vcmp.eq.s32.totalorder %v1065, %v1603
      %vm1640 = vcmp.eq.s32.totalorder %v1065, %v1606
      %vm1641 = vcmp.eq.s32.totalorder %v1065, %v1609
      %1643 = vset.pattern.permute.xlu0 0
      %1644 = vperm.xlu0 %1643, %v1482
      %v1645 = vpop.permute.xlu0 %1644
      %1648 = vset.pattern.permute.xlu0 0
      %1649 = vperm.xlu0 %1648, %v1483
      %v1650 = vpop.permute.xlu0 %1649
      %1653 = vset.pattern.permute.xlu0 0
      %1654 = vperm.xlu0 %1653, %v1484
      %v1655 = vpop.permute.xlu0 %1654
      %1658 = vset.pattern.permute.xlu0 0
      %1659 = vperm.xlu0 %1658, %v1485
      %v1660 = vpop.permute.xlu0 %1659
      %1663 = vset.pattern.permute.xlu0 0
      %1664 = vperm.xlu0 %1663, %v1486
      %v1665 = vpop.permute.xlu0 %1664
      %1668 = vset.pattern.permute.xlu0 0
      %1669 = vperm.xlu0 %1668, %v1487
      %v1670 = vpop.permute.xlu0 %1669
      %1673 = vset.pattern.permute.xlu0 0
      %1674 = vperm.xlu0 %1673, %v1488
      %v1675 = vpop.permute.xlu0 %1674
      %1678 = vset.pattern.permute.xlu0 0
      %1679 = vperm.xlu0 %1678, %v1489
      %v1680 = vpop.permute.xlu0 %1679
      %1683 = vset.pattern.permute.xlu0 0
      %1684 = vperm.xlu0 %1683, %v1490
      %v1685 = vpop.permute.xlu0 %1684
      %1688 = vset.pattern.permute.xlu0 0
      %1689 = vperm.xlu0 %1688, %v1491
      %v1690 = vpop.permute.xlu0 %1689
      %1693 = vset.pattern.permute.xlu0 0
      %1694 = vperm.xlu0 %1693, %v1492
      %v1695 = vpop.permute.xlu0 %1694
      %1698 = vset.pattern.permute.xlu0 0
      %1699 = vperm.xlu0 %1698, %v1493
      %v1700 = vpop.permute.xlu0 %1699
      %1703 = vset.pattern.permute.xlu0 0
      %1704 = vperm.xlu0 %1703, %v1494
      %v1705 = vpop.permute.xlu0 %1704
      %1708 = vset.pattern.permute.xlu0 0
      %1709 = vperm.xlu0 %1708, %v1495
      %v1710 = vpop.permute.xlu0 %1709
      %1713 = vset.pattern.permute.xlu0 0
      %1714 = vperm.xlu0 %1713, %v1496
      %v1715 = vpop.permute.xlu0 %1714
      %1718 = vset.pattern.permute.xlu0 0
      %1719 = vperm.xlu0 %1718, %v1497
      %v1720 = vpop.permute.xlu0 %1719
      %1723 = vset.pattern.permute.xlu0 0
      %1724 = vperm.xlu0 %1723, %v1498
      %v1725 = vpop.permute.xlu0 %1724
      %1728 = vset.pattern.permute.xlu0 0
      %1729 = vperm.xlu0 %1728, %v1499
      %v1730 = vpop.permute.xlu0 %1729
      %1733 = vset.pattern.permute.xlu0 0
      %1734 = vperm.xlu0 %1733, %v1500
      %v1735 = vpop.permute.xlu0 %1734
      %1738 = vset.pattern.permute.xlu0 0
      %1739 = vperm.xlu0 %1738, %v1501
      %v1740 = vpop.permute.xlu0 %1739
      %1743 = vset.pattern.permute.xlu0 0
      %1744 = vperm.xlu0 %1743, %v1502
      %v1745 = vpop.permute.xlu0 %1744
      %1748 = vset.pattern.permute.xlu0 0
      %1749 = vperm.xlu0 %1748, %v1503
      %v1750 = vpop.permute.xlu0 %1749
      %1753 = vset.pattern.permute.xlu0 0
      %1754 = vperm.xlu0 %1753, %v1504
      %v1755 = vpop.permute.xlu0 %1754
      %1758 = vset.pattern.permute.xlu0 0
      %1759 = vperm.xlu0 %1758, %v1505
      %v1760 = vpop.permute.xlu0 %1759
      %1763 = vset.pattern.permute.xlu0 0
      %1764 = vperm.xlu0 %1763, %v1506
      %v1765 = vpop.permute.xlu0 %1764
      %1768 = vset.pattern.permute.xlu0 0
      %1769 = vperm.xlu0 %1768, %v1507
      %v1770 = vpop.permute.xlu0 %1769
      %1773 = vset.pattern.permute.xlu0 0
      %1774 = vperm.xlu0 %1773, %v1508
      %v1775 = vpop.permute.xlu0 %1774
      %1778 = vset.pattern.permute.xlu0 0
      %1779 = vperm.xlu0 %1778, %v1509
      %v1780 = vpop.permute.xlu0 %1779
      %1783 = vset.pattern.permute.xlu0 0
      %1784 = vperm.xlu0 %1783, %v1510
      %v1785 = vpop.permute.xlu0 %1784
      %1788 = vset.pattern.permute.xlu0 0
      %1789 = vperm.xlu0 %1788, %v1511
      %v1790 = vpop.permute.xlu0 %1789
      %1793 = vset.pattern.permute.xlu0 0
      %1794 = vperm.xlu0 %1793, %v1512
      %v1795 = vpop.permute.xlu0 %1794
      %1798 = vset.pattern.permute.xlu0 0
      %1799 = vperm.xlu0 %1798, %v1513
      %v1800 = vpop.permute.xlu0 %1799
      %v1802 = vsel %vm1610, %v1645, 0.0
      %v1803 = vsel %vm1611, %v1650, 0.0
      %v1804 = vsel %vm1612, %v1655, 0.0
      %v1805 = vsel %vm1613, %v1660, 0.0
      %v1806 = vsel %vm1614, %v1665, 0.0
      %v1807 = vsel %vm1615, %v1670, 0.0
      %v1808 = vsel %vm1616, %v1675, 0.0
      %v1809 = vsel %vm1617, %v1680, 0.0
      %v1810 = vsel %vm1618, %v1685, 0.0
      %v1811 = vsel %vm1619, %v1690, 0.0
      %v1812 = vsel %vm1620, %v1695, 0.0
      %v1813 = vsel %vm1621, %v1700, 0.0
      %v1814 = vsel %vm1622, %v1705, 0.0
      %v1815 = vsel %vm1623, %v1710, 0.0
      %v1816 = vsel %vm1624, %v1715, 0.0
      %v1817 = vsel %vm1625, %v1720, 0.0
      %v1818 = vsel %vm1626, %v1725, 0.0
      %v1819 = vsel %vm1627, %v1730, 0.0
      %v1820 = vsel %vm1628, %v1735, 0.0
      %v1821 = vsel %vm1629, %v1740, 0.0
      %v1822 = vsel %vm1630, %v1745, 0.0
      %v1823 = vsel %vm1631, %v1750, 0.0
      %v1824 = vsel %vm1632, %v1755, 0.0
      %v1825 = vsel %vm1633, %v1760, 0.0
      %v1826 = vsel %vm1634, %v1765, 0.0
      %v1827 = vsel %vm1635, %v1770, 0.0
      %v1828 = vsel %vm1636, %v1775, 0.0
      %v1829 = vsel %vm1637, %v1780, 0.0
      %v1830 = vsel %vm1638, %v1785, 0.0
      %v1831 = vsel %vm1639, %v1790, 0.0
      %v1832 = vsel %vm1640, %v1795, 0.0
      %v1833 = vsel %vm1641, %v1800, 0.0
      %1834 = vset.pattern.permute.xlu0 0
      %1835 = vperm.xlu0 %1834, %v1355
      %v1836 = vpop.permute.xlu0 %1835
      %1837 = vset.pattern.permute.xlu0 0
      %1838 = vperm.xlu0 %1837, %v1357
      %v1839 = vpop.permute.xlu0 %1838
      %1840 = vset.pattern.permute.xlu0 0
      %1841 = vperm.xlu0 %1840, %v1359
      %v1842 = vpop.permute.xlu0 %1841
      %1843 = vset.pattern.permute.xlu0 0
      %1844 = vperm.xlu0 %1843, %v1361
      %v1845 = vpop.permute.xlu0 %1844
      %1846 = vset.pattern.permute.xlu0 0
      %1847 = vperm.xlu0 %1846, %v1363
      %v1848 = vpop.permute.xlu0 %1847
      %1849 = vset.pattern.permute.xlu0 0
      %1850 = vperm.xlu0 %1849, %v1365
      %v1851 = vpop.permute.xlu0 %1850
      %1852 = vset.pattern.permute.xlu0 0
      %1853 = vperm.xlu0 %1852, %v1367
      %v1854 = vpop.permute.xlu0 %1853
      %1855 = vset.pattern.permute.xlu0 0
      %1856 = vperm.xlu0 %1855, %v1369
      %v1857 = vpop.permute.xlu0 %1856
      %1858 = vset.pattern.permute.xlu0 0
      %1859 = vperm.xlu0 %1858, %v1371
      %v1860 = vpop.permute.xlu0 %1859
      %1861 = vset.pattern.permute.xlu0 0
      %1862 = vperm.xlu0 %1861, %v1373
      %v1863 = vpop.permute.xlu0 %1862
      %1864 = vset.pattern.permute.xlu0 0
      %1865 = vperm.xlu0 %1864, %v1375
      %v1866 = vpop.permute.xlu0 %1865
      %1867 = vset.pattern.permute.xlu0 0
      %1868 = vperm.xlu0 %1867, %v1377
      %v1869 = vpop.permute.xlu0 %1868
      %1870 = vset.pattern.permute.xlu0 0
      %1871 = vperm.xlu0 %1870, %v1379
      %v1872 = vpop.permute.xlu0 %1871
      %1873 = vset.pattern.permute.xlu0 0
      %1874 = vperm.xlu0 %1873, %v1381
      %v1875 = vpop.permute.xlu0 %1874
      %1876 = vset.pattern.permute.xlu0 0
      %1877 = vperm.xlu0 %1876, %v1383
      %v1878 = vpop.permute.xlu0 %1877
      %1879 = vset.pattern.permute.xlu0 0
      %1880 = vperm.xlu0 %1879, %v1385
      %v1881 = vpop.permute.xlu0 %1880
      %1882 = vset.pattern.permute.xlu0 0
      %1883 = vperm.xlu0 %1882, %v1387
      %v1884 = vpop.permute.xlu0 %1883
      %1885 = vset.pattern.permute.xlu0 0
      %1886 = vperm.xlu0 %1885, %v1389
      %v1887 = vpop.permute.xlu0 %1886
      %1888 = vset.pattern.permute.xlu0 0
      %1889 = vperm.xlu0 %1888, %v1391
      %v1890 = vpop.permute.xlu0 %1889
      %1891 = vset.pattern.permute.xlu0 0
      %1892 = vperm.xlu0 %1891, %v1393
      %v1893 = vpop.permute.xlu0 %1892
      %1894 = vset.pattern.permute.xlu0 0
      %1895 = vperm.xlu0 %1894, %v1395
      %v1896 = vpop.permute.xlu0 %1895
      %1897 = vset.pattern.permute.xlu0 0
      %1898 = vperm.xlu0 %1897, %v1397
      %v1899 = vpop.permute.xlu0 %1898
      %1900 = vset.pattern.permute.xlu0 0
      %1901 = vperm.xlu0 %1900, %v1399
      %v1902 = vpop.permute.xlu0 %1901
      %1903 = vset.pattern.permute.xlu0 0
      %1904 = vperm.xlu0 %1903, %v1401
      %v1905 = vpop.permute.xlu0 %1904
      %1906 = vset.pattern.permute.xlu0 0
      %1907 = vperm.xlu0 %1906, %v1403
      %v1908 = vpop.permute.xlu0 %1907
      %1909 = vset.pattern.permute.xlu0 0
      %1910 = vperm.xlu0 %1909, %v1405
      %v1911 = vpop.permute.xlu0 %1910
      %1912 = vset.pattern.permute.xlu0 0
      %1913 = vperm.xlu0 %1912, %v1407
      %v1914 = vpop.permute.xlu0 %1913
      %1915 = vset.pattern.permute.xlu0 0
      %1916 = vperm.xlu0 %1915, %v1409
      %v1917 = vpop.permute.xlu0 %1916
      %1918 = vset.pattern.permute.xlu0 0
      %1919 = vperm.xlu0 %1918, %v1411
      %v1920 = vpop.permute.xlu0 %1919
      %1921 = vset.pattern.permute.xlu0 0
      %1922 = vperm.xlu0 %1921, %v1413
      %v1923 = vpop.permute.xlu0 %1922
      %1924 = vset.pattern.permute.xlu0 0
      %1925 = vperm.xlu0 %1924, %v1415
      %v1926 = vpop.permute.xlu0 %1925
      %1927 = vset.pattern.permute.xlu0 0
      %1928 = vperm.xlu0 %1927, %v1417
      %v1929 = vpop.permute.xlu0 %1928
      %vm1930 = vcmp.eq.s32.totalorder %v1065, %v1836
      %vm1931 = vcmp.eq.s32.totalorder %v1065, %v1839
      %vm1932 = vcmp.eq.s32.totalorder %v1065, %v1842
      %vm1933 = vcmp.eq.s32.totalorder %v1065, %v1845
      %vm1934 = vcmp.eq.s32.totalorder %v1065, %v1848
      %vm1935 = vcmp.eq.s32.totalorder %v1065, %v1851
      %vm1936 = vcmp.eq.s32.totalorder %v1065, %v1854
      %vm1937 = vcmp.eq.s32.totalorder %v1065, %v1857
      %vm1938 = vcmp.eq.s32.totalorder %v1065, %v1860
      %vm1939 = vcmp.eq.s32.totalorder %v1065, %v1863
      %vm1940 = vcmp.eq.s32.totalorder %v1065, %v1866
      %vm1941 = vcmp.eq.s32.totalorder %v1065, %v1869
      %vm1942 = vcmp.eq.s32.totalorder %v1065, %v1872
      %vm1943 = vcmp.eq.s32.totalorder %v1065, %v1875
      %vm1944 = vcmp.eq.s32.totalorder %v1065, %v1878
      %vm1945 = vcmp.eq.s32.totalorder %v1065, %v1881
      %vm1946 = vcmp.eq.s32.totalorder %v1065, %v1884
      %vm1947 = vcmp.eq.s32.totalorder %v1065, %v1887
      %vm1948 = vcmp.eq.s32.totalorder %v1065, %v1890
      %vm1949 = vcmp.eq.s32.totalorder %v1065, %v1893
      %vm1950 = vcmp.eq.s32.totalorder %v1065, %v1896
      %vm1951 = vcmp.eq.s32.totalorder %v1065, %v1899
      %vm1952 = vcmp.eq.s32.totalorder %v1065, %v1902
      %vm1953 = vcmp.eq.s32.totalorder %v1065, %v1905
      %vm1954 = vcmp.eq.s32.totalorder %v1065, %v1908
      %vm1955 = vcmp.eq.s32.totalorder %v1065, %v1911
      %vm1956 = vcmp.eq.s32.totalorder %v1065, %v1914
      %vm1957 = vcmp.eq.s32.totalorder %v1065, %v1917
      %vm1958 = vcmp.eq.s32.totalorder %v1065, %v1920
      %vm1959 = vcmp.eq.s32.totalorder %v1065, %v1923
      %vm1960 = vcmp.eq.s32.totalorder %v1065, %v1926
      %vm1961 = vcmp.eq.s32.totalorder %v1065, %v1929
      %1963 = vset.pattern.permute.xlu0 0
      %1964 = vperm.xlu0 %1963, %v1450
      %v1965 = vpop.permute.xlu0 %1964
      %1968 = vset.pattern.permute.xlu0 0
      %1969 = vperm.xlu0 %1968, %v1451
      %v1970 = vpop.permute.xlu0 %1969
      %1973 = vset.pattern.permute.xlu0 0
      %1974 = vperm.xlu0 %1973, %v1452
      %v1975 = vpop.permute.xlu0 %1974
      %1978 = vset.pattern.permute.xlu0 0
      %1979 = vperm.xlu0 %1978, %v1453
      %v1980 = vpop.permute.xlu0 %1979
      %1983 = vset.pattern.permute.xlu0 0
      %1984 = vperm.xlu0 %1983, %v1454
      %v1985 = vpop.permute.xlu0 %1984
      %1988 = vset.pattern.permute.xlu0 0
      %1989 = vperm.xlu0 %1988, %v1455
      %v1990 = vpop.permute.xlu0 %1989
      %1993 = vset.pattern.permute.xlu0 0
      %1994 = vperm.xlu0 %1993, %v1456
      %v1995 = vpop.permute.xlu0 %1994
      %1998 = vset.pattern.permute.xlu0 0
      %1999 = vperm.xlu0 %1998, %v1457
      %v2000 = vpop.permute.xlu0 %1999
      %2003 = vset.pattern.permute.xlu0 0
      %2004 = vperm.xlu0 %2003, %v1458
      %v2005 = vpop.permute.xlu0 %2004
      %2008 = vset.pattern.permute.xlu0 0
      %2009 = vperm.xlu0 %2008, %v1459
      %v2010 = vpop.permute.xlu0 %2009
      %2013 = vset.pattern.permute.xlu0 0
      %2014 = vperm.xlu0 %2013, %v1460
      %v2015 = vpop.permute.xlu0 %2014
      %2018 = vset.pattern.permute.xlu0 0
      %2019 = vperm.xlu0 %2018, %v1461
      %v2020 = vpop.permute.xlu0 %2019
      %2023 = vset.pattern.permute.xlu0 0
      %2024 = vperm.xlu0 %2023, %v1462
      %v2025 = vpop.permute.xlu0 %2024
      %2028 = vset.pattern.permute.xlu0 0
      %2029 = vperm.xlu0 %2028, %v1463
      %v2030 = vpop.permute.xlu0 %2029
      %2033 = vset.pattern.permute.xlu0 0
      %2034 = vperm.xlu0 %2033, %v1464
      %v2035 = vpop.permute.xlu0 %2034
      %2038 = vset.pattern.permute.xlu0 0
      %2039 = vperm.xlu0 %2038, %v1465
      %v2040 = vpop.permute.xlu0 %2039
      %2043 = vset.pattern.permute.xlu0 0
      %2044 = vperm.xlu0 %2043, %v1466
      %v2045 = vpop.permute.xlu0 %2044
      %2048 = vset.pattern.permute.xlu0 0
      %2049 = vperm.xlu0 %2048, %v1467
      %v2050 = vpop.permute.xlu0 %2049
      %2053 = vset.pattern.permute.xlu0 0
      %2054 = vperm.xlu0 %2053, %v1468
      %v2055 = vpop.permute.xlu0 %2054
      %2058 = vset.pattern.permute.xlu0 0
      %2059 = vperm.xlu0 %2058, %v1469
      %v2060 = vpop.permute.xlu0 %2059
      %2063 = vset.pattern.permute.xlu0 0
      %2064 = vperm.xlu0 %2063, %v1470
      %v2065 = vpop.permute.xlu0 %2064
      %2068 = vset.pattern.permute.xlu0 0
      %2069 = vperm.xlu0 %2068, %v1471
      %v2070 = vpop.permute.xlu0 %2069
      %2073 = vset.pattern.permute.xlu0 0
      %2074 = vperm.xlu0 %2073, %v1472
      %v2075 = vpop.permute.xlu0 %2074
      %2078 = vset.pattern.permute.xlu0 0
      %2079 = vperm.xlu0 %2078, %v1473
      %v2080 = vpop.permute.xlu0 %2079
      %2083 = vset.pattern.permute.xlu0 0
      %2084 = vperm.xlu0 %2083, %v1474
      %v2085 = vpop.permute.xlu0 %2084
      %2088 = vset.pattern.permute.xlu0 0
      %2089 = vperm.xlu0 %2088, %v1475
      %v2090 = vpop.permute.xlu0 %2089
      %2093 = vset.pattern.permute.xlu0 0
      %2094 = vperm.xlu0 %2093, %v1476
      %v2095 = vpop.permute.xlu0 %2094
      %2098 = vset.pattern.permute.xlu0 0
      %2099 = vperm.xlu0 %2098, %v1477
      %v2100 = vpop.permute.xlu0 %2099
      %2103 = vset.pattern.permute.xlu0 0
      %2104 = vperm.xlu0 %2103, %v1478
      %v2105 = vpop.permute.xlu0 %2104
      %2108 = vset.pattern.permute.xlu0 0
      %2109 = vperm.xlu0 %2108, %v1479
      %v2110 = vpop.permute.xlu0 %2109
      %2113 = vset.pattern.permute.xlu0 0
      %2114 = vperm.xlu0 %2113, %v1480
      %v2115 = vpop.permute.xlu0 %2114
      %2118 = vset.pattern.permute.xlu0 0
      %2119 = vperm.xlu0 %2118, %v1481
      %v2120 = vpop.permute.xlu0 %2119
      %v2122 = vsel %vm1930, %v1965, 0.0
      %v2123 = vsel %vm1931, %v1970, 0.0
      %v2124 = vsel %vm1932, %v1975, 0.0
      %v2125 = vsel %vm1933, %v1980, 0.0
      %v2126 = vsel %vm1934, %v1985, 0.0
      %v2127 = vsel %vm1935, %v1990, 0.0
      %v2128 = vsel %vm1936, %v1995, 0.0
      %v2129 = vsel %vm1937, %v2000, 0.0
      %v2130 = vsel %vm1938, %v2005, 0.0
      %v2131 = vsel %vm1939, %v2010, 0.0
      %v2132 = vsel %vm1940, %v2015, 0.0
      %v2133 = vsel %vm1941, %v2020, 0.0
      %v2134 = vsel %vm1942, %v2025, 0.0
      %v2135 = vsel %vm1943, %v2030, 0.0
      %v2136 = vsel %vm1944, %v2035, 0.0
      %v2137 = vsel %vm1945, %v2040, 0.0
      %v2138 = vsel %vm1946, %v2045, 0.0
      %v2139 = vsel %vm1947, %v2050, 0.0
      %v2140 = vsel %vm1948, %v2055, 0.0
      %v2141 = vsel %vm1949, %v2060, 0.0
      %v2142 = vsel %vm1950, %v2065, 0.0
      %v2143 = vsel %vm1951, %v2070, 0.0
      %v2144 = vsel %vm1952, %v2075, 0.0
      %v2145 = vsel %vm1953, %v2080, 0.0
      %v2146 = vsel %vm1954, %v2085, 0.0
      %v2147 = vsel %vm1955, %v2090, 0.0
      %v2148 = vsel %vm1956, %v2095, 0.0
      %v2149 = vsel %vm1957, %v2100, 0.0
      %v2150 = vsel %vm1958, %v2105, 0.0
      %v2151 = vsel %vm1959, %v2110, 0.0
      %v2152 = vsel %vm1960, %v2115, 0.0
      %v2153 = vsel %vm1961, %v2120, 0.0
      %v2154 = vadd.f32 %v1802, %v2122
      %v2155 = vadd.f32 %v1803, %v2123
      %v2156 = vadd.f32 %v1804, %v2124
      %v2157 = vadd.f32 %v1805, %v2125
      %v2158 = vadd.f32 %v1806, %v2126
      %v2159 = vadd.f32 %v1807, %v2127
      %v2160 = vadd.f32 %v1808, %v2128
      %v2161 = vadd.f32 %v1809, %v2129
      %v2162 = vadd.f32 %v1810, %v2130
      %v2163 = vadd.f32 %v1811, %v2131
      %v2164 = vadd.f32 %v1812, %v2132
      %v2165 = vadd.f32 %v1813, %v2133
      %v2166 = vadd.f32 %v1814, %v2134
      %v2167 = vadd.f32 %v1815, %v2135
      %v2168 = vadd.f32 %v1816, %v2136
      %v2169 = vadd.f32 %v1817, %v2137
      %v2170 = vadd.f32 %v1818, %v2138
      %v2171 = vadd.f32 %v1819, %v2139
      %v2172 = vadd.f32 %v1820, %v2140
      %v2173 = vadd.f32 %v1821, %v2141
      %v2174 = vadd.f32 %v1822, %v2142
      %v2175 = vadd.f32 %v1823, %v2143
      %v2176 = vadd.f32 %v1824, %v2144
      %v2177 = vadd.f32 %v1825, %v2145
      %v2178 = vadd.f32 %v1826, %v2146
      %v2179 = vadd.f32 %v1827, %v2147
      %v2180 = vadd.f32 %v1828, %v2148
      %v2181 = vadd.f32 %v1829, %v2149
      %v2182 = vadd.f32 %v1830, %v2150
      %v2183 = vadd.f32 %v1831, %v2151
      %v2184 = vadd.f32 %v1832, %v2152
      %v2185 = vadd.f32 %v1833, %v2153
      %v2186 = vld [vmem:[%s7] sm:$0xff]
      %v2187 = vld [vmem:[%s7 + $0x8] sm:$0xff]
      %v2188 = vld [vmem:[%s7 + $0x10] sm:$0xff]
      %v2189 = vld [vmem:[%s7 + $0x18] sm:$0xff]
      %v2190 = vld [vmem:[%s7 + $0x20] sm:$0xff]
      %v2191 = vld [vmem:[%s7 + $0x28] sm:$0xff]
      %v2192 = vld [vmem:[%s7 + $0x30] sm:$0xff]
      %v2193 = vld [vmem:[%s7 + $0x38] sm:$0xff]
      %v2194 = vld [vmem:[%s7 + $0x40] sm:$0xff]
      %v2195 = vld [vmem:[%s7 + $0x48] sm:$0xff]
      %v2196 = vld [vmem:[%s7 + $0x50] sm:$0xff]
      %v2197 = vld [vmem:[%s7 + $0x58] sm:$0xff]
      %v2198 = vld [vmem:[%s7 + $0x60] sm:$0xff]
      %v2199 = vld [vmem:[%s7 + $0x68] sm:$0xff]
      %v2200 = vld [vmem:[%s7 + $0x70] sm:$0xff]
      %v2201 = vld [vmem:[%s7 + $0x78] sm:$0xff]
      %2202 = vmatprep.subr.mxu0 0.0
      %2203 = vmatpush1.msra.mxu0 %v2186
      %2204 = vmatprep.subr.mxu0 0.0
      %2205 = vmatpush1.msra.mxu0 %v2187
      %2206 = vmatprep.subr.mxu0 0.0
      %2207 = vmatpush1.msra.mxu0 %v2188
      %2208 = vmatprep.subr.mxu0 0.0
      %2209 = vmatpush1.msra.mxu0 %v2189
      %2210 = vmatprep.subr.mxu0 0.0
      %2211 = vmatpush1.msra.mxu0 %v2190
      %2212 = vmatprep.subr.mxu0 0.0
      %2213 = vmatpush1.msra.mxu0 %v2191
      %2214 = vmatprep.subr.mxu0 0.0
      %2215 = vmatpush1.msra.mxu0 %v2192
      %2216 = vmatprep.subr.mxu0 0.0
      %2217 = vmatpush1.msra.mxu0 %v2193
      %2218 = vmatprep.subr.mxu0 0.0
      %2219 = vmatpush1.msra.mxu0 %v2194
      %2220 = vmatprep.subr.mxu0 0.0
      %2221 = vmatpush1.msra.mxu0 %v2195
      %2222 = vmatprep.subr.mxu0 0.0
      %2223 = vmatpush1.msra.mxu0 %v2196
      %2224 = vmatprep.subr.mxu0 0.0
      %2225 = vmatpush1.msra.mxu0 %v2197
      %2226 = vmatprep.subr.mxu0 0.0
      %2227 = vmatpush1.msra.mxu0 %v2198
      %2228 = vmatprep.subr.mxu0 0.0
      %2229 = vmatpush1.msra.mxu0 %v2199
      %2230 = vmatprep.subr.mxu0 0.0
      %2231 = vmatpush1.msra.mxu0 %v2200
      %2232 = vmatprep.subr.mxu0 0.0
      %2233 = vmatpush1.msra.mxu0 %v2201
      %2234 = vmatprep.subr.mxu0 0.0
      %2235 = vmatpush1.msra.mxu0 0.0
      %2236 = vmatprep.subr.mxu0 0.0
      %2237 = vmatpush1.msra.mxu0 0.0
      %2238 = vmatprep.subr.mxu0 0.0
      %2239 = vmatpush1.msra.mxu0 0.0
      %2240 = vmatprep.subr.mxu0 0.0
      %2241 = vmatpush1.msra.mxu0 0.0
      %2242 = vmatprep.subr.mxu0 0.0
      %2243 = vmatpush1.msra.mxu0 0.0
      %2244 = vmatprep.subr.mxu0 0.0
      %2245 = vmatpush1.msra.mxu0 0.0
      %2246 = vmatprep.subr.mxu0 0.0
      %2247 = vmatpush1.msra.mxu0 0.0
      %2248 = vmatprep.subr.mxu0 0.0
      %2249 = vmatpush1.msra.mxu0 0.0
      %2250 = vmatprep.subr.mxu0 0.0
      %2251 = vmatpush1.msra.mxu0 0.0
      %2252 = vmatprep.subr.mxu0 0.0
      %2253 = vmatpush1.msra.mxu0 0.0
      %2254 = vmatprep.subr.mxu0 0.0
      %2255 = vmatpush1.msra.mxu0 0.0
      %2256 = vmatprep.subr.mxu0 0.0
      %2257 = vmatpush1.msra.mxu0 0.0
      %2258 = vmatprep.subr.mxu0 0.0
      %2259 = vmatpush1.msra.mxu0 0.0
      %2260 = vmatprep.subr.mxu0 0.0
      %2261 = vmatpush1.msra.mxu0 0.0
      %2262 = vmatprep.subr.mxu0 0.0
      %2263 = vmatpush1.msra.mxu0 0.0
      %2264 = vmatprep.subr.mxu0 0.0
      %2265 = vmatpush1.msra.mxu0 0.0
      %2266 = vmatprep.mubr.f32.mxu0 0.0
      %2267 = vmatmul.mubr.f32.gmra.mrb[0].mxu0 %v2154
      %v2268 = vpop.f32.mrb[0].mxu0
      %v2269 = vadd.f32 0.0, %v2268
      %v2270 = vpop.f32.mrb[0].mxu0
      %2271 = vmatprep.mubr.f32.mxu0 0.0
      %2272 = vmatmul.mubr.f32.gmra.mrb[0].mxu0 %v2155
      %v2273 = vpop.f32.mrb[0].mxu0
      %v2274 = vadd.f32 0.0, %v2273
      %v2275 = vpop.f32.mrb[0].mxu0
      %2276 = vmatprep.mubr.f32.mxu0 0.0
      %2277 = vmatmul.mubr.f32.gmra.mrb[0].mxu0 %v2156
      %v2278 = vpop.f32.mrb[0].mxu0
      %v2279 = vadd.f32 0.0, %v2278
      %v2280 = vpop.f32.mrb[0].mxu0
      %2281 = vmatprep.mubr.f32.mxu0 0.0
      %2282 = vmatmul.mubr.f32.gmra.mrb[0].mxu0 %v2157
      %v2283 = vpop.f32.mrb[0].mxu0
      %v2284 = vadd.f32 0.0, %v2283
      %v2285 = vpop.f32.mrb[0].mxu0
      %2286 = vmatprep.mubr.f32.mxu0 0.0
      %2287 = vmatmul.mubr.f32.gmra.mrb[0].mxu0 %v2158
      %v2288 = vpop.f32.mrb[0].mxu0
      %v2289 = vadd.f32 0.0, %v2288
      %v2290 = vpop.f32.mrb[0].mxu0
      %2291 = vmatprep.mubr.f32.mxu0 0.0
      %2292 = vmatmul.mubr.f32.gmra.mrb[0].mxu0 %v2159
      %v2293 = vpop.f32.mrb[0].mxu0
      %v2294 = vadd.f32 0.0, %v2293
      %v2295 = vpop.f32.mrb[0].mxu0
      %2296 = vmatprep.mubr.f32.mxu0 0.0
      %2297 = vmatmul.mubr.f32.gmra.mrb[0].mxu0 %v2160
      %v2298 = vpop.f32.mrb[0].mxu0
      %v2299 = vadd.f32 0.0, %v2298
      %v2300 = vpop.f32.mrb[0].mxu0
      %2301 = vmatprep.mubr.f32.mxu0 0.0
      %2302 = vmatmul.mubr.f32.gmra.mrb[0].mxu0 %v2161
      %v2303 = vpop.f32.mrb[0].mxu0
      %v2304 = vadd.f32 0.0, %v2303
      %v2305 = vpop.f32.mrb[0].mxu0
      %2306 = vmatprep.mubr.f32.mxu0 0.0
      %2307 = vmatmul.mubr.f32.gmra.mrb[0].mxu0 %v2162
      %v2308 = vpop.f32.mrb[0].mxu0
      %v2309 = vadd.f32 0.0, %v2308
      %v2310 = vpop.f32.mrb[0].mxu0
      %2311 = vmatprep.mubr.f32.mxu0 0.0
      %2312 = vmatmul.mubr.f32.gmra.mrb[0].mxu0 %v2163
      %v2313 = vpop.f32.mrb[0].mxu0
      %v2314 = vadd.f32 0.0, %v2313
      %v2315 = vpop.f32.mrb[0].mxu0
      %2316 = vmatprep.mubr.f32.mxu0 0.0
      %2317 = vmatmul.mubr.f32.gmra.mrb[0].mxu0 %v2164
      %v2318 = vpop.f32.mrb[0].mxu0
      %v2319 = vadd.f32 0.0, %v2318
      %v2320 = vpop.f32.mrb[0].mxu0
      %2321 = vmatprep.mubr.f32.mxu0 0.0
      %2322 = vmatmul.mubr.f32.gmra.mrb[0].mxu0 %v2165
      %v2323 = vpop.f32.mrb[0].mxu0
      %v2324 = vadd.f32 0.0, %v2323
      %v2325 = vpop.f32.mrb[0].mxu0
      %2326 = vmatprep.mubr.f32.mxu0 0.0
      %2327 = vmatmul.mubr.f32.gmra.mrb[0].mxu0 %v2166
      %v2328 = vpop.f32.mrb[0].mxu0
      %v2329 = vadd.f32 0.0, %v2328
      %v2330 = vpop.f32.mrb[0].mxu0
      %2331 = vmatprep.mubr.f32.mxu0 0.0
      %2332 = vmatmul.mubr.f32.gmra.mrb[0].mxu0 %v2167
      %v2333 = vpop.f32.mrb[0].mxu0
      %v2334 = vadd.f32 0.0, %v2333
      %v2335 = vpop.f32.mrb[0].mxu0
      %2336 = vmatprep.mubr.f32.mxu0 0.0
      %2337 = vmatmul.mubr.f32.gmra.mrb[0].mxu0 %v2168
      %v2338 = vpop.f32.mrb[0].mxu0
      %v2339 = vadd.f32 0.0, %v2338
      %v2340 = vpop.f32.mrb[0].mxu0
      %2341 = vmatprep.mubr.f32.mxu0 0.0
      %2342 = vmatmul.mubr.f32.gmra.mrb[0].mxu0 %v2169
      %v2343 = vpop.f32.mrb[0].mxu0
      %v2344 = vadd.f32 0.0, %v2343
      %v2345 = vpop.f32.mrb[0].mxu0
      %2346 = vmatprep.mubr.f32.mxu0 0.0
      %2347 = vmatmul.mubr.f32.gmra.mrb[0].mxu0 %v2170
      %v2348 = vpop.f32.mrb[0].mxu0
      %v2349 = vadd.f32 0.0, %v2348
      %v2350 = vpop.f32.mrb[0].mxu0
      %2351 = vmatprep.mubr.f32.mxu0 0.0
      %2352 = vmatmul.mubr.f32.gmra.mrb[0].mxu0 %v2171
      %v2353 = vpop.f32.mrb[0].mxu0
      %v2354 = vadd.f32 0.0, %v2353
      %v2355 = vpop.f32.mrb[0].mxu0
      %2356 = vmatprep.mubr.f32.mxu0 0.0
      %2357 = vmatmul.mubr.f32.gmra.mrb[0].mxu0 %v2172
      %v2358 = vpop.f32.mrb[0].mxu0
      %v2359 = vadd.f32 0.0, %v2358
      %v2360 = vpop.f32.mrb[0].mxu0
      %2361 = vmatprep.mubr.f32.mxu0 0.0
      %2362 = vmatmul.mubr.f32.gmra.mrb[0].mxu0 %v2173
      %v2363 = vpop.f32.mrb[0].mxu0
      %v2364 = vadd.f32 0.0, %v2363
      %v2365 = vpop.f32.mrb[0].mxu0
      %2366 = vmatprep.mubr.f32.mxu0 0.0
      %2367 = vmatmul.mubr.f32.gmra.mrb[0].mxu0 %v2174
      %v2368 = vpop.f32.mrb[0].mxu0
      %v2369 = vadd.f32 0.0, %v2368
      %v2370 = vpop.f32.mrb[0].mxu0
      %2371 = vmatprep.mubr.f32.mxu0 0.0
      %2372 = vmatmul.mubr.f32.gmra.mrb[0].mxu0 %v2175
      %v2373 = vpop.f32.mrb[0].mxu0
      %v2374 = vadd.f32 0.0, %v2373
      %v2375 = vpop.f32.mrb[0].mxu0
      %2376 = vmatprep.mubr.f32.mxu0 0.0
      %2377 = vmatmul.mubr.f32.gmra.mrb[0].mxu0 %v2176
      %v2378 = vpop.f32.mrb[0].mxu0
      %v2379 = vadd.f32 0.0, %v2378
      %v2380 = vpop.f32.mrb[0].mxu0
      %2381 = vmatprep.mubr.f32.mxu0 0.0
      %2382 = vmatmul.mubr.f32.gmra.mrb[0].mxu0 %v2177
      %v2383 = vpop.f32.mrb[0].mxu0
      %v2384 = vadd.f32 0.0, %v2383
      %v2385 = vpop.f32.mrb[0].mxu0
      %2386 = vmatprep.mubr.f32.mxu0 0.0
      %2387 = vmatmul.mubr.f32.gmra.mrb[0].mxu0 %v2178
      %v2388 = vpop.f32.mrb[0].mxu0
      %v2389 = vadd.f32 0.0, %v2388
      %v2390 = vpop.f32.mrb[0].mxu0
      %2391 = vmatprep.mubr.f32.mxu0 0.0
      %2392 = vmatmul.mubr.f32.gmra.mrb[0].mxu0 %v2179
      %v2393 = vpop.f32.mrb[0].mxu0
      %v2394 = vadd.f32 0.0, %v2393
      %v2395 = vpop.f32.mrb[0].mxu0
      %2396 = vmatprep.mubr.f32.mxu0 0.0
      %2397 = vmatmul.mubr.f32.gmra.mrb[0].mxu0 %v2180
      %v2398 = vpop.f32.mrb[0].mxu0
      %v2399 = vadd.f32 0.0, %v2398
      %v2400 = vpop.f32.mrb[0].mxu0
      %2401 = vmatprep.mubr.f32.mxu0 0.0
      %2402 = vmatmul.mubr.f32.gmra.mrb[0].mxu0 %v2181
      %v2403 = vpop.f32.mrb[0].mxu0
      %v2404 = vadd.f32 0.0, %v2403
      %v2405 = vpop.f32.mrb[0].mxu0
      %2406 = vmatprep.mubr.f32.mxu0 0.0
      %2407 = vmatmul.mubr.f32.gmra.mrb[0].mxu0 %v2182
      %v2408 = vpop.f32.mrb[0].mxu0
      %v2409 = vadd.f32 0.0, %v2408
      %v2410 = vpop.f32.mrb[0].mxu0
      %2411 = vmatprep.mubr.f32.mxu0 0.0
      %2412 = vmatmul.mubr.f32.gmra.mrb[0].mxu0 %v2183
      %v2413 = vpop.f32.mrb[0].mxu0
      %v2414 = vadd.f32 0.0, %v2413
      %v2415 = vpop.f32.mrb[0].mxu0
      %2416 = vmatprep.mubr.f32.mxu0 0.0
      %2417 = vmatmul.mubr.f32.gmra.mrb[0].mxu0 %v2184
      %v2418 = vpop.f32.mrb[0].mxu0
      %v2419 = vadd.f32 0.0, %v2418
      %v2420 = vpop.f32.mrb[0].mxu0
      %2421 = vmatprep.mubr.f32.mxu0 0.0
      %2422 = vmatmul.mubr.f32.gmra.mrb[0].mxu0 %v2185
      %v2423 = vpop.f32.mrb[0].mxu0
      %v2424 = vadd.f32 0.0, %v2423
      %v2425 = vpop.f32.mrb[0].mxu0
      %2426 = vdwg.mxu0
      %v2427 = vld [vmem:[%s464] sm:$0xff]
      %v2428 = vld [vmem:[%s464 + $0x8] sm:$0xff]
      %v2429 = vld [vmem:[%s464 + $0x10] sm:$0xff]
      %v2430 = vld [vmem:[%s464 + $0x18] sm:$0xff]
      %v2431 = vld [vmem:[%s464 + $0x20] sm:$0xff]
      %v2432 = vld [vmem:[%s464 + $0x28] sm:$0xff]
      %v2433 = vld [vmem:[%s464 + $0x30] sm:$0xff]
      %v2434 = vld [vmem:[%s464 + $0x38] sm:$0xff]
      %v2435 = vld [vmem:[%s464 + $0x40] sm:$0xff]
      %v2436 = vld [vmem:[%s464 + $0x48] sm:$0xff]
      %v2437 = vld [vmem:[%s464 + $0x50] sm:$0xff]
      %v2438 = vld [vmem:[%s464 + $0x58] sm:$0xff]
      %v2439 = vld [vmem:[%s464 + $0x60] sm:$0xff]
      %v2440 = vld [vmem:[%s464 + $0x68] sm:$0xff]
      %v2441 = vld [vmem:[%s464 + $0x70] sm:$0xff]
      %v2442 = vld [vmem:[%s464 + $0x78] sm:$0xff]
      %v2443 = vld [vmem:[%s464 + $0x80] sm:$0xff]
      %v2444 = vld [vmem:[%s464 + $0x88] sm:$0xff]
      %v2445 = vld [vmem:[%s464 + $0x90] sm:$0xff]
      %v2446 = vld [vmem:[%s464 + $0x98] sm:$0xff]
      %v2447 = vld [vmem:[%s464 + $0xa0] sm:$0xff]
      %v2448 = vld [vmem:[%s464 + $0xa8] sm:$0xff]
      %v2449 = vld [vmem:[%s464 + $0xb0] sm:$0xff]
      %v2450 = vld [vmem:[%s464 + $0xb8] sm:$0xff]
      %v2451 = vld [vmem:[%s464 + $0xc0] sm:$0xff]
      %v2452 = vld [vmem:[%s464 + $0xc8] sm:$0xff]
      %v2453 = vld [vmem:[%s464 + $0xd0] sm:$0xff]
      %v2454 = vld [vmem:[%s464 + $0xd8] sm:$0xff]
      %v2455 = vld [vmem:[%s464 + $0xe0] sm:$0xff]
      %v2456 = vld [vmem:[%s464 + $0xe8] sm:$0xff]
      %v2457 = vld [vmem:[%s464 + $0xf0] sm:$0xff]
      %v2458 = vld [vmem:[%s464 + $0xf8] sm:$0xff]
      %2459 = vset.pattern.permute.xlu0 0
      %2460 = vperm.xlu0 %2459, %v2427
      %v2461 = vpop.permute.xlu0 %2460
      %2462 = vset.pattern.permute.xlu0 0
      %2463 = vperm.xlu0 %2462, %v2428
      %v2464 = vpop.permute.xlu0 %2463
      %2465 = vset.pattern.permute.xlu0 0
      %2466 = vperm.xlu0 %2465, %v2429
      %v2467 = vpop.permute.xlu0 %2466
      %2468 = vset.pattern.permute.xlu0 0
      %2469 = vperm.xlu0 %2468, %v2430
      %v2470 = vpop.permute.xlu0 %2469
      %2471 = vset.pattern.permute.xlu0 0
      %2472 = vperm.xlu0 %2471, %v2431
      %v2473 = vpop.permute.xlu0 %2472
      %2474 = vset.pattern.permute.xlu0 0
      %2475 = vperm.xlu0 %2474, %v2432
      %v2476 = vpop.permute.xlu0 %2475
      %2477 = vset.pattern.permute.xlu0 0
      %2478 = vperm.xlu0 %2477, %v2433
      %v2479 = vpop.permute.xlu0 %2478
      %2480 = vset.pattern.permute.xlu0 0
      %2481 = vperm.xlu0 %2480, %v2434
      %v2482 = vpop.permute.xlu0 %2481
      %2483 = vset.pattern.permute.xlu0 0
      %2484 = vperm.xlu0 %2483, %v2435
      %v2485 = vpop.permute.xlu0 %2484
      %2486 = vset.pattern.permute.xlu0 0
      %2487 = vperm.xlu0 %2486, %v2436
      %v2488 = vpop.permute.xlu0 %2487
      %2489 = vset.pattern.permute.xlu0 0
      %2490 = vperm.xlu0 %2489, %v2437
      %v2491 = vpop.permute.xlu0 %2490
      %2492 = vset.pattern.permute.xlu0 0
      %2493 = vperm.xlu0 %2492, %v2438
      %v2494 = vpop.permute.xlu0 %2493
      %2495 = vset.pattern.permute.xlu0 0
      %2496 = vperm.xlu0 %2495, %v2439
      %v2497 = vpop.permute.xlu0 %2496
      %2498 = vset.pattern.permute.xlu0 0
      %2499 = vperm.xlu0 %2498, %v2440
      %v2500 = vpop.permute.xlu0 %2499
      %2501 = vset.pattern.permute.xlu0 0
      %2502 = vperm.xlu0 %2501, %v2441
      %v2503 = vpop.permute.xlu0 %2502
      %2504 = vset.pattern.permute.xlu0 0
      %2505 = vperm.xlu0 %2504, %v2442
      %v2506 = vpop.permute.xlu0 %2505
      %2507 = vset.pattern.permute.xlu0 0
      %2508 = vperm.xlu0 %2507, %v2443
      %v2509 = vpop.permute.xlu0 %2508
      %2510 = vset.pattern.permute.xlu0 0
      %2511 = vperm.xlu0 %2510, %v2444
      %v2512 = vpop.permute.xlu0 %2511
      %2513 = vset.pattern.permute.xlu0 0
      %2514 = vperm.xlu0 %2513, %v2445
      %v2515 = vpop.permute.xlu0 %2514
      %2516 = vset.pattern.permute.xlu0 0
      %2517 = vperm.xlu0 %2516, %v2446
      %v2518 = vpop.permute.xlu0 %2517
      %2519 = vset.pattern.permute.xlu0 0
      %2520 = vperm.xlu0 %2519, %v2447
      %v2521 = vpop.permute.xlu0 %2520
      %2522 = vset.pattern.permute.xlu0 0
      %2523 = vperm.xlu0 %2522, %v2448
      %v2524 = vpop.permute.xlu0 %2523
      %2525 = vset.pattern.permute.xlu0 0
      %2526 = vperm.xlu0 %2525, %v2449
      %v2527 = vpop.permute.xlu0 %2526
      %2528 = vset.pattern.permute.xlu0 0
      %2529 = vperm.xlu0 %2528, %v2450
      %v2530 = vpop.permute.xlu0 %2529
      %2531 = vset.pattern.permute.xlu0 0
      %2532 = vperm.xlu0 %2531, %v2451
      %v2533 = vpop.permute.xlu0 %2532
      %2534 = vset.pattern.permute.xlu0 0
      %2535 = vperm.xlu0 %2534, %v2452
      %v2536 = vpop.permute.xlu0 %2535
      %2537 = vset.pattern.permute.xlu0 0
      %2538 = vperm.xlu0 %2537, %v2453
      %v2539 = vpop.permute.xlu0 %2538
      %2540 = vset.pattern.permute.xlu0 0
      %2541 = vperm.xlu0 %2540, %v2454
      %v2542 = vpop.permute.xlu0 %2541
      %2543 = vset.pattern.permute.xlu0 0
      %2544 = vperm.xlu0 %2543, %v2455
      %v2545 = vpop.permute.xlu0 %2544
      %2546 = vset.pattern.permute.xlu0 0
      %2547 = vperm.xlu0 %2546, %v2456
      %v2548 = vpop.permute.xlu0 %2547
      %2549 = vset.pattern.permute.xlu0 0
      %2550 = vperm.xlu0 %2549, %v2457
      %v2551 = vpop.permute.xlu0 %2550
      %2552 = vset.pattern.permute.xlu0 0
      %2553 = vperm.xlu0 %2552, %v2458
      %v2554 = vpop.permute.xlu0 %2553
      %vm2555 = vcmp.eq.s32.totalorder %v1065, %v2461
      %vm2556 = vcmp.eq.s32.totalorder %v1065, %v2464
      %vm2557 = vcmp.eq.s32.totalorder %v1065, %v2467
      %vm2558 = vcmp.eq.s32.totalorder %v1065, %v2470
      %vm2559 = vcmp.eq.s32.totalorder %v1065, %v2473
      %vm2560 = vcmp.eq.s32.totalorder %v1065, %v2476
      %vm2561 = vcmp.eq.s32.totalorder %v1065, %v2479
      %vm2562 = vcmp.eq.s32.totalorder %v1065, %v2482
      %vm2563 = vcmp.eq.s32.totalorder %v1065, %v2485
      %vm2564 = vcmp.eq.s32.totalorder %v1065, %v2488
      %vm2565 = vcmp.eq.s32.totalorder %v1065, %v2491
      %vm2566 = vcmp.eq.s32.totalorder %v1065, %v2494
      %vm2567 = vcmp.eq.s32.totalorder %v1065, %v2497
      %vm2568 = vcmp.eq.s32.totalorder %v1065, %v2500
      %vm2569 = vcmp.eq.s32.totalorder %v1065, %v2503
      %vm2570 = vcmp.eq.s32.totalorder %v1065, %v2506
      %vm2571 = vcmp.eq.s32.totalorder %v1065, %v2509
      %vm2572 = vcmp.eq.s32.totalorder %v1065, %v2512
      %vm2573 = vcmp.eq.s32.totalorder %v1065, %v2515
      %vm2574 = vcmp.eq.s32.totalorder %v1065, %v2518
      %vm2575 = vcmp.eq.s32.totalorder %v1065, %v2521
      %vm2576 = vcmp.eq.s32.totalorder %v1065, %v2524
      %vm2577 = vcmp.eq.s32.totalorder %v1065, %v2527
      %vm2578 = vcmp.eq.s32.totalorder %v1065, %v2530
      %vm2579 = vcmp.eq.s32.totalorder %v1065, %v2533
      %vm2580 = vcmp.eq.s32.totalorder %v1065, %v2536
      %vm2581 = vcmp.eq.s32.totalorder %v1065, %v2539
      %vm2582 = vcmp.eq.s32.totalorder %v1065, %v2542
      %vm2583 = vcmp.eq.s32.totalorder %v1065, %v2545
      %vm2584 = vcmp.eq.s32.totalorder %v1065, %v2548
      %vm2585 = vcmp.eq.s32.totalorder %v1065, %v2551
      %vm2586 = vcmp.eq.s32.totalorder %v1065, %v2554
      %2587 = vset.pattern.permute.xlu0 1
      %2588 = vperm.xlu0 %2587, %v2427
      %v2589 = vpop.permute.xlu0 %2588
      %2590 = vset.pattern.permute.xlu0 1
      %2591 = vperm.xlu0 %2590, %v2428
      %v2592 = vpop.permute.xlu0 %2591
      %2593 = vset.pattern.permute.xlu0 1
      %2594 = vperm.xlu0 %2593, %v2429
      %v2595 = vpop.permute.xlu0 %2594
      %2596 = vset.pattern.permute.xlu0 1
      %2597 = vperm.xlu0 %2596, %v2430
      %v2598 = vpop.permute.xlu0 %2597
      %2599 = vset.pattern.permute.xlu0 1
      %2600 = vperm.xlu0 %2599, %v2431
      %v2601 = vpop.permute.xlu0 %2600
      %2602 = vset.pattern.permute.xlu0 1
      %2603 = vperm.xlu0 %2602, %v2432
      %v2604 = vpop.permute.xlu0 %2603
      %2605 = vset.pattern.permute.xlu0 1
      %2606 = vperm.xlu0 %2605, %v2433
      %v2607 = vpop.permute.xlu0 %2606
      %2608 = vset.pattern.permute.xlu0 1
      %2609 = vperm.xlu0 %2608, %v2434
      %v2610 = vpop.permute.xlu0 %2609
      %2611 = vset.pattern.permute.xlu0 1
      %2612 = vperm.xlu0 %2611, %v2435
      %v2613 = vpop.permute.xlu0 %2612
      %2614 = vset.pattern.permute.xlu0 1
      %2615 = vperm.xlu0 %2614, %v2436
      %v2616 = vpop.permute.xlu0 %2615
      %2617 = vset.pattern.permute.xlu0 1
      %2618 = vperm.xlu0 %2617, %v2437
      %v2619 = vpop.permute.xlu0 %2618
      %2620 = vset.pattern.permute.xlu0 1
      %2621 = vperm.xlu0 %2620, %v2438
      %v2622 = vpop.permute.xlu0 %2621
      %2623 = vset.pattern.permute.xlu0 1
      %2624 = vperm.xlu0 %2623, %v2439
      %v2625 = vpop.permute.xlu0 %2624
      %2626 = vset.pattern.permute.xlu0 1
      %2627 = vperm.xlu0 %2626, %v2440
      %v2628 = vpop.permute.xlu0 %2627
      %2629 = vset.pattern.permute.xlu0 1
      %2630 = vperm.xlu0 %2629, %v2441
      %v2631 = vpop.permute.xlu0 %2630
      %2632 = vset.pattern.permute.xlu0 1
      %2633 = vperm.xlu0 %2632, %v2442
      %v2634 = vpop.permute.xlu0 %2633
      %2635 = vset.pattern.permute.xlu0 1
      %2636 = vperm.xlu0 %2635, %v2443
      %v2637 = vpop.permute.xlu0 %2636
      %2638 = vset.pattern.permute.xlu0 1
      %2639 = vperm.xlu0 %2638, %v2444
      %v2640 = vpop.permute.xlu0 %2639
      %2641 = vset.pattern.permute.xlu0 1
      %2642 = vperm.xlu0 %2641, %v2445
      %v2643 = vpop.permute.xlu0 %2642
      %2644 = vset.pattern.permute.xlu0 1
      %2645 = vperm.xlu0 %2644, %v2446
      %v2646 = vpop.permute.xlu0 %2645
      %2647 = vset.pattern.permute.xlu0 1
      %2648 = vperm.xlu0 %2647, %v2447
      %v2649 = vpop.permute.xlu0 %2648
      %2650 = vset.pattern.permute.xlu0 1
      %2651 = vperm.xlu0 %2650, %v2448
      %v2652 = vpop.permute.xlu0 %2651
      %2653 = vset.pattern.permute.xlu0 1
      %2654 = vperm.xlu0 %2653, %v2449
      %v2655 = vpop.permute.xlu0 %2654
      %2656 = vset.pattern.permute.xlu0 1
      %2657 = vperm.xlu0 %2656, %v2450
      %v2658 = vpop.permute.xlu0 %2657
      %2659 = vset.pattern.permute.xlu0 1
      %2660 = vperm.xlu0 %2659, %v2451
      %v2661 = vpop.permute.xlu0 %2660
      %2662 = vset.pattern.permute.xlu0 1
      %2663 = vperm.xlu0 %2662, %v2452
      %v2664 = vpop.permute.xlu0 %2663
      %2665 = vset.pattern.permute.xlu0 1
      %2666 = vperm.xlu0 %2665, %v2453
      %v2667 = vpop.permute.xlu0 %2666
      %2668 = vset.pattern.permute.xlu0 1
      %2669 = vperm.xlu0 %2668, %v2454
      %v2670 = vpop.permute.xlu0 %2669
      %2671 = vset.pattern.permute.xlu0 1
      %2672 = vperm.xlu0 %2671, %v2455
      %v2673 = vpop.permute.xlu0 %2672
      %2674 = vset.pattern.permute.xlu0 1
      %2675 = vperm.xlu0 %2674, %v2456
      %v2676 = vpop.permute.xlu0 %2675
      %2677 = vset.pattern.permute.xlu0 1
      %2678 = vperm.xlu0 %2677, %v2457
      %v2679 = vpop.permute.xlu0 %2678
      %2680 = vset.pattern.permute.xlu0 1
      %2681 = vperm.xlu0 %2680, %v2458
      %v2682 = vpop.permute.xlu0 %2681
      %vm2683 = vcmp.eq.s32.totalorder %v1065, %v2589
      %vm2684 = vcmp.eq.s32.totalorder %v1065, %v2592
      %vm2685 = vcmp.eq.s32.totalorder %v1065, %v2595
      %vm2686 = vcmp.eq.s32.totalorder %v1065, %v2598
      %vm2687 = vcmp.eq.s32.totalorder %v1065, %v2601
      %vm2688 = vcmp.eq.s32.totalorder %v1065, %v2604
      %vm2689 = vcmp.eq.s32.totalorder %v1065, %v2607
      %vm2690 = vcmp.eq.s32.totalorder %v1065, %v2610
      %vm2691 = vcmp.eq.s32.totalorder %v1065, %v2613
      %vm2692 = vcmp.eq.s32.totalorder %v1065, %v2616
      %vm2693 = vcmp.eq.s32.totalorder %v1065, %v2619
      %vm2694 = vcmp.eq.s32.totalorder %v1065, %v2622
      %vm2695 = vcmp.eq.s32.totalorder %v1065, %v2625
      %vm2696 = vcmp.eq.s32.totalorder %v1065, %v2628
      %vm2697 = vcmp.eq.s32.totalorder %v1065, %v2631
      %vm2698 = vcmp.eq.s32.totalorder %v1065, %v2634
      %vm2699 = vcmp.eq.s32.totalorder %v1065, %v2637
      %vm2700 = vcmp.eq.s32.totalorder %v1065, %v2640
      %vm2701 = vcmp.eq.s32.totalorder %v1065, %v2643
      %vm2702 = vcmp.eq.s32.totalorder %v1065, %v2646
      %vm2703 = vcmp.eq.s32.totalorder %v1065, %v2649
      %vm2704 = vcmp.eq.s32.totalorder %v1065, %v2652
      %vm2705 = vcmp.eq.s32.totalorder %v1065, %v2655
      %vm2706 = vcmp.eq.s32.totalorder %v1065, %v2658
      %vm2707 = vcmp.eq.s32.totalorder %v1065, %v2661
      %vm2708 = vcmp.eq.s32.totalorder %v1065, %v2664
      %vm2709 = vcmp.eq.s32.totalorder %v1065, %v2667
      %vm2710 = vcmp.eq.s32.totalorder %v1065, %v2670
      %vm2711 = vcmp.eq.s32.totalorder %v1065, %v2673
      %vm2712 = vcmp.eq.s32.totalorder %v1065, %v2676
      %vm2713 = vcmp.eq.s32.totalorder %v1065, %v2679
      %vm2714 = vcmp.eq.s32.totalorder %v1065, %v2682
      %vm2715 = vmor %vm2555, %vm2683
      %vm2716 = vmor %vm2556, %vm2684
      %vm2717 = vmor %vm2557, %vm2685
      %vm2718 = vmor %vm2558, %vm2686
      %vm2719 = vmor %vm2559, %vm2687
      %vm2720 = vmor %vm2560, %vm2688
      %vm2721 = vmor %vm2561, %vm2689
      %vm2722 = vmor %vm2562, %vm2690
      %vm2723 = vmor %vm2563, %vm2691
      %vm2724 = vmor %vm2564, %vm2692
      %vm2725 = vmor %vm2565, %vm2693
      %vm2726 = vmor %vm2566, %vm2694
      %vm2727 = vmor %vm2567, %vm2695
      %vm2728 = vmor %vm2568, %vm2696
      %vm2729 = vmor %vm2569, %vm2697
      %vm2730 = vmor %vm2570, %vm2698
      %vm2731 = vmor %vm2571, %vm2699
      %vm2732 = vmor %vm2572, %vm2700
      %vm2733 = vmor %vm2573, %vm2701
      %vm2734 = vmor %vm2574, %vm2702
      %vm2735 = vmor %vm2575, %vm2703
      %vm2736 = vmor %vm2576, %vm2704
      %vm2737 = vmor %vm2577, %vm2705
      %vm2738 = vmor %vm2578, %vm2706
      %vm2739 = vmor %vm2579, %vm2707
      %vm2740 = vmor %vm2580, %vm2708
      %vm2741 = vmor %vm2581, %vm2709
      %vm2742 = vmor %vm2582, %vm2710
      %vm2743 = vmor %vm2583, %vm2711
      %vm2744 = vmor %vm2584, %vm2712
      %vm2745 = vmor %vm2585, %vm2713
      %vm2746 = vmor %vm2586, %vm2714
      %2747 = vset.pattern.permute.xlu0 2
      %2748 = vperm.xlu0 %2747, %v2427
      %v2749 = vpop.permute.xlu0 %2748
      %2750 = vset.pattern.permute.xlu0 2
      %2751 = vperm.xlu0 %2750, %v2428
      %v2752 = vpop.permute.xlu0 %2751
      %2753 = vset.pattern.permute.xlu0 2
      %2754 = vperm.xlu0 %2753, %v2429
      %v2755 = vpop.permute.xlu0 %2754
      %2756 = vset.pattern.permute.xlu0 2
      %2757 = vperm.xlu0 %2756, %v2430
      %v2758 = vpop.permute.xlu0 %2757
      %2759 = vset.pattern.permute.xlu0 2
      %2760 = vperm.xlu0 %2759, %v2431
      %v2761 = vpop.permute.xlu0 %2760
      %2762 = vset.pattern.permute.xlu0 2
      %2763 = vperm.xlu0 %2762, %v2432
      %v2764 = vpop.permute.xlu0 %2763
      %2765 = vset.pattern.permute.xlu0 2
      %2766 = vperm.xlu0 %2765, %v2433
      %v2767 = vpop.permute.xlu0 %2766
      %2768 = vset.pattern.permute.xlu0 2
      %2769 = vperm.xlu0 %2768, %v2434
      %v2770 = vpop.permute.xlu0 %2769
      %2771 = vset.pattern.permute.xlu0 2
      %2772 = vperm.xlu0 %2771, %v2435
      %v2773 = vpop.permute.xlu0 %2772
      %2774 = vset.pattern.permute.xlu0 2
      %2775 = vperm.xlu0 %2774, %v2436
      %v2776 = vpop.permute.xlu0 %2775
      %2777 = vset.pattern.permute.xlu0 2
      %2778 = vperm.xlu0 %2777, %v2437
      %v2779 = vpop.permute.xlu0 %2778
      %2780 = vset.pattern.permute.xlu0 2
      %2781 = vperm.xlu0 %2780, %v2438
      %v2782 = vpop.permute.xlu0 %2781
      %2783 = vset.pattern.permute.xlu0 2
      %2784 = vperm.xlu0 %2783, %v2439
      %v2785 = vpop.permute.xlu0 %2784
      %2786 = vset.pattern.permute.xlu0 2
      %2787 = vperm.xlu0 %2786, %v2440
      %v2788 = vpop.permute.xlu0 %2787
      %2789 = vset.pattern.permute.xlu0 2
      %2790 = vperm.xlu0 %2789, %v2441
      %v2791 = vpop.permute.xlu0 %2790
      %2792 = vset.pattern.permute.xlu0 2
      %2793 = vperm.xlu0 %2792, %v2442
      %v2794 = vpop.permute.xlu0 %2793
      %2795 = vset.pattern.permute.xlu0 2
      %2796 = vperm.xlu0 %2795, %v2443
      %v2797 = vpop.permute.xlu0 %2796
      %2798 = vset.pattern.permute.xlu0 2
      %2799 = vperm.xlu0 %2798, %v2444
      %v2800 = vpop.permute.xlu0 %2799
      %2801 = vset.pattern.permute.xlu0 2
      %2802 = vperm.xlu0 %2801, %v2445
      %v2803 = vpop.permute.xlu0 %2802
      %2804 = vset.pattern.permute.xlu0 2
      %2805 = vperm.xlu0 %2804, %v2446
      %v2806 = vpop.permute.xlu0 %2805
      %2807 = vset.pattern.permute.xlu0 2
      %2808 = vperm.xlu0 %2807, %v2447
      %v2809 = vpop.permute.xlu0 %2808
      %2810 = vset.pattern.permute.xlu0 2
      %2811 = vperm.xlu0 %2810, %v2448
      %v2812 = vpop.permute.xlu0 %2811
      %2813 = vset.pattern.permute.xlu0 2
      %2814 = vperm.xlu0 %2813, %v2449
      %v2815 = vpop.permute.xlu0 %2814
      %2816 = vset.pattern.permute.xlu0 2
      %2817 = vperm.xlu0 %2816, %v2450
      %v2818 = vpop.permute.xlu0 %2817
      %2819 = vset.pattern.permute.xlu0 2
      %2820 = vperm.xlu0 %2819, %v2451
      %v2821 = vpop.permute.xlu0 %2820
      %2822 = vset.pattern.permute.xlu0 2
      %2823 = vperm.xlu0 %2822, %v2452
      %v2824 = vpop.permute.xlu0 %2823
      %2825 = vset.pattern.permute.xlu0 2
      %2826 = vperm.xlu0 %2825, %v2453
      %v2827 = vpop.permute.xlu0 %2826
      %2828 = vset.pattern.permute.xlu0 2
      %2829 = vperm.xlu0 %2828, %v2454
      %v2830 = vpop.permute.xlu0 %2829
      %2831 = vset.pattern.permute.xlu0 2
      %2832 = vperm.xlu0 %2831, %v2455
      %v2833 = vpop.permute.xlu0 %2832
      %2834 = vset.pattern.permute.xlu0 2
      %2835 = vperm.xlu0 %2834, %v2456
      %v2836 = vpop.permute.xlu0 %2835
      %2837 = vset.pattern.permute.xlu0 2
      %2838 = vperm.xlu0 %2837, %v2457
      %v2839 = vpop.permute.xlu0 %2838
      %2840 = vset.pattern.permute.xlu0 2
      %2841 = vperm.xlu0 %2840, %v2458
      %v2842 = vpop.permute.xlu0 %2841
      %vm2843 = vcmp.eq.s32.totalorder %v1065, %v2749
      %vm2844 = vcmp.eq.s32.totalorder %v1065, %v2752
      %vm2845 = vcmp.eq.s32.totalorder %v1065, %v2755
      %vm2846 = vcmp.eq.s32.totalorder %v1065, %v2758
      %vm2847 = vcmp.eq.s32.totalorder %v1065, %v2761
      %vm2848 = vcmp.eq.s32.totalorder %v1065, %v2764
      %vm2849 = vcmp.eq.s32.totalorder %v1065, %v2767
      %vm2850 = vcmp.eq.s32.totalorder %v1065, %v2770
      %vm2851 = vcmp.eq.s32.totalorder %v1065, %v2773
      %vm2852 = vcmp.eq.s32.totalorder %v1065, %v2776
      %vm2853 = vcmp.eq.s32.totalorder %v1065, %v2779
      %vm2854 = vcmp.eq.s32.totalorder %v1065, %v2782
      %vm2855 = vcmp.eq.s32.totalorder %v1065, %v2785
      %vm2856 = vcmp.eq.s32.totalorder %v1065, %v2788
      %vm2857 = vcmp.eq.s32.totalorder %v1065, %v2791
      %vm2858 = vcmp.eq.s32.totalorder %v1065, %v2794
      %vm2859 = vcmp.eq.s32.totalorder %v1065, %v2797
      %vm2860 = vcmp.eq.s32.totalorder %v1065, %v2800
      %vm2861 = vcmp.eq.s32.totalorder %v1065, %v2803
      %vm2862 = vcmp.eq.s32.totalorder %v1065, %v2806
      %vm2863 = vcmp.eq.s32.totalorder %v1065, %v2809
      %vm2864 = vcmp.eq.s32.totalorder %v1065, %v2812
      %vm2865 = vcmp.eq.s32.totalorder %v1065, %v2815
      %vm2866 = vcmp.eq.s32.totalorder %v1065, %v2818
      %vm2867 = vcmp.eq.s32.totalorder %v1065, %v2821
      %vm2868 = vcmp.eq.s32.totalorder %v1065, %v2824
      %vm2869 = vcmp.eq.s32.totalorder %v1065, %v2827
      %vm2870 = vcmp.eq.s32.totalorder %v1065, %v2830
      %vm2871 = vcmp.eq.s32.totalorder %v1065, %v2833
      %vm2872 = vcmp.eq.s32.totalorder %v1065, %v2836
      %vm2873 = vcmp.eq.s32.totalorder %v1065, %v2839
      %vm2874 = vcmp.eq.s32.totalorder %v1065, %v2842
      %vm2875 = vmor %vm2715, %vm2843
      %vm2876 = vmor %vm2716, %vm2844
      %vm2877 = vmor %vm2717, %vm2845
      %vm2878 = vmor %vm2718, %vm2846
      %vm2879 = vmor %vm2719, %vm2847
      %vm2880 = vmor %vm2720, %vm2848
      %vm2881 = vmor %vm2721, %vm2849
      %vm2882 = vmor %vm2722, %vm2850
      %vm2883 = vmor %vm2723, %vm2851
      %vm2884 = vmor %vm2724, %vm2852
      %vm2885 = vmor %vm2725, %vm2853
      %vm2886 = vmor %vm2726, %vm2854
      %vm2887 = vmor %vm2727, %vm2855
      %vm2888 = vmor %vm2728, %vm2856
      %vm2889 = vmor %vm2729, %vm2857
      %vm2890 = vmor %vm2730, %vm2858
      %vm2891 = vmor %vm2731, %vm2859
      %vm2892 = vmor %vm2732, %vm2860
      %vm2893 = vmor %vm2733, %vm2861
      %vm2894 = vmor %vm2734, %vm2862
      %vm2895 = vmor %vm2735, %vm2863
      %vm2896 = vmor %vm2736, %vm2864
      %vm2897 = vmor %vm2737, %vm2865
      %vm2898 = vmor %vm2738, %vm2866
      %vm2899 = vmor %vm2739, %vm2867
      %vm2900 = vmor %vm2740, %vm2868
      %vm2901 = vmor %vm2741, %vm2869
      %vm2902 = vmor %vm2742, %vm2870
      %vm2903 = vmor %vm2743, %vm2871
      %vm2904 = vmor %vm2744, %vm2872
      %vm2905 = vmor %vm2745, %vm2873
      %vm2906 = vmor %vm2746, %vm2874
      %2907 = vset.pattern.permute.xlu0 3
      %2908 = vperm.xlu0 %2907, %v2427
      %v2909 = vpop.permute.xlu0 %2908
      %2910 = vset.pattern.permute.xlu0 3
      %2911 = vperm.xlu0 %2910, %v2428
      %v2912 = vpop.permute.xlu0 %2911
      %2913 = vset.pattern.permute.xlu0 3
      %2914 = vperm.xlu0 %2913, %v2429
      %v2915 = vpop.permute.xlu0 %2914
      %2916 = vset.pattern.permute.xlu0 3
      %2917 = vperm.xlu0 %2916, %v2430
      %v2918 = vpop.permute.xlu0 %2917
      %2919 = vset.pattern.permute.xlu0 3
      %2920 = vperm.xlu0 %2919, %v2431
      %v2921 = vpop.permute.xlu0 %2920
      %2922 = vset.pattern.permute.xlu0 3
      %2923 = vperm.xlu0 %2922, %v2432
      %v2924 = vpop.permute.xlu0 %2923
      %2925 = vset.pattern.permute.xlu0 3
      %2926 = vperm.xlu0 %2925, %v2433
      %v2927 = vpop.permute.xlu0 %2926
      %2928 = vset.pattern.permute.xlu0 3
      %2929 = vperm.xlu0 %2928, %v2434
      %v2930 = vpop.permute.xlu0 %2929
      %2931 = vset.pattern.permute.xlu0 3
      %2932 = vperm.xlu0 %2931, %v2435
      %v2933 = vpop.permute.xlu0 %2932
      %2934 = vset.pattern.permute.xlu0 3
      %2935 = vperm.xlu0 %2934, %v2436
      %v2936 = vpop.permute.xlu0 %2935
      %2937 = vset.pattern.permute.xlu0 3
      %2938 = vperm.xlu0 %2937, %v2437
      %v2939 = vpop.permute.xlu0 %2938
      %2940 = vset.pattern.permute.xlu0 3
      %2941 = vperm.xlu0 %2940, %v2438
      %v2942 = vpop.permute.xlu0 %2941
      %2943 = vset.pattern.permute.xlu0 3
      %2944 = vperm.xlu0 %2943, %v2439
      %v2945 = vpop.permute.xlu0 %2944
      %2946 = vset.pattern.permute.xlu0 3
      %2947 = vperm.xlu0 %2946, %v2440
      %v2948 = vpop.permute.xlu0 %2947
      %2949 = vset.pattern.permute.xlu0 3
      %2950 = vperm.xlu0 %2949, %v2441
      %v2951 = vpop.permute.xlu0 %2950
      %2952 = vset.pattern.permute.xlu0 3
      %2953 = vperm.xlu0 %2952, %v2442
      %v2954 = vpop.permute.xlu0 %2953
      %2955 = vset.pattern.permute.xlu0 3
      %2956 = vperm.xlu0 %2955, %v2443
      %v2957 = vpop.permute.xlu0 %2956
      %2958 = vset.pattern.permute.xlu0 3
      %2959 = vperm.xlu0 %2958, %v2444
      %v2960 = vpop.permute.xlu0 %2959
      %2961 = vset.pattern.permute.xlu0 3
      %2962 = vperm.xlu0 %2961, %v2445
      %v2963 = vpop.permute.xlu0 %2962
      %2964 = vset.pattern.permute.xlu0 3
      %2965 = vperm.xlu0 %2964, %v2446
      %v2966 = vpop.permute.xlu0 %2965
      %2967 = vset.pattern.permute.xlu0 3
      %2968 = vperm.xlu0 %2967, %v2447
      %v2969 = vpop.permute.xlu0 %2968
      %2970 = vset.pattern.permute.xlu0 3
      %2971 = vperm.xlu0 %2970, %v2448
      %v2972 = vpop.permute.xlu0 %2971
      %2973 = vset.pattern.permute.xlu0 3
      %2974 = vperm.xlu0 %2973, %v2449
      %v2975 = vpop.permute.xlu0 %2974
      %2976 = vset.pattern.permute.xlu0 3
      %2977 = vperm.xlu0 %2976, %v2450
      %v2978 = vpop.permute.xlu0 %2977
      %2979 = vset.pattern.permute.xlu0 3
      %2980 = vperm.xlu0 %2979, %v2451
      %v2981 = vpop.permute.xlu0 %2980
      %2982 = vset.pattern.permute.xlu0 3
      %2983 = vperm.xlu0 %2982, %v2452
      %v2984 = vpop.permute.xlu0 %2983
      %2985 = vset.pattern.permute.xlu0 3
      %2986 = vperm.xlu0 %2985, %v2453
      %v2987 = vpop.permute.xlu0 %2986
      %2988 = vset.pattern.permute.xlu0 3
      %2989 = vperm.xlu0 %2988, %v2454
      %v2990 = vpop.permute.xlu0 %2989
      %2991 = vset.pattern.permute.xlu0 3
      %2992 = vperm.xlu0 %2991, %v2455
      %v2993 = vpop.permute.xlu0 %2992
      %2994 = vset.pattern.permute.xlu0 3
      %2995 = vperm.xlu0 %2994, %v2456
      %v2996 = vpop.permute.xlu0 %2995
      %2997 = vset.pattern.permute.xlu0 3
      %2998 = vperm.xlu0 %2997, %v2457
      %v2999 = vpop.permute.xlu0 %2998
      %3000 = vset.pattern.permute.xlu0 3
      %3001 = vperm.xlu0 %3000, %v2458
      %v3002 = vpop.permute.xlu0 %3001
      %vm3003 = vcmp.eq.s32.totalorder %v1065, %v2909
      %vm3004 = vcmp.eq.s32.totalorder %v1065, %v2912
      %vm3005 = vcmp.eq.s32.totalorder %v1065, %v2915
      %vm3006 = vcmp.eq.s32.totalorder %v1065, %v2918
      %vm3007 = vcmp.eq.s32.totalorder %v1065, %v2921
      %vm3008 = vcmp.eq.s32.totalorder %v1065, %v2924
      %vm3009 = vcmp.eq.s32.totalorder %v1065, %v2927
      %vm3010 = vcmp.eq.s32.totalorder %v1065, %v2930
      %vm3011 = vcmp.eq.s32.totalorder %v1065, %v2933
      %vm3012 = vcmp.eq.s32.totalorder %v1065, %v2936
      %vm3013 = vcmp.eq.s32.totalorder %v1065, %v2939
      %vm3014 = vcmp.eq.s32.totalorder %v1065, %v2942
      %vm3015 = vcmp.eq.s32.totalorder %v1065, %v2945
      %vm3016 = vcmp.eq.s32.totalorder %v1065, %v2948
      %vm3017 = vcmp.eq.s32.totalorder %v1065, %v2951
      %vm3018 = vcmp.eq.s32.totalorder %v1065, %v2954
      %vm3019 = vcmp.eq.s32.totalorder %v1065, %v2957
      %vm3020 = vcmp.eq.s32.totalorder %v1065, %v2960
      %vm3021 = vcmp.eq.s32.totalorder %v1065, %v2963
      %vm3022 = vcmp.eq.s32.totalorder %v1065, %v2966
      %vm3023 = vcmp.eq.s32.totalorder %v1065, %v2969
      %vm3024 = vcmp.eq.s32.totalorder %v1065, %v2972
      %vm3025 = vcmp.eq.s32.totalorder %v1065, %v2975
      %vm3026 = vcmp.eq.s32.totalorder %v1065, %v2978
      %vm3027 = vcmp.eq.s32.totalorder %v1065, %v2981
      %vm3028 = vcmp.eq.s32.totalorder %v1065, %v2984
      %vm3029 = vcmp.eq.s32.totalorder %v1065, %v2987
      %vm3030 = vcmp.eq.s32.totalorder %v1065, %v2990
      %vm3031 = vcmp.eq.s32.totalorder %v1065, %v2993
      %vm3032 = vcmp.eq.s32.totalorder %v1065, %v2996
      %vm3033 = vcmp.eq.s32.totalorder %v1065, %v2999
      %vm3034 = vcmp.eq.s32.totalorder %v1065, %v3002
      %vm3035 = vmor %vm2875, %vm3003
      %vm3036 = vmor %vm2876, %vm3004
      %vm3037 = vmor %vm2877, %vm3005
      %vm3038 = vmor %vm2878, %vm3006
      %vm3039 = vmor %vm2879, %vm3007
      %vm3040 = vmor %vm2880, %vm3008
      %vm3041 = vmor %vm2881, %vm3009
      %vm3042 = vmor %vm2882, %vm3010
      %vm3043 = vmor %vm2883, %vm3011
      %vm3044 = vmor %vm2884, %vm3012
      %vm3045 = vmor %vm2885, %vm3013
      %vm3046 = vmor %vm2886, %vm3014
      %vm3047 = vmor %vm2887, %vm3015
      %vm3048 = vmor %vm2888, %vm3016
      %vm3049 = vmor %vm2889, %vm3017
      %vm3050 = vmor %vm2890, %vm3018
      %vm3051 = vmor %vm2891, %vm3019
      %vm3052 = vmor %vm2892, %vm3020
      %vm3053 = vmor %vm2893, %vm3021
      %vm3054 = vmor %vm2894, %vm3022
      %vm3055 = vmor %vm2895, %vm3023
      %vm3056 = vmor %vm2896, %vm3024
      %vm3057 = vmor %vm2897, %vm3025
      %vm3058 = vmor %vm2898, %vm3026
      %vm3059 = vmor %vm2899, %vm3027
      %vm3060 = vmor %vm2900, %vm3028
      %vm3061 = vmor %vm2901, %vm3029
      %vm3062 = vmor %vm2902, %vm3030
      %vm3063 = vmor %vm2903, %vm3031
      %vm3064 = vmor %vm2904, %vm3032
      %vm3065 = vmor %vm2905, %vm3033
      %vm3066 = vmor %vm2906, %vm3034
      %v3067 = vsel %vm3035, 1, 0
      %v3068 = vsel %vm3036, 1, 0
      %v3069 = vsel %vm3037, 1, 0
      %v3070 = vsel %vm3038, 1, 0
      %v3071 = vsel %vm3039, 1, 0
      %v3072 = vsel %vm3040, 1, 0
      %v3073 = vsel %vm3041, 1, 0
      %v3074 = vsel %vm3042, 1, 0
      %v3075 = vsel %vm3043, 1, 0
      %v3076 = vsel %vm3044, 1, 0
      %v3077 = vsel %vm3045, 1, 0
      %v3078 = vsel %vm3046, 1, 0
      %v3079 = vsel %vm3047, 1, 0
      %v3080 = vsel %vm3048, 1, 0
      %v3081 = vsel %vm3049, 1, 0
      %v3082 = vsel %vm3050, 1, 0
      %v3083 = vsel %vm3051, 1, 0
      %v3084 = vsel %vm3052, 1, 0
      %v3085 = vsel %vm3053, 1, 0
      %v3086 = vsel %vm3054, 1, 0
      %v3087 = vsel %vm3055, 1, 0
      %v3088 = vsel %vm3056, 1, 0
      %v3089 = vsel %vm3057, 1, 0
      %v3090 = vsel %vm3058, 1, 0
      %v3091 = vsel %vm3059, 1, 0
      %v3092 = vsel %vm3060, 1, 0
      %v3093 = vsel %vm3061, 1, 0
      %v3094 = vsel %vm3062, 1, 0
      %v3095 = vsel %vm3063, 1, 0
      %v3096 = vsel %vm3064, 1, 0
      %v3097 = vsel %vm3065, 1, 0
      %v3098 = vsel %vm3066, 1, 0
      %v3099 = vcvt.s32.f32 %v3067
      %v3100 = vcvt.s32.f32 %v3068
      %v3101 = vcvt.s32.f32 %v3069
      %v3102 = vcvt.s32.f32 %v3070
      %v3103 = vcvt.s32.f32 %v3071
      %v3104 = vcvt.s32.f32 %v3072
      %v3105 = vcvt.s32.f32 %v3073
      %v3106 = vcvt.s32.f32 %v3074
      %v3107 = vcvt.s32.f32 %v3075
      %v3108 = vcvt.s32.f32 %v3076
      %v3109 = vcvt.s32.f32 %v3077
      %v3110 = vcvt.s32.f32 %v3078
      %v3111 = vcvt.s32.f32 %v3079
      %v3112 = vcvt.s32.f32 %v3080
      %v3113 = vcvt.s32.f32 %v3081
      %v3114 = vcvt.s32.f32 %v3082
      %v3115 = vcvt.s32.f32 %v3083
      %v3116 = vcvt.s32.f32 %v3084
      %v3117 = vcvt.s32.f32 %v3085
      %v3118 = vcvt.s32.f32 %v3086
      %v3119 = vcvt.s32.f32 %v3087
      %v3120 = vcvt.s32.f32 %v3088
      %v3121 = vcvt.s32.f32 %v3089
      %v3122 = vcvt.s32.f32 %v3090
      %v3123 = vcvt.s32.f32 %v3091
      %v3124 = vcvt.s32.f32 %v3092
      %v3125 = vcvt.s32.f32 %v3093
      %v3126 = vcvt.s32.f32 %v3094
      %v3127 = vcvt.s32.f32 %v3095
      %v3128 = vcvt.s32.f32 %v3096
      %v3129 = vcvt.s32.f32 %v3097
      %v3130 = vcvt.s32.f32 %v3098
      %v3131 = vld [vmem:[%s8] sm:$0xff]
      %v3132 = vld [vmem:[%s8 + $0x8] sm:$0xff]
      %v3133 = vld [vmem:[%s8 + $0x10] sm:$0xff]
      %v3134 = vld [vmem:[%s8 + $0x18] sm:$0xff]
      %v3135 = vld [vmem:[%s8 + $0x20] sm:$0xff]
      %v3136 = vld [vmem:[%s8 + $0x28] sm:$0xff]
      %v3137 = vld [vmem:[%s8 + $0x30] sm:$0xff]
      %v3138 = vld [vmem:[%s8 + $0x38] sm:$0xff]
      %v3139 = vld [vmem:[%s8 + $0x40] sm:$0xff]
      %v3140 = vld [vmem:[%s8 + $0x48] sm:$0xff]
      %v3141 = vld [vmem:[%s8 + $0x50] sm:$0xff]
      %v3142 = vld [vmem:[%s8 + $0x58] sm:$0xff]
      %v3143 = vld [vmem:[%s8 + $0x60] sm:$0xff]
      %v3144 = vld [vmem:[%s8 + $0x68] sm:$0xff]
      %v3145 = vld [vmem:[%s8 + $0x70] sm:$0xff]
      %v3146 = vld [vmem:[%s8 + $0x78] sm:$0xff]
      %3147 = vmatprep.subr.mxu0 0.0
      %3148 = vmatpush1.msra.mxu0 %v3131
      %3149 = vmatprep.subr.mxu0 0.0
      %3150 = vmatpush1.msra.mxu0 %v3132
      %3151 = vmatprep.subr.mxu0 0.0
      %3152 = vmatpush1.msra.mxu0 %v3133
      %3153 = vmatprep.subr.mxu0 0.0
      %3154 = vmatpush1.msra.mxu0 %v3134
      %3155 = vmatprep.subr.mxu0 0.0
      %3156 = vmatpush1.msra.mxu0 %v3135
      %3157 = vmatprep.subr.mxu0 0.0
      %3158 = vmatpush1.msra.mxu0 %v3136
      %3159 = vmatprep.subr.mxu0 0.0
      %3160 = vmatpush1.msra.mxu0 %v3137
      %3161 = vmatprep.subr.mxu0 0.0
      %3162 = vmatpush1.msra.mxu0 %v3138
      %3163 = vmatprep.subr.mxu0 0.0
      %3164 = vmatpush1.msra.mxu0 %v3139
      %3165 = vmatprep.subr.mxu0 0.0
      %3166 = vmatpush1.msra.mxu0 %v3140
      %3167 = vmatprep.subr.mxu0 0.0
      %3168 = vmatpush1.msra.mxu0 %v3141
      %3169 = vmatprep.subr.mxu0 0.0
      %3170 = vmatpush1.msra.mxu0 %v3142
      %3171 = vmatprep.subr.mxu0 0.0
      %3172 = vmatpush1.msra.mxu0 %v3143
      %3173 = vmatprep.subr.mxu0 0.0
      %3174 = vmatpush1.msra.mxu0 %v3144
      %3175 = vmatprep.subr.mxu0 0.0
      %3176 = vmatpush1.msra.mxu0 %v3145
      %3177 = vmatprep.subr.mxu0 0.0
      %3178 = vmatpush1.msra.mxu0 %v3146
      %3179 = vmatprep.subr.mxu0 0.0
      %3180 = vmatpush1.msra.mxu0 0.0
      %3181 = vmatprep.subr.mxu0 0.0
      %3182 = vmatpush1.msra.mxu0 0.0
      %3183 = vmatprep.subr.mxu0 0.0
      %3184 = vmatpush1.msra.mxu0 0.0
      %3185 = vmatprep.subr.mxu0 0.0
      %3186 = vmatpush1.msra.mxu0 0.0
      %3187 = vmatprep.subr.mxu0 0.0
      %3188 = vmatpush1.msra.mxu0 0.0
      %3189 = vmatprep.subr.mxu0 0.0
      %3190 = vmatpush1.msra.mxu0 0.0
      %3191 = vmatprep.subr.mxu0 0.0
      %3192 = vmatpush1.msra.mxu0 0.0
      %3193 = vmatprep.subr.mxu0 0.0
      %3194 = vmatpush1.msra.mxu0 0.0
      %3195 = vmatprep.subr.mxu0 0.0
      %3196 = vmatpush1.msra.mxu0 0.0
      %3197 = vmatprep.subr.mxu0 0.0
      %3198 = vmatpush1.msra.mxu0 0.0
      %3199 = vmatprep.subr.mxu0 0.0
      %3200 = vmatpush1.msra.mxu0 0.0
      %3201 = vmatprep.subr.mxu0 0.0
      %3202 = vmatpush1.msra.mxu0 0.0
      %3203 = vmatprep.subr.mxu0 0.0
      %3204 = vmatpush1.msra.mxu0 0.0
      %3205 = vmatprep.subr.mxu0 0.0
      %3206 = vmatpush1.msra.mxu0 0.0
      %3207 = vmatprep.subr.mxu0 0.0
      %3208 = vmatpush1.msra.mxu0 0.0
      %3209 = vmatprep.subr.mxu0 0.0
      %3210 = vmatpush1.msra.mxu0 0.0
      %3211 = vmatprep.mubr.f32.mxu0 0.0
      %3212 = vmatmul.mubr.f32.gmra.mrb[0].mxu0 %v3099
      %v3213 = vpop.f32.mrb[0].mxu0
      %v3214 = vadd.f32 0.0, %v3213
      %v3215 = vpop.f32.mrb[0].mxu0
      %3216 = vmatprep.mubr.f32.mxu0 0.0
      %3217 = vmatmul.mubr.f32.gmra.mrb[0].mxu0 %v3100
      %v3218 = vpop.f32.mrb[0].mxu0
      %v3219 = vadd.f32 0.0, %v3218
      %v3220 = vpop.f32.mrb[0].mxu0
      %3221 = vmatprep.mubr.f32.mxu0 0.0
      %3222 = vmatmul.mubr.f32.gmra.mrb[0].mxu0 %v3101
      %v3223 = vpop.f32.mrb[0].mxu0
      %v3224 = vadd.f32 0.0, %v3223
      %v3225 = vpop.f32.mrb[0].mxu0
      %3226 = vmatprep.mubr.f32.mxu0 0.0
      %3227 = vmatmul.mubr.f32.gmra.mrb[0].mxu0 %v3102
      %v3228 = vpop.f32.mrb[0].mxu0
      %v3229 = vadd.f32 0.0, %v3228
      %v3230 = vpop.f32.mrb[0].mxu0
      %3231 = vmatprep.mubr.f32.mxu0 0.0
      %3232 = vmatmul.mubr.f32.gmra.mrb[0].mxu0 %v3103
      %v3233 = vpop.f32.mrb[0].mxu0
      %v3234 = vadd.f32 0.0, %v3233
      %v3235 = vpop.f32.mrb[0].mxu0
      %3236 = vmatprep.mubr.f32.mxu0 0.0
      %3237 = vmatmul.mubr.f32.gmra.mrb[0].mxu0 %v3104
      %v3238 = vpop.f32.mrb[0].mxu0
      %v3239 = vadd.f32 0.0, %v3238
      %v3240 = vpop.f32.mrb[0].mxu0
      %3241 = vmatprep.mubr.f32.mxu0 0.0
      %3242 = vmatmul.mubr.f32.gmra.mrb[0].mxu0 %v3105
      %v3243 = vpop.f32.mrb[0].mxu0
      %v3244 = vadd.f32 0.0, %v3243
      %v3245 = vpop.f32.mrb[0].mxu0
      %3246 = vmatprep.mubr.f32.mxu0 0.0
      %3247 = vmatmul.mubr.f32.gmra.mrb[0].mxu0 %v3106
      %v3248 = vpop.f32.mrb[0].mxu0
      %v3249 = vadd.f32 0.0, %v3248
      %v3250 = vpop.f32.mrb[0].mxu0
      %3251 = vmatprep.mubr.f32.mxu0 0.0
      %3252 = vmatmul.mubr.f32.gmra.mrb[0].mxu0 %v3107
      %v3253 = vpop.f32.mrb[0].mxu0
      %v3254 = vadd.f32 0.0, %v3253
      %v3255 = vpop.f32.mrb[0].mxu0
      %3256 = vmatprep.mubr.f32.mxu0 0.0
      %3257 = vmatmul.mubr.f32.gmra.mrb[0].mxu0 %v3108
      %v3258 = vpop.f32.mrb[0].mxu0
      %v3259 = vadd.f32 0.0, %v3258
      %v3260 = vpop.f32.mrb[0].mxu0
      %3261 = vmatprep.mubr.f32.mxu0 0.0
      %3262 = vmatmul.mubr.f32.gmra.mrb[0].mxu0 %v3109
      %v3263 = vpop.f32.mrb[0].mxu0
      %v3264 = vadd.f32 0.0, %v3263
      %v3265 = vpop.f32.mrb[0].mxu0
      %3266 = vmatprep.mubr.f32.mxu0 0.0
      %3267 = vmatmul.mubr.f32.gmra.mrb[0].mxu0 %v3110
      %v3268 = vpop.f32.mrb[0].mxu0
      %v3269 = vadd.f32 0.0, %v3268
      %v3270 = vpop.f32.mrb[0].mxu0
      %3271 = vmatprep.mubr.f32.mxu0 0.0
      %3272 = vmatmul.mubr.f32.gmra.mrb[0].mxu0 %v3111
      %v3273 = vpop.f32.mrb[0].mxu0
      %v3274 = vadd.f32 0.0, %v3273
      %v3275 = vpop.f32.mrb[0].mxu0
      %3276 = vmatprep.mubr.f32.mxu0 0.0
      %3277 = vmatmul.mubr.f32.gmra.mrb[0].mxu0 %v3112
      %v3278 = vpop.f32.mrb[0].mxu0
      %v3279 = vadd.f32 0.0, %v3278
      %v3280 = vpop.f32.mrb[0].mxu0
      %3281 = vmatprep.mubr.f32.mxu0 0.0
      %3282 = vmatmul.mubr.f32.gmra.mrb[0].mxu0 %v3113
      %v3283 = vpop.f32.mrb[0].mxu0
      %v3284 = vadd.f32 0.0, %v3283
      %v3285 = vpop.f32.mrb[0].mxu0
      %3286 = vmatprep.mubr.f32.mxu0 0.0
      %3287 = vmatmul.mubr.f32.gmra.mrb[0].mxu0 %v3114
      %v3288 = vpop.f32.mrb[0].mxu0
      %v3289 = vadd.f32 0.0, %v3288
      %v3290 = vpop.f32.mrb[0].mxu0
      %3291 = vmatprep.mubr.f32.mxu0 0.0
      %3292 = vmatmul.mubr.f32.gmra.mrb[0].mxu0 %v3115
      %v3293 = vpop.f32.mrb[0].mxu0
      %v3294 = vadd.f32 0.0, %v3293
      %v3295 = vpop.f32.mrb[0].mxu0
      %3296 = vmatprep.mubr.f32.mxu0 0.0
      %3297 = vmatmul.mubr.f32.gmra.mrb[0].mxu0 %v3116
      %v3298 = vpop.f32.mrb[0].mxu0
      %v3299 = vadd.f32 0.0, %v3298
      %v3300 = vpop.f32.mrb[0].mxu0
      %3301 = vmatprep.mubr.f32.mxu0 0.0
      %3302 = vmatmul.mubr.f32.gmra.mrb[0].mxu0 %v3117
      %v3303 = vpop.f32.mrb[0].mxu0
      %v3304 = vadd.f32 0.0, %v3303
      %v3305 = vpop.f32.mrb[0].mxu0
      %3306 = vmatprep.mubr.f32.mxu0 0.0
      %3307 = vmatmul.mubr.f32.gmra.mrb[0].mxu0 %v3118
      %v3308 = vpop.f32.mrb[0].mxu0
      %v3309 = vadd.f32 0.0, %v3308
      %v3310 = vpop.f32.mrb[0].mxu0
      %3311 = vmatprep.mubr.f32.mxu0 0.0
      %3312 = vmatmul.mubr.f32.gmra.mrb[0].mxu0 %v3119
      %v3313 = vpop.f32.mrb[0].mxu0
      %v3314 = vadd.f32 0.0, %v3313
      %v3315 = vpop.f32.mrb[0].mxu0
      %3316 = vmatprep.mubr.f32.mxu0 0.0
      %3317 = vmatmul.mubr.f32.gmra.mrb[0].mxu0 %v3120
      %v3318 = vpop.f32.mrb[0].mxu0
      %v3319 = vadd.f32 0.0, %v3318
      %v3320 = vpop.f32.mrb[0].mxu0
      %3321 = vmatprep.mubr.f32.mxu0 0.0
      %3322 = vmatmul.mubr.f32.gmra.mrb[0].mxu0 %v3121
      %v3323 = vpop.f32.mrb[0].mxu0
      %v3324 = vadd.f32 0.0, %v3323
      %v3325 = vpop.f32.mrb[0].mxu0
      %3326 = vmatprep.mubr.f32.mxu0 0.0
      %3327 = vmatmul.mubr.f32.gmra.mrb[0].mxu0 %v3122
      %v3328 = vpop.f32.mrb[0].mxu0
      %v3329 = vadd.f32 0.0, %v3328
      %v3330 = vpop.f32.mrb[0].mxu0
      %3331 = vmatprep.mubr.f32.mxu0 0.0
      %3332 = vmatmul.mubr.f32.gmra.mrb[0].mxu0 %v3123
      %v3333 = vpop.f32.mrb[0].mxu0
      %v3334 = vadd.f32 0.0, %v3333
      %v3335 = vpop.f32.mrb[0].mxu0
      %3336 = vmatprep.mubr.f32.mxu0 0.0
      %3337 = vmatmul.mubr.f32.gmra.mrb[0].mxu0 %v3124
      %v3338 = vpop.f32.mrb[0].mxu0
      %v3339 = vadd.f32 0.0, %v3338
      %v3340 = vpop.f32.mrb[0].mxu0
      %3341 = vmatprep.mubr.f32.mxu0 0.0
      %3342 = vmatmul.mubr.f32.gmra.mrb[0].mxu0 %v3125
      %v3343 = vpop.f32.mrb[0].mxu0
      %v3344 = vadd.f32 0.0, %v3343
      %v3345 = vpop.f32.mrb[0].mxu0
      %3346 = vmatprep.mubr.f32.mxu0 0.0
      %3347 = vmatmul.mubr.f32.gmra.mrb[0].mxu0 %v3126
      %v3348 = vpop.f32.mrb[0].mxu0
      %v3349 = vadd.f32 0.0, %v3348
      %v3350 = vpop.f32.mrb[0].mxu0
      %3351 = vmatprep.mubr.f32.mxu0 0.0
      %3352 = vmatmul.mubr.f32.gmra.mrb[0].mxu0 %v3127
      %v3353 = vpop.f32.mrb[0].mxu0
      %v3354 = vadd.f32 0.0, %v3353
      %v3355 = vpop.f32.mrb[0].mxu0
      %3356 = vmatprep.mubr.f32.mxu0 0.0
      %3357 = vmatmul.mubr.f32.gmra.mrb[0].mxu0 %v3128
      %v3358 = vpop.f32.mrb[0].mxu0
      %v3359 = vadd.f32 0.0, %v3358
      %v3360 = vpop.f32.mrb[0].mxu0
      %3361 = vmatprep.mubr.f32.mxu0 0.0
      %3362 = vmatmul.mubr.f32.gmra.mrb[0].mxu0 %v3129
      %v3363 = vpop.f32.mrb[0].mxu0
      %v3364 = vadd.f32 0.0, %v3363
      %v3365 = vpop.f32.mrb[0].mxu0
      %3366 = vmatprep.mubr.f32.mxu0 0.0
      %3367 = vmatmul.mubr.f32.gmra.mrb[0].mxu0 %v3130
      %v3368 = vpop.f32.mrb[0].mxu0
      %v3369 = vadd.f32 0.0, %v3368
      %v3370 = vpop.f32.mrb[0].mxu0
      %3371 = vdwg.mxu0
      %v3372 = vld [vmem:[%s470] sm:$0xff]
      %v3373 = vld [vmem:[%s470 + $0x8] sm:$0xff]
      %v3374 = vld [vmem:[%s470 + $0x10] sm:$0xff]
      %v3375 = vld [vmem:[%s470 + $0x18] sm:$0xff]
      %v3376 = vld [vmem:[%s470 + $0x20] sm:$0xff]
      %v3377 = vld [vmem:[%s470 + $0x28] sm:$0xff]
      %v3378 = vld [vmem:[%s470 + $0x30] sm:$0xff]
      %v3379 = vld [vmem:[%s470 + $0x38] sm:$0xff]
      %v3380 = vld [vmem:[%s470 + $0x40] sm:$0xff]
      %v3381 = vld [vmem:[%s470 + $0x48] sm:$0xff]
      %v3382 = vld [vmem:[%s470 + $0x50] sm:$0xff]
      %v3383 = vld [vmem:[%s470 + $0x58] sm:$0xff]
      %v3384 = vld [vmem:[%s470 + $0x60] sm:$0xff]
      %v3385 = vld [vmem:[%s470 + $0x68] sm:$0xff]
      %v3386 = vld [vmem:[%s470 + $0x70] sm:$0xff]
      %v3387 = vld [vmem:[%s470 + $0x78] sm:$0xff]
      %v3388 = vld [vmem:[%s470 + $0x80] sm:$0xff]
      %v3389 = vld [vmem:[%s470 + $0x88] sm:$0xff]
      %v3390 = vld [vmem:[%s470 + $0x90] sm:$0xff]
      %v3391 = vld [vmem:[%s470 + $0x98] sm:$0xff]
      %v3392 = vld [vmem:[%s470 + $0xa0] sm:$0xff]
      %v3393 = vld [vmem:[%s470 + $0xa8] sm:$0xff]
      %v3394 = vld [vmem:[%s470 + $0xb0] sm:$0xff]
      %v3395 = vld [vmem:[%s470 + $0xb8] sm:$0xff]
      %v3396 = vld [vmem:[%s470 + $0xc0] sm:$0xff]
      %v3397 = vld [vmem:[%s470 + $0xc8] sm:$0xff]
      %v3398 = vld [vmem:[%s470 + $0xd0] sm:$0xff]
      %v3399 = vld [vmem:[%s470 + $0xd8] sm:$0xff]
      %v3400 = vld [vmem:[%s470 + $0xe0] sm:$0xff]
      %v3401 = vld [vmem:[%s470 + $0xe8] sm:$0xff]
      %v3402 = vld [vmem:[%s470 + $0xf0] sm:$0xff]
      %v3403 = vld [vmem:[%s470 + $0xf8] sm:$0xff]
      %v3404 = vadd.f32 %v1032, %v3372
      %v3405 = vadd.f32 %v1033, %v3373
      %v3406 = vadd.f32 %v1034, %v3374
      %v3407 = vadd.f32 %v1035, %v3375
      %v3408 = vadd.f32 %v1036, %v3376
      %v3409 = vadd.f32 %v1037, %v3377
      %v3410 = vadd.f32 %v1038, %v3378
      %v3411 = vadd.f32 %v1039, %v3379
      %v3412 = vadd.f32 %v1040, %v3380
      %v3413 = vadd.f32 %v1041, %v3381
      %v3414 = vadd.f32 %v1042, %v3382
      %v3415 = vadd.f32 %v1043, %v3383
      %v3416 = vadd.f32 %v1044, %v3384
      %v3417 = vadd.f32 %v1045, %v3385
      %v3418 = vadd.f32 %v1046, %v3386
      %v3419 = vadd.f32 %v1047, %v3387
      %v3420 = vadd.f32 %v1048, %v3388
      %v3421 = vadd.f32 %v1049, %v3389
      %v3422 = vadd.f32 %v1050, %v3390
      %v3423 = vadd.f32 %v1051, %v3391
      %v3424 = vadd.f32 %v1052, %v3392
      %v3425 = vadd.f32 %v1053, %v3393
      %v3426 = vadd.f32 %v1054, %v3394
      %v3427 = vadd.f32 %v1055, %v3395
      %v3428 = vadd.f32 %v1056, %v3396
      %v3429 = vadd.f32 %v1057, %v3397
      %v3430 = vadd.f32 %v1058, %v3398
      %v3431 = vadd.f32 %v1059, %v3399
      %v3432 = vadd.f32 %v1060, %v3400
      %v3433 = vadd.f32 %v1061, %v3401
      %v3434 = vadd.f32 %v1062, %v3402
      %v3435 = vadd.f32 %v1063, %v3403
      %v3436 = vadd.f32 %v3404, %v2269
      %v3437 = vadd.f32 %v3405, %v2274
      %v3438 = vadd.f32 %v3406, %v2279
      %v3439 = vadd.f32 %v3407, %v2284
      %v3440 = vadd.f32 %v3408, %v2289
      %v3441 = vadd.f32 %v3409, %v2294
      %v3442 = vadd.f32 %v3410, %v2299
      %v3443 = vadd.f32 %v3411, %v2304
      %v3444 = vadd.f32 %v3412, %v2309
      %v3445 = vadd.f32 %v3413, %v2314
      %v3446 = vadd.f32 %v3414, %v2319
      %v3447 = vadd.f32 %v3415, %v2324
      %v3448 = vadd.f32 %v3416, %v2329
      %v3449 = vadd.f32 %v3417, %v2334
      %v3450 = vadd.f32 %v3418, %v2339
      %v3451 = vadd.f32 %v3419, %v2344
      %v3452 = vadd.f32 %v3420, %v2349
      %v3453 = vadd.f32 %v3421, %v2354
      %v3454 = vadd.f32 %v3422, %v2359
      %v3455 = vadd.f32 %v3423, %v2364
      %v3456 = vadd.f32 %v3424, %v2369
      %v3457 = vadd.f32 %v3425, %v2374
      %v3458 = vadd.f32 %v3426, %v2379
      %v3459 = vadd.f32 %v3427, %v2384
      %v3460 = vadd.f32 %v3428, %v2389
      %v3461 = vadd.f32 %v3429, %v2394
      %v3462 = vadd.f32 %v3430, %v2399
      %v3463 = vadd.f32 %v3431, %v2404
      %v3464 = vadd.f32 %v3432, %v2409
      %v3465 = vadd.f32 %v3433, %v2414
      %v3466 = vadd.f32 %v3434, %v2419
      %v3467 = vadd.f32 %v3435, %v2424
      %v3468 = vadd.f32 %v3436, %v3214
      %v3469 = vadd.f32 %v3437, %v3219
      %v3470 = vadd.f32 %v3438, %v3224
      %v3471 = vadd.f32 %v3439, %v3229
      %v3472 = vadd.f32 %v3440, %v3234
      %v3473 = vadd.f32 %v3441, %v3239
      %v3474 = vadd.f32 %v3442, %v3244
      %v3475 = vadd.f32 %v3443, %v3249
      %v3476 = vadd.f32 %v3444, %v3254
      %v3477 = vadd.f32 %v3445, %v3259
      %v3478 = vadd.f32 %v3446, %v3264
      %v3479 = vadd.f32 %v3447, %v3269
      %v3480 = vadd.f32 %v3448, %v3274
      %v3481 = vadd.f32 %v3449, %v3279
      %v3482 = vadd.f32 %v3450, %v3284
      %v3483 = vadd.f32 %v3451, %v3289
      %v3484 = vadd.f32 %v3452, %v3294
      %v3485 = vadd.f32 %v3453, %v3299
      %v3486 = vadd.f32 %v3454, %v3304
      %v3487 = vadd.f32 %v3455, %v3309
      %v3488 = vadd.f32 %v3456, %v3314
      %v3489 = vadd.f32 %v3457, %v3319
      %v3490 = vadd.f32 %v3458, %v3324
      %v3491 = vadd.f32 %v3459, %v3329
      %v3492 = vadd.f32 %v3460, %v3334
      %v3493 = vadd.f32 %v3461, %v3339
      %v3494 = vadd.f32 %v3462, %v3344
      %v3495 = vadd.f32 %v3463, %v3349
      %v3496 = vadd.f32 %v3464, %v3354
      %v3497 = vadd.f32 %v3465, %v3359
      %v3498 = vadd.f32 %v3466, %v3364
      %v3499 = vadd.f32 %v3467, %v3369
      %vm3500 = vcmask 261120
      %v3501 = vsel %vm3500, %v3468, 0.0
      %3502 = vadd.xlane.f32.xlu0 %v3501
      %v3503 = vpop.xlane.xlu0 %3502
      %v3504 = vsel %vm3500, %v3469, 0.0
      %3505 = vadd.xlane.f32.xlu0 %v3504
      %v3506 = vpop.xlane.xlu0 %3505
      %v3507 = vsel %vm3500, %v3470, 0.0
      %3508 = vadd.xlane.f32.xlu0 %v3507
      %v3509 = vpop.xlane.xlu0 %3508
      %v3510 = vsel %vm3500, %v3471, 0.0
      %3511 = vadd.xlane.f32.xlu0 %v3510
      %v3512 = vpop.xlane.xlu0 %3511
      %v3513 = vsel %vm3500, %v3472, 0.0
      %3514 = vadd.xlane.f32.xlu0 %v3513
      %v3515 = vpop.xlane.xlu0 %3514
      %v3516 = vsel %vm3500, %v3473, 0.0
      %3517 = vadd.xlane.f32.xlu0 %v3516
      %v3518 = vpop.xlane.xlu0 %3517
      %v3519 = vsel %vm3500, %v3474, 0.0
      %3520 = vadd.xlane.f32.xlu0 %v3519
      %v3521 = vpop.xlane.xlu0 %3520
      %v3522 = vsel %vm3500, %v3475, 0.0
      %3523 = vadd.xlane.f32.xlu0 %v3522
      %v3524 = vpop.xlane.xlu0 %3523
      %v3525 = vsel %vm3500, %v3476, 0.0
      %3526 = vadd.xlane.f32.xlu0 %v3525
      %v3527 = vpop.xlane.xlu0 %3526
      %v3528 = vsel %vm3500, %v3477, 0.0
      %3529 = vadd.xlane.f32.xlu0 %v3528
      %v3530 = vpop.xlane.xlu0 %3529
      %v3531 = vsel %vm3500, %v3478, 0.0
      %3532 = vadd.xlane.f32.xlu0 %v3531
      %v3533 = vpop.xlane.xlu0 %3532
      %v3534 = vsel %vm3500, %v3479, 0.0
      %3535 = vadd.xlane.f32.xlu0 %v3534
      %v3536 = vpop.xlane.xlu0 %3535
      %v3537 = vsel %vm3500, %v3480, 0.0
      %3538 = vadd.xlane.f32.xlu0 %v3537
      %v3539 = vpop.xlane.xlu0 %3538
      %v3540 = vsel %vm3500, %v3481, 0.0
      %3541 = vadd.xlane.f32.xlu0 %v3540
      %v3542 = vpop.xlane.xlu0 %3541
      %v3543 = vsel %vm3500, %v3482, 0.0
      %3544 = vadd.xlane.f32.xlu0 %v3543
      %v3545 = vpop.xlane.xlu0 %3544
      %v3546 = vsel %vm3500, %v3483, 0.0
      %3547 = vadd.xlane.f32.xlu0 %v3546
      %v3548 = vpop.xlane.xlu0 %3547
      %v3549 = vsel %vm3500, %v3484, 0.0
      %3550 = vadd.xlane.f32.xlu0 %v3549
      %v3551 = vpop.xlane.xlu0 %3550
      %v3552 = vsel %vm3500, %v3485, 0.0
      %3553 = vadd.xlane.f32.xlu0 %v3552
      %v3554 = vpop.xlane.xlu0 %3553
      %v3555 = vsel %vm3500, %v3486, 0.0
      %3556 = vadd.xlane.f32.xlu0 %v3555
      %v3557 = vpop.xlane.xlu0 %3556
      %v3558 = vsel %vm3500, %v3487, 0.0
      %3559 = vadd.xlane.f32.xlu0 %v3558
      %v3560 = vpop.xlane.xlu0 %3559
      %v3561 = vsel %vm3500, %v3488, 0.0
      %3562 = vadd.xlane.f32.xlu0 %v3561
      %v3563 = vpop.xlane.xlu0 %3562
      %v3564 = vsel %vm3500, %v3489, 0.0
      %3565 = vadd.xlane.f32.xlu0 %v3564
      %v3566 = vpop.xlane.xlu0 %3565
      %v3567 = vsel %vm3500, %v3490, 0.0
      %3568 = vadd.xlane.f32.xlu0 %v3567
      %v3569 = vpop.xlane.xlu0 %3568
      %v3570 = vsel %vm3500, %v3491, 0.0
      %3571 = vadd.xlane.f32.xlu0 %v3570
      %v3572 = vpop.xlane.xlu0 %3571
      %v3573 = vsel %vm3500, %v3492, 0.0
      %3574 = vadd.xlane.f32.xlu0 %v3573
      %v3575 = vpop.xlane.xlu0 %3574
      %v3576 = vsel %vm3500, %v3493, 0.0
      %3577 = vadd.xlane.f32.xlu0 %v3576
      %v3578 = vpop.xlane.xlu0 %3577
      %v3579 = vsel %vm3500, %v3494, 0.0
      %3580 = vadd.xlane.f32.xlu0 %v3579
      %v3581 = vpop.xlane.xlu0 %3580
      %v3582 = vsel %vm3500, %v3495, 0.0
      %3583 = vadd.xlane.f32.xlu0 %v3582
      %v3584 = vpop.xlane.xlu0 %3583
      %v3585 = vsel %vm3500, %v3496, 0.0
      %3586 = vadd.xlane.f32.xlu0 %v3585
      %v3587 = vpop.xlane.xlu0 %3586
      %v3588 = vsel %vm3500, %v3497, 0.0
      %3589 = vadd.xlane.f32.xlu0 %v3588
      %v3590 = vpop.xlane.xlu0 %3589
      %v3591 = vsel %vm3500, %v3498, 0.0
      %3592 = vadd.xlane.f32.xlu0 %v3591
      %v3593 = vpop.xlane.xlu0 %3592
      %v3594 = vsel %vm3500, %v3499, 0.0
      %3595 = vadd.xlane.f32.xlu0 %v3594
      %v3596 = vpop.xlane.xlu0 %3595
      %v3597 = vrcp.pop 32.0
      %v3598 = vmul.f32 %v3503, %v3597
      %v3599 = vmul.f32 %v3506, %v3597
      %v3600 = vmul.f32 %v3509, %v3597
      %v3601 = vmul.f32 %v3512, %v3597
      %v3602 = vmul.f32 %v3515, %v3597
      %v3603 = vmul.f32 %v3518, %v3597
      %v3604 = vmul.f32 %v3521, %v3597
      %v3605 = vmul.f32 %v3524, %v3597
      %v3606 = vmul.f32 %v3527, %v3597
      %v3607 = vmul.f32 %v3530, %v3597
      %v3608 = vmul.f32 %v3533, %v3597
      %v3609 = vmul.f32 %v3536, %v3597
      %v3610 = vmul.f32 %v3539, %v3597
      %v3611 = vmul.f32 %v3542, %v3597
      %v3612 = vmul.f32 %v3545, %v3597
      %v3613 = vmul.f32 %v3548, %v3597
      %v3614 = vmul.f32 %v3551, %v3597
      %v3615 = vmul.f32 %v3554, %v3597
      %v3616 = vmul.f32 %v3557, %v3597
      %v3617 = vmul.f32 %v3560, %v3597
      %v3618 = vmul.f32 %v3563, %v3597
      %v3619 = vmul.f32 %v3566, %v3597
      %v3620 = vmul.f32 %v3569, %v3597
      %v3621 = vmul.f32 %v3572, %v3597
      %v3622 = vmul.f32 %v3575, %v3597
      %v3623 = vmul.f32 %v3578, %v3597
      %v3624 = vmul.f32 %v3581, %v3597
      %v3625 = vmul.f32 %v3584, %v3597
      %v3626 = vmul.f32 %v3587, %v3597
      %v3627 = vmul.f32 %v3590, %v3597
      %v3628 = vmul.f32 %v3593, %v3597
      %v3629 = vmul.f32 %v3596, %v3597
      %v3630 = vsub.f32 %v3468, %v3598
      %v3631 = vsub.f32 %v3469, %v3599
      %v3632 = vsub.f32 %v3470, %v3600
      %v3633 = vsub.f32 %v3471, %v3601
      %v3634 = vsub.f32 %v3472, %v3602
      %v3635 = vsub.f32 %v3473, %v3603
      %v3636 = vsub.f32 %v3474, %v3604
      %v3637 = vsub.f32 %v3475, %v3605
      %v3638 = vsub.f32 %v3476, %v3606
      %v3639 = vsub.f32 %v3477, %v3607
      %v3640 = vsub.f32 %v3478, %v3608
      %v3641 = vsub.f32 %v3479, %v3609
      %v3642 = vsub.f32 %v3480, %v3610
      %v3643 = vsub.f32 %v3481, %v3611
      %v3644 = vsub.f32 %v3482, %v3612
      %v3645 = vsub.f32 %v3483, %v3613
      %v3646 = vsub.f32 %v3484, %v3614
      %v3647 = vsub.f32 %v3485, %v3615
      %v3648 = vsub.f32 %v3486, %v3616
      %v3649 = vsub.f32 %v3487, %v3617
      %v3650 = vsub.f32 %v3488, %v3618
      %v3651 = vsub.f32 %v3489, %v3619
      %v3652 = vsub.f32 %v3490, %v3620
      %v3653 = vsub.f32 %v3491, %v3621
      %v3654 = vsub.f32 %v3492, %v3622
      %v3655 = vsub.f32 %v3493, %v3623
      %v3656 = vsub.f32 %v3494, %v3624
      %v3657 = vsub.f32 %v3495, %v3625
      %v3658 = vsub.f32 %v3496, %v3626
      %v3659 = vsub.f32 %v3497, %v3627
      %v3660 = vsub.f32 %v3498, %v3628
      %v3661 = vsub.f32 %v3499, %v3629
      %v3662 = vmul.f32 %v3630, %v3630
      %v3663 = vmul.f32 %v3631, %v3631
      %v3664 = vmul.f32 %v3632, %v3632
      %v3665 = vmul.f32 %v3633, %v3633
      %v3666 = vmul.f32 %v3634, %v3634
      %v3667 = vmul.f32 %v3635, %v3635
      %v3668 = vmul.f32 %v3636, %v3636
      %v3669 = vmul.f32 %v3637, %v3637
      %v3670 = vmul.f32 %v3638, %v3638
      %v3671 = vmul.f32 %v3639, %v3639
      %v3672 = vmul.f32 %v3640, %v3640
      %v3673 = vmul.f32 %v3641, %v3641
      %v3674 = vmul.f32 %v3642, %v3642
      %v3675 = vmul.f32 %v3643, %v3643
      %v3676 = vmul.f32 %v3644, %v3644
      %v3677 = vmul.f32 %v3645, %v3645
      %v3678 = vmul.f32 %v3646, %v3646
      %v3679 = vmul.f32 %v3647, %v3647
      %v3680 = vmul.f32 %v3648, %v3648
      %v3681 = vmul.f32 %v3649, %v3649
      %v3682 = vmul.f32 %v3650, %v3650
      %v3683 = vmul.f32 %v3651, %v3651
      %v3684 = vmul.f32 %v3652, %v3652
      %v3685 = vmul.f32 %v3653, %v3653
      %v3686 = vmul.f32 %v3654, %v3654
      %v3687 = vmul.f32 %v3655, %v3655
      %v3688 = vmul.f32 %v3656, %v3656
      %v3689 = vmul.f32 %v3657, %v3657
      %v3690 = vmul.f32 %v3658, %v3658
      %v3691 = vmul.f32 %v3659, %v3659
      %v3692 = vmul.f32 %v3660, %v3660
      %v3693 = vmul.f32 %v3661, %v3661
      %v3694 = vsel %vm3500, %v3662, 0.0
      %3695 = vadd.xlane.f32.xlu0 %v3694
      %v3696 = vpop.xlane.xlu0 %3695
      %v3697 = vsel %vm3500, %v3663, 0.0
      %3698 = vadd.xlane.f32.xlu0 %v3697
      %v3699 = vpop.xlane.xlu0 %3698
      %v3700 = vsel %vm3500, %v3664, 0.0
      %3701 = vadd.xlane.f32.xlu0 %v3700
      %v3702 = vpop.xlane.xlu0 %3701
      %v3703 = vsel %vm3500, %v3665, 0.0
      %3704 = vadd.xlane.f32.xlu0 %v3703
      %v3705 = vpop.xlane.xlu0 %3704
      %v3706 = vsel %vm3500, %v3666, 0.0
      %3707 = vadd.xlane.f32.xlu0 %v3706
      %v3708 = vpop.xlane.xlu0 %3707
      %v3709 = vsel %vm3500, %v3667, 0.0
      %3710 = vadd.xlane.f32.xlu0 %v3709
      %v3711 = vpop.xlane.xlu0 %3710
      %v3712 = vsel %vm3500, %v3668, 0.0
      %3713 = vadd.xlane.f32.xlu0 %v3712
      %v3714 = vpop.xlane.xlu0 %3713
      %v3715 = vsel %vm3500, %v3669, 0.0
      %3716 = vadd.xlane.f32.xlu0 %v3715
      %v3717 = vpop.xlane.xlu0 %3716
      %v3718 = vsel %vm3500, %v3670, 0.0
      %3719 = vadd.xlane.f32.xlu0 %v3718
      %v3720 = vpop.xlane.xlu0 %3719
      %v3721 = vsel %vm3500, %v3671, 0.0
      %3722 = vadd.xlane.f32.xlu0 %v3721
      %v3723 = vpop.xlane.xlu0 %3722
      %v3724 = vsel %vm3500, %v3672, 0.0
      %3725 = vadd.xlane.f32.xlu0 %v3724
      %v3726 = vpop.xlane.xlu0 %3725
      %v3727 = vsel %vm3500, %v3673, 0.0
      %3728 = vadd.xlane.f32.xlu0 %v3727
      %v3729 = vpop.xlane.xlu0 %3728
      %v3730 = vsel %vm3500, %v3674, 0.0
      %3731 = vadd.xlane.f32.xlu0 %v3730
      %v3732 = vpop.xlane.xlu0 %3731
      %v3733 = vsel %vm3500, %v3675, 0.0
      %3734 = vadd.xlane.f32.xlu0 %v3733
      %v3735 = vpop.xlane.xlu0 %3734
      %v3736 = vsel %vm3500, %v3676, 0.0
      %3737 = vadd.xlane.f32.xlu0 %v3736
      %v3738 = vpop.xlane.xlu0 %3737
      %v3739 = vsel %vm3500, %v3677, 0.0
      %3740 = vadd.xlane.f32.xlu0 %v3739
      %v3741 = vpop.xlane.xlu0 %3740
      %v3742 = vsel %vm3500, %v3678, 0.0
      %3743 = vadd.xlane.f32.xlu0 %v3742
      %v3744 = vpop.xlane.xlu0 %3743
      %v3745 = vsel %vm3500, %v3679, 0.0
      %3746 = vadd.xlane.f32.xlu0 %v3745
      %v3747 = vpop.xlane.xlu0 %3746
      %v3748 = vsel %vm3500, %v3680, 0.0
      %3749 = vadd.xlane.f32.xlu0 %v3748
      %v3750 = vpop.xlane.xlu0 %3749
      %v3751 = vsel %vm3500, %v3681, 0.0
      %3752 = vadd.xlane.f32.xlu0 %v3751
      %v3753 = vpop.xlane.xlu0 %3752
      %v3754 = vsel %vm3500, %v3682, 0.0
      %3755 = vadd.xlane.f32.xlu0 %v3754
      %v3756 = vpop.xlane.xlu0 %3755
      %v3757 = vsel %vm3500, %v3683, 0.0
      %3758 = vadd.xlane.f32.xlu0 %v3757
      %v3759 = vpop.xlane.xlu0 %3758
      %v3760 = vsel %vm3500, %v3684, 0.0
      %3761 = vadd.xlane.f32.xlu0 %v3760
      %v3762 = vpop.xlane.xlu0 %3761
      %v3763 = vsel %vm3500, %v3685, 0.0
      %3764 = vadd.xlane.f32.xlu0 %v3763
      %v3765 = vpop.xlane.xlu0 %3764
      %v3766 = vsel %vm3500, %v3686, 0.0
      %3767 = vadd.xlane.f32.xlu0 %v3766
      %v3768 = vpop.xlane.xlu0 %3767
      %v3769 = vsel %vm3500, %v3687, 0.0
      %3770 = vadd.xlane.f32.xlu0 %v3769
      %v3771 = vpop.xlane.xlu0 %3770
      %v3772 = vsel %vm3500, %v3688, 0.0
      %3773 = vadd.xlane.f32.xlu0 %v3772
      %v3774 = vpop.xlane.xlu0 %3773
      %v3775 = vsel %vm3500, %v3689, 0.0
      %3776 = vadd.xlane.f32.xlu0 %v3775
      %v3777 = vpop.xlane.xlu0 %3776
      %v3778 = vsel %vm3500, %v3690, 0.0
      %3779 = vadd.xlane.f32.xlu0 %v3778
      %v3780 = vpop.xlane.xlu0 %3779
      %v3781 = vsel %vm3500, %v3691, 0.0
      %3782 = vadd.xlane.f32.xlu0 %v3781
      %v3783 = vpop.xlane.xlu0 %3782
      %v3784 = vsel %vm3500, %v3692, 0.0
      %3785 = vadd.xlane.f32.xlu0 %v3784
      %v3786 = vpop.xlane.xlu0 %3785
      %v3787 = vsel %vm3500, %v3693, 0.0
      %3788 = vadd.xlane.f32.xlu0 %v3787
      %v3789 = vpop.xlane.xlu0 %3788
      %v3790 = vmul.f32 %v3696, %v3597
      %v3791 = vmul.f32 %v3699, %v3597
      %v3792 = vmul.f32 %v3702, %v3597
      %v3793 = vmul.f32 %v3705, %v3597
      %v3794 = vmul.f32 %v3708, %v3597
      %v3795 = vmul.f32 %v3711, %v3597
      %v3796 = vmul.f32 %v3714, %v3597
      %v3797 = vmul.f32 %v3717, %v3597
      %v3798 = vmul.f32 %v3720, %v3597
      %v3799 = vmul.f32 %v3723, %v3597
      %v3800 = vmul.f32 %v3726, %v3597
      %v3801 = vmul.f32 %v3729, %v3597
      %v3802 = vmul.f32 %v3732, %v3597
      %v3803 = vmul.f32 %v3735, %v3597
      %v3804 = vmul.f32 %v3738, %v3597
      %v3805 = vmul.f32 %v3741, %v3597
      %v3806 = vmul.f32 %v3744, %v3597
      %v3807 = vmul.f32 %v3747, %v3597
      %v3808 = vmul.f32 %v3750, %v3597
      %v3809 = vmul.f32 %v3753, %v3597
      %v3810 = vmul.f32 %v3756, %v3597
      %v3811 = vmul.f32 %v3759, %v3597
      %v3812 = vmul.f32 %v3762, %v3597
      %v3813 = vmul.f32 %v3765, %v3597
      %v3814 = vmul.f32 %v3768, %v3597
      %v3815 = vmul.f32 %v3771, %v3597
      %v3816 = vmul.f32 %v3774, %v3597
      %v3817 = vmul.f32 %v3777, %v3597
      %v3818 = vmul.f32 %v3780, %v3597
      %v3819 = vmul.f32 %v3783, %v3597
      %v3820 = vmul.f32 %v3786, %v3597
      %v3821 = vmul.f32 %v3789, %v3597
      %v3822 = vadd.f32 %v3790, 1e-12
      %v3823 = vadd.f32 %v3791, 1e-12
      %v3824 = vadd.f32 %v3792, 1e-12
      %v3825 = vadd.f32 %v3793, 1e-12
      %v3826 = vadd.f32 %v3794, 1e-12
      %v3827 = vadd.f32 %v3795, 1e-12
      %v3828 = vadd.f32 %v3796, 1e-12
      %v3829 = vadd.f32 %v3797, 1e-12
      %v3830 = vadd.f32 %v3798, 1e-12
      %v3831 = vadd.f32 %v3799, 1e-12
      %v3832 = vadd.f32 %v3800, 1e-12
      %v3833 = vadd.f32 %v3801, 1e-12
      %v3834 = vadd.f32 %v3802, 1e-12
      %v3835 = vadd.f32 %v3803, 1e-12
      %v3836 = vadd.f32 %v3804, 1e-12
      %v3837 = vadd.f32 %v3805, 1e-12
      %v3838 = vadd.f32 %v3806, 1e-12
      %v3839 = vadd.f32 %v3807, 1e-12
      %v3840 = vadd.f32 %v3808, 1e-12
      %v3841 = vadd.f32 %v3809, 1e-12
      %v3842 = vadd.f32 %v3810, 1e-12
      %v3843 = vadd.f32 %v3811, 1e-12
      %v3844 = vadd.f32 %v3812, 1e-12
      %v3845 = vadd.f32 %v3813, 1e-12
      %v3846 = vadd.f32 %v3814, 1e-12
      %v3847 = vadd.f32 %v3815, 1e-12
      %v3848 = vadd.f32 %v3816, 1e-12
      %v3849 = vadd.f32 %v3817, 1e-12
      %v3850 = vadd.f32 %v3818, 1e-12
      %v3851 = vadd.f32 %v3819, 1e-12
      %v3852 = vadd.f32 %v3820, 1e-12
      %v3853 = vadd.f32 %v3821, 1e-12
      %v3854 = vrsqrt.pop %v3822
      %v3855 = vrsqrt.pop %v3823
      %v3856 = vrsqrt.pop %v3824
      %v3857 = vrsqrt.pop %v3825
      %v3858 = vrsqrt.pop %v3826
      %v3859 = vrsqrt.pop %v3827
      %v3860 = vrsqrt.pop %v3828
      %v3861 = vrsqrt.pop %v3829
      %v3862 = vrsqrt.pop %v3830
      %v3863 = vrsqrt.pop %v3831
      %v3864 = vrsqrt.pop %v3832
      %v3865 = vrsqrt.pop %v3833
      %v3866 = vrsqrt.pop %v3834
      %v3867 = vrsqrt.pop %v3835
      %v3868 = vrsqrt.pop %v3836
      %v3869 = vrsqrt.pop %v3837
      %v3870 = vrsqrt.pop %v3838
      %v3871 = vrsqrt.pop %v3839
      %v3872 = vrsqrt.pop %v3840
      %v3873 = vrsqrt.pop %v3841
      %v3874 = vrsqrt.pop %v3842
      %v3875 = vrsqrt.pop %v3843
      %v3876 = vrsqrt.pop %v3844
      %v3877 = vrsqrt.pop %v3845
      %v3878 = vrsqrt.pop %v3846
      %v3879 = vrsqrt.pop %v3847
      %v3880 = vrsqrt.pop %v3848
      %v3881 = vrsqrt.pop %v3849
      %v3882 = vrsqrt.pop %v3850
      %v3883 = vrsqrt.pop %v3851
      %v3884 = vrsqrt.pop %v3852
      %v3885 = vrsqrt.pop %v3853
      %v3886 = vmul.f32 %v3630, %v3854
      %v3887 = vmul.f32 %v3631, %v3855
      %v3888 = vmul.f32 %v3632, %v3856
      %v3889 = vmul.f32 %v3633, %v3857
      %v3890 = vmul.f32 %v3634, %v3858
      %v3891 = vmul.f32 %v3635, %v3859
      %v3892 = vmul.f32 %v3636, %v3860
      %v3893 = vmul.f32 %v3637, %v3861
      %v3894 = vmul.f32 %v3638, %v3862
      %v3895 = vmul.f32 %v3639, %v3863
      %v3896 = vmul.f32 %v3640, %v3864
      %v3897 = vmul.f32 %v3641, %v3865
      %v3898 = vmul.f32 %v3642, %v3866
      %v3899 = vmul.f32 %v3643, %v3867
      %v3900 = vmul.f32 %v3644, %v3868
      %v3901 = vmul.f32 %v3645, %v3869
      %v3902 = vmul.f32 %v3646, %v3870
      %v3903 = vmul.f32 %v3647, %v3871
      %v3904 = vmul.f32 %v3648, %v3872
      %v3905 = vmul.f32 %v3649, %v3873
      %v3906 = vmul.f32 %v3650, %v3874
      %v3907 = vmul.f32 %v3651, %v3875
      %v3908 = vmul.f32 %v3652, %v3876
      %v3909 = vmul.f32 %v3653, %v3877
      %v3910 = vmul.f32 %v3654, %v3878
      %v3911 = vmul.f32 %v3655, %v3879
      %v3912 = vmul.f32 %v3656, %v3880
      %v3913 = vmul.f32 %v3657, %v3881
      %v3914 = vmul.f32 %v3658, %v3882
      %v3915 = vmul.f32 %v3659, %v3883
      %v3916 = vmul.f32 %v3660, %v3884
      %v3917 = vmul.f32 %v3661, %v3885
      %v3918 = vld [vmem:[%s9] sm:$0x1]
      %v3920 = vlaneseq
      %v3921 = vshrl.u32 %v3920, 7
      %v3922 = vsub.s32 0, %v3921
      %v3923 = vrot.slane %v3918, %v3922
      %v3925 = vmul.f32 %v3886, %v3923
      %v3926 = vmul.f32 %v3887, %v3923
      %v3927 = vmul.f32 %v3888, %v3923
      %v3928 = vmul.f32 %v3889, %v3923
      %v3929 = vmul.f32 %v3890, %v3923
      %v3930 = vmul.f32 %v3891, %v3923
      %v3931 = vmul.f32 %v3892, %v3923
      %v3932 = vmul.f32 %v3893, %v3923
      %v3933 = vmul.f32 %v3894, %v3923
      %v3934 = vmul.f32 %v3895, %v3923
      %v3935 = vmul.f32 %v3896, %v3923
      %v3936 = vmul.f32 %v3897, %v3923
      %v3937 = vmul.f32 %v3898, %v3923
      %v3938 = vmul.f32 %v3899, %v3923
      %v3939 = vmul.f32 %v3900, %v3923
      %v3940 = vmul.f32 %v3901, %v3923
      %v3941 = vmul.f32 %v3902, %v3923
      %v3942 = vmul.f32 %v3903, %v3923
      %v3943 = vmul.f32 %v3904, %v3923
      %v3944 = vmul.f32 %v3905, %v3923
      %v3945 = vmul.f32 %v3906, %v3923
      %v3946 = vmul.f32 %v3907, %v3923
      %v3947 = vmul.f32 %v3908, %v3923
      %v3948 = vmul.f32 %v3909, %v3923
      %v3949 = vmul.f32 %v3910, %v3923
      %v3950 = vmul.f32 %v3911, %v3923
      %v3951 = vmul.f32 %v3912, %v3923
      %v3952 = vmul.f32 %v3913, %v3923
      %v3953 = vmul.f32 %v3914, %v3923
      %v3954 = vmul.f32 %v3915, %v3923
      %v3955 = vmul.f32 %v3916, %v3923
      %v3956 = vmul.f32 %v3917, %v3923
      %v3957 = vld [vmem:[%s10] sm:$0x1]
      %v3959 = vlaneseq
      %v3960 = vshrl.u32 %v3959, 7
      %v3961 = vsub.s32 0, %v3960
      %v3962 = vrot.slane %v3957, %v3961
      %v3964 = vadd.f32 %v3925, %v3962
      %v3965 = vadd.f32 %v3926, %v3962
      %v3966 = vadd.f32 %v3927, %v3962
      %v3967 = vadd.f32 %v3928, %v3962
      %v3968 = vadd.f32 %v3929, %v3962
      %v3969 = vadd.f32 %v3930, %v3962
      %v3970 = vadd.f32 %v3931, %v3962
      %v3971 = vadd.f32 %v3932, %v3962
      %v3972 = vadd.f32 %v3933, %v3962
      %v3973 = vadd.f32 %v3934, %v3962
      %v3974 = vadd.f32 %v3935, %v3962
      %v3975 = vadd.f32 %v3936, %v3962
      %v3976 = vadd.f32 %v3937, %v3962
      %v3977 = vadd.f32 %v3938, %v3962
      %v3978 = vadd.f32 %v3939, %v3962
      %v3979 = vadd.f32 %v3940, %v3962
      %v3980 = vadd.f32 %v3941, %v3962
      %v3981 = vadd.f32 %v3942, %v3962
      %v3982 = vadd.f32 %v3943, %v3962
      %v3983 = vadd.f32 %v3944, %v3962
      %v3984 = vadd.f32 %v3945, %v3962
      %v3985 = vadd.f32 %v3946, %v3962
      %v3986 = vadd.f32 %v3947, %v3962
      %v3987 = vadd.f32 %v3948, %v3962
      %v3988 = vadd.f32 %v3949, %v3962
      %v3989 = vadd.f32 %v3950, %v3962
      %v3990 = vadd.f32 %v3951, %v3962
      %v3991 = vadd.f32 %v3952, %v3962
      %v3992 = vadd.f32 %v3953, %v3962
      %v3993 = vadd.f32 %v3954, %v3962
      %v3994 = vadd.f32 %v3955, %v3962
      %v3995 = vadd.f32 %v3956, %v3962
      %3996 = vst.msk [vmem:[%s476] sm:$0xff] %vm3500, %v3964
      %3997 = vst.msk [vmem:[%s476 + $0x8] sm:$0xff] %vm3500, %v3965
      %3998 = vst.msk [vmem:[%s476 + $0x10] sm:$0xff] %vm3500, %v3966
      %3999 = vst.msk [vmem:[%s476 + $0x18] sm:$0xff] %vm3500, %v3967
      %4000 = vst.msk [vmem:[%s476 + $0x20] sm:$0xff] %vm3500, %v3968
      %4001 = vst.msk [vmem:[%s476 + $0x28] sm:$0xff] %vm3500, %v3969
      %4002 = vst.msk [vmem:[%s476 + $0x30] sm:$0xff] %vm3500, %v3970
      %4003 = vst.msk [vmem:[%s476 + $0x38] sm:$0xff] %vm3500, %v3971
      %4004 = vst.msk [vmem:[%s476 + $0x40] sm:$0xff] %vm3500, %v3972
      %4005 = vst.msk [vmem:[%s476 + $0x48] sm:$0xff] %vm3500, %v3973
      %4006 = vst.msk [vmem:[%s476 + $0x50] sm:$0xff] %vm3500, %v3974
      %4007 = vst.msk [vmem:[%s476 + $0x58] sm:$0xff] %vm3500, %v3975
      %4008 = vst.msk [vmem:[%s476 + $0x60] sm:$0xff] %vm3500, %v3976
      %4009 = vst.msk [vmem:[%s476 + $0x68] sm:$0xff] %vm3500, %v3977
      %4010 = vst.msk [vmem:[%s476 + $0x70] sm:$0xff] %vm3500, %v3978
      %4011 = vst.msk [vmem:[%s476 + $0x78] sm:$0xff] %vm3500, %v3979
      %4012 = vst.msk [vmem:[%s476 + $0x80] sm:$0xff] %vm3500, %v3980
      %4013 = vst.msk [vmem:[%s476 + $0x88] sm:$0xff] %vm3500, %v3981
      %4014 = vst.msk [vmem:[%s476 + $0x90] sm:$0xff] %vm3500, %v3982
      %4015 = vst.msk [vmem:[%s476 + $0x98] sm:$0xff] %vm3500, %v3983
      %4016 = vst.msk [vmem:[%s476 + $0xa0] sm:$0xff] %vm3500, %v3984
      %4017 = vst.msk [vmem:[%s476 + $0xa8] sm:$0xff] %vm3500, %v3985
      %4018 = vst.msk [vmem:[%s476 + $0xb0] sm:$0xff] %vm3500, %v3986
      %4019 = vst.msk [vmem:[%s476 + $0xb8] sm:$0xff] %vm3500, %v3987
      %4020 = vst.msk [vmem:[%s476 + $0xc0] sm:$0xff] %vm3500, %v3988
      %4021 = vst.msk [vmem:[%s476 + $0xc8] sm:$0xff] %vm3500, %v3989
      %4022 = vst.msk [vmem:[%s476 + $0xd0] sm:$0xff] %vm3500, %v3990
      %4023 = vst.msk [vmem:[%s476 + $0xd8] sm:$0xff] %vm3500, %v3991
      %4024 = vst.msk [vmem:[%s476 + $0xe0] sm:$0xff] %vm3500, %v3992
      %4025 = vst.msk [vmem:[%s476 + $0xe8] sm:$0xff] %vm3500, %v3993
      %4026 = vst.msk [vmem:[%s476 + $0xf0] sm:$0xff] %vm3500, %v3994
      %4027 = vst.msk [vmem:[%s476 + $0xf8] sm:$0xff] %vm3500, %v3995
      %s4028 = smul.u32 32, %s22
      %p4029 = scmp.lt.s32.totalorder %s4028, 127
      %s4030 = scalar_select %p4029, %s4028, 127
      %s4031 = smul.addr %s4030, 8
      %s4032 = scalar_lea.vmem %s11, %s4031
      // Predicated region
      $region65: #{tpu_custom_call.1} parent=63 // pred_check
        %p4033 = pneg %p296
      $region66: #{tpu_custom_call.1} parent=63 // pred_check_branch
        %4035 = sbr.rel (%p4033) target = $region68
      $region67: #{tpu_custom_call.1} parent=63 // pred_region
        %s4036 = smul.u32 32, %s22
      $region68: #{tpu_custom_call.1} parent=63 // pred_fallthru
        _
    $region64: #{tpu_custom_call.1} parent=5 // pred_fallthru
      _
    %p4037 = scmp.le.s32.totalorder 2, %s17
    // Predicated region
    $region69: #{tpu_custom_call.1} parent=5 // pred_check
      %p4038 = pneg %p4037
    $region70: #{tpu_custom_call.1} parent=5 // pred_check_branch
      %4040 = sbr.rel (%p4038) target = $region72
    $region71: #{tpu_custom_call.1} parent=5 // pred_region
      %s4041 = ssub.s32 %s17, 2
      // Predicated region
      $region73: #{tpu_custom_call.1} parent=71 // pred_check
        %p4042 = pneg %p302
      $region74: #{tpu_custom_call.1} parent=71 // pred_check_branch
        %4044 = sbr.rel (%p4042) target = $region76
      $region75: #{tpu_custom_call.1} parent=71 // pred_region
        %s4045 = smul.u32 32, %s23
        %p4046 = scmp.lt.s32.totalorder %s4045, 127
        %s4047 = scalar_select %p4046, %s4045, 127
        %s4048 = smul.addr %s4047, 8
        %s4049 = scalar_lea.vmem %s11, %s4048
      $region76: #{tpu_custom_call.1} parent=71 // pred_fallthru
        _
    $region72: #{tpu_custom_call.1} parent=5 // pred_fallthru
      _
  $region6: #{tpu_custom_call.1} parent=0 // loop_footer
    %s21 = sadd.s32 1, %s17
  $region7: #{tpu_custom_call.1} parent=0 // loop_footer_branch
    %16 = sbr.rel target = $region3
  $region8: #{tpu_custom_call.1} parent=0 // loop_exit
    _

</llo_original>
